<compile_context>
chip_gen: v5e
topology: v5e:2x2
jax: 0.10.0
libtpu: 0.0.40
codegen_flags: <defaults>
</compile_context>

<pallas_src>
import functools

import numpy as np
import jax
import jax.numpy as jnp
from jax import lax
from jax.experimental import pallas as pl
from jax.experimental.pallas import tpu as pltpu

_VMEM_LIMIT = 32 * 1024 * 1024  # fits scoped VMEM on v5e/v6e and v7x (64 MiB physical)


# ------------------------------ in-kernel helpers -----------------------------

def _ln(x, g, b, eps=1e-5):
    """LayerNorm over the last axis, f32 math.  g/b are (1, D)."""
    mu = jnp.mean(x, axis=-1, keepdims=True)
    var = jnp.mean(jnp.square(x - mu), axis=-1, keepdims=True)
    return (x - mu) * lax.rsqrt(var + eps) * g + b


def _attention(xn, ctxn, wq, wkv, wo, bo, heads, dim_head):
    """Multi-head attention on normed inputs.  xn:(I,D) f32, ctxn:(J,Dc) f32.
    bf16 MXU inputs, f32 accumulation; single K=inner output projection."""
    scale = dim_head ** (-0.5)
    inner = heads * dim_head
    q = jnp.dot(xn.astype(jnp.bfloat16), wq, preferred_element_type=jnp.float32)   # (I, inner)
    kv = jnp.dot(ctxn.astype(jnp.bfloat16), wkv, preferred_element_type=jnp.float32)  # (J, 2*inner)
    outs = []
    for h in range(heads):  # static unroll (heads <= 2 here)
        s = h * dim_head
        qh = q[:, s:s + dim_head].astype(jnp.bfloat16)
        kh = kv[:, s:s + dim_head].astype(jnp.bfloat16)
        vh = kv[:, inner + s:inner + s + dim_head].astype(jnp.bfloat16)
        sim = lax.dot_general(qh, kh, (((1,), (1,)), ((), ())),
                              preferred_element_type=jnp.float32) * scale           # (I, J)
        sim = sim - jnp.max(sim, axis=-1, keepdims=True)
        p = jnp.exp(sim)
        attn = p * pl.reciprocal(jnp.sum(p, axis=-1, keepdims=True), approx=True)
        outs.append(jnp.dot(attn.astype(jnp.bfloat16), vh,
                            preferred_element_type=jnp.float32))                    # (I, dh)
    o = outs[0] if heads == 1 else jnp.concatenate(outs, axis=-1)                   # (I, inner)
    return jnp.dot(o.astype(jnp.bfloat16), wo, preferred_element_type=jnp.float32) + bo


def _geglu_ff(xn, w1, b1, w2, b2, hidden):
    """Linear -> GEGLU -> Linear on normed input xn (I, D) f32."""
    h = jnp.dot(xn.astype(jnp.bfloat16), w1, preferred_element_type=jnp.float32) + b1  # (I, 2H)
    a = h[:, :hidden]
    g = h[:, hidden:]
    # TODO(synk): PyTorch F.gelu defaults to the exact erf form; tanh-approx GELU used here
    # (EUP-friendly on TPU), max deviation ~1e-3.
    hh = a * jax.nn.gelu(g, approximate=True)
    return jnp.dot(hh.astype(jnp.bfloat16), w2, preferred_element_type=jnp.float32) + b2


# --------------------------- fully fused forward kernel -----------------------

def _codebook_attn_kernel(cb_ref, lat_ref, cvec_ref, ctxv_ref, cb1_ref,
                          cwq_ref, cwkv_ref, cwo_ref, cw1_ref, cw2_ref,
                          svec_ref, sb1_ref, swq_ref, swkv_ref, swo_ref,
                          sw1_ref, sw2_ref, o_ref, *,
                          depth, cross_heads, cross_dim_head,
                          latent_heads, latent_dim_head, hidden):
    x = lat_ref[...].astype(jnp.float32)      # (I, D) residual stream, f32, VMEM-resident
    ctx = cb_ref[0].astype(jnp.float32)       # (J, Dc)
    cvec = cvec_ref[...]                      # (6, D)  [ln_g, ln_b, attn_bo, ff_g, ff_b, ff_b2]
    ctxv = ctxv_ref[...]                      # (2, Dc) [ctx_g, ctx_b]

    # ---- cross attention: x = Attn(LN(x), LN(ctx)) + x ----
    xn = _ln(x, cvec[0:1, :], cvec[1:2, :])
    ctxn = _ln(ctx, ctxv[0:1, :], ctxv[1:2, :])
    x = x + _attention(xn, ctxn, cwq_ref[...], cwkv_ref[...], cwo_ref[...],
                       cvec[2:3, :], cross_heads, cross_dim_head)

    # ---- cross feedforward: x = FF(LN(x)) + x ----
    x = x + _geglu_ff(_ln(x, cvec[3:4, :], cvec[4:5, :]),
                      cw1_ref[...], cb1_ref[...], cw2_ref[...], cvec[5:6, :], hidden)

    # ---- self blocks (static unrolled depth loop; weights stacked on depth axis) ----
    for d in range(depth):
        sv = svec_ref[d]                      # (6, D)
        xn = _ln(x, sv[0:1, :], sv[1:2, :])
        x = x + _attention(xn, xn, swq_ref[d], swkv_ref[d], swo_ref[d],
                           sv[2:3, :], latent_heads, latent_dim_head)
        x = x + _geglu_ff(_ln(x, sv[3:4, :], sv[4:5, :]),
                          sw1_ref[d], sb1_ref[d], sw2_ref[d], sv[5:6, :], hidden)

    o_ref[0] = x.astype(o_ref.dtype)          # lane-dense (I, 128) store


def _const_spec(arr):
    # Constant index map -> block stays VMEM-resident across all grid steps.
    # TODO(synk): pipeline_mode=pl.Buffered(1) would halve weight VMEM; skipped (footprint ~2 MiB).
    n = arr.ndim
    return pl.BlockSpec(arr.shape, lambda b, _n=n: (0,) * _n)


def codebook_attention_forward(packed, codebook, cfg):
    """codebook: (B, J, Dc) -> latents x: (B, num_latents, latent_dim)."""
    B, J, Dc = codebook.shape
    I, D = cfg["num_latents"], cfg["latent_dim"]
    hidden = D * cfg.get("ff_mult", 4)

    consts = [packed[k] for k in ("latents", "cross_vecs", "ctx_vecs", "cross_b1",
                                  "cwq", "cwkv", "cwo", "cw1", "cw2",
                                  "self_vecs", "self_b1", "swq", "swkv", "swo",
                                  "sw1", "sw2")]
    in_specs = ([pl.BlockSpec((1, J, Dc), lambda b: (b, 0, 0))]
                + [_const_spec(a) for a in consts])

    kernel = functools.partial(
        _codebook_attn_kernel, depth=cfg["depth"],
        cross_heads=cfg["cross_heads"], cross_dim_head=cfg["cross_dim_head"],
        latent_heads=cfg["latent_heads"], latent_dim_head=cfg["latent_dim_head"],
        hidden=hidden)

    return pl.pallas_call(
        kernel,
        grid=(B,),                                           # >= 2 parallel steps (v7x 2 TCs)
        in_specs=in_specs,
        out_specs=pl.BlockSpec((1, I, D), lambda b: (b, 0, 0)),
        out_shape=jax.ShapeDtypeStruct((B, I, D), jnp.float32),
        compiler_params=pltpu.CompilerParams(
            dimension_semantics=("parallel",),
            vmem_limit_bytes=_VMEM_LIMIT),
    )(codebook, *consts)


# ------------------------- deterministic param init ---------------------------

class KeyGen:
    def __init__(self, seed=0):
        self.key = jax.random.PRNGKey(seed)

    def __call__(self):
        self.key, sub = jax.random.split(self.key)
        return sub


def linear_params(kg, fan_in, fan_out, bias=True):
    lim = float(np.sqrt(6.0 / fan_in))                       # kaiming_uniform-ish
    w = jax.random.uniform(kg(), (fan_in, fan_out), jnp.float32, -lim, lim)
    if bias:
        blim = 1.0 / float(np.sqrt(fan_in))
        b = jax.random.uniform(kg(), (fan_out,), jnp.float32, -blim, blim)
        return w, b
    return w, None


def init_attention_block(kg, query_dim, context_dim, heads, dim_head):
    inner = heads * dim_head
    p = {"norm_g": jnp.ones((query_dim,), jnp.float32),
         "norm_b": jnp.zeros((query_dim,), jnp.float32)}
    if context_dim is not None:
        p["norm_ctx_g"] = jnp.ones((context_dim,), jnp.float32)
        p["norm_ctx_b"] = jnp.zeros((context_dim,), jnp.float32)
    cd = context_dim if context_dim is not None else query_dim
    p["to_q_w"], _ = linear_params(kg, query_dim, inner, bias=False)
    p["to_kv_w"], _ = linear_params(kg, cd, 2 * inner, bias=False)
    p["to_out_w"], p["to_out_b"] = linear_params(kg, inner, query_dim)
    return p


def init_ff_block(kg, dim, mult=4):
    p = {"norm_g": jnp.ones((dim,), jnp.float32),
         "norm_b": jnp.zeros((dim,), jnp.float32)}
    p["w1"], p["b1"] = linear_params(kg, dim, dim * mult * 2)
    p["w2"], p["b2"] = linear_params(kg, dim * mult, dim)
    return p


def build_params(cfg, seed=0):
    kg = KeyGen(seed)
    ld, cd = cfg["latent_dim"], cfg["codebook_dim"]
    mult = cfg.get("ff_mult", 4)
    p = {"latents": jax.random.normal(kg(), (cfg["num_latents"], ld), jnp.float32)}
    p["cross_attn"] = init_attention_block(kg, ld, cd, cfg["cross_heads"],
                                           cfg["cross_dim_head"])
    p["cross_ff"] = init_ff_block(kg, ld, mult)
    blocks = []
    for _ in range(cfg["depth"]):
        blocks.append({
            "attn": init_attention_block(kg, ld, None, cfg["latent_heads"],
                                         cfg["latent_dim_head"]),
            "ff": init_ff_block(kg, ld, mult),
        })
    p["self_blocks"] = blocks
    return p


def pack_params(params, cfg):
    """One-time packing (outside jit): bf16 weight casts, (D,)->(1,D) reshapes, tiny vectors
    fused into a few slabs, self-block weights stacked along a leading depth axis."""
    def v(a):
        return jnp.asarray(a, jnp.float32).reshape(1, -1)

    ca, cf = params["cross_attn"], params["cross_ff"]
    packed = {
        "latents": params["latents"].astype(jnp.float32),
        "cross_vecs": jnp.concatenate([v(ca["norm_g"]), v(ca["norm_b"]), v(ca["to_out_b"]),
                                       v(cf["norm_g"]), v(cf["norm_b"]), v(cf["b2"])], axis=0),
        "ctx_vecs": jnp.concatenate([v(ca["norm_ctx_g"]), v(ca["norm_ctx_b"])], axis=0),
        "cross_b1": v(cf["b1"]),
        "cwq": ca["to_q_w"].astype(jnp.bfloat16),
        "cwkv": ca["to_kv_w"].astype(jnp.bfloat16),
        "cwo": ca["to_out_w"].astype(jnp.bfloat16),
        "cw1": cf["w1"].astype(jnp.bfloat16),
        "cw2": cf["w2"].astype(jnp.bfloat16),
    }
    svecs, sb1, swq, swkv, swo, sw1, sw2 = ([] for _ in range(7))
    for blk in params["self_blocks"]:
        a, f = blk["attn"], blk["ff"]
        svecs.append(jnp.concatenate([v(a["norm_g"]), v(a["norm_b"]), v(a["to_out_b"]),
                                      v(f["norm_g"]), v(f["norm_b"]), v(f["b2"])], axis=0)[None])
        sb1.append(v(f["b1"])[None])
        swq.append(a["to_q_w"].astype(jnp.bfloat16)[None])
        swkv.append(a["to_kv_w"].astype(jnp.bfloat16)[None])
        swo.append(a["to_out_w"].astype(jnp.bfloat16)[None])
        sw1.append(f["w1"].astype(jnp.bfloat16)[None])
        sw2.append(f["w2"].astype(jnp.bfloat16)[None])
    packed.update(
        self_vecs=jnp.concatenate(svecs, axis=0),   # (depth, 6, D)
        self_b1=jnp.concatenate(sb1, axis=0),       # (depth, 1, 2*hidden)
        swq=jnp.concatenate(swq, axis=0),           # (depth, D, inner)
        swkv=jnp.concatenate(swkv, axis=0),         # (depth, D, 2*inner)
        swo=jnp.concatenate(swo, axis=0),           # (depth, inner, D)
        sw1=jnp.concatenate(sw1, axis=0),           # (depth, D, 2*hidden)
        sw2=jnp.concatenate(sw2, axis=0),           # (depth, hidden, D)
    )
    return packed


# ------------------------------------ main -------------------------------------

if __name__ == "__main__":
    cfg = dict(
        codebook_dim=64,
        depth=1,
        num_latents=32,
        latent_dim=128,        # lane-dense output width
        latent_heads=2,
        latent_dim_head=64,
        cross_heads=1,
        cross_dim_head=64,
        ff_mult=4,
    )

    params = build_params(cfg, seed=0)
    packed = pack_params(params, cfg)        # one-time bf16 cast / pack (outside jit)

    key = jax.random.PRNGKey(0)
    b, n = 2, 16
    codebook = 0.1 * jax.random.normal(key, (b, n, cfg["codebook_dim"]), jnp.float32)

    @jax.jit
    def fwd(packed, codebook):
        return codebook_attention_forward(packed, codebook, cfg)

    out = jax.block_until_ready(fwd(packed, codebook))

    assert out.shape == (b, cfg["num_latents"], cfg["latent_dim"])
    assert bool(jnp.all(jnp.isfinite(out)))
    print("KERNEL_OK")
</pallas_src>

<mosaic_0001>
module attributes {stable_mosaic.version = 11 : i64} {
  func.func @_codebook_attn_kernel(%arg0: i32, %arg1: memref<1x16x64xf32, #tpu.memory_space<vmem>>, %arg2: memref<32x128xf32, #tpu.memory_space<vmem>>, %arg3: memref<6x128xf32, #tpu.memory_space<vmem>>, %arg4: memref<2x64xf32, #tpu.memory_space<vmem>>, %arg5: memref<1x1024xf32, #tpu.memory_space<vmem>>, %arg6: memref<128x64xbf16, #tpu.memory_space<vmem>>, %arg7: memref<64x128xbf16, #tpu.memory_space<vmem>>, %arg8: memref<64x128xbf16, #tpu.memory_space<vmem>>, %arg9: memref<128x1024xbf16, #tpu.memory_space<vmem>>, %arg10: memref<512x128xbf16, #tpu.memory_space<vmem>>, %arg11: memref<1x6x128xf32, #tpu.memory_space<vmem>>, %arg12: memref<1x1x1024xf32, #tpu.memory_space<vmem>>, %arg13: memref<1x128x128xbf16, #tpu.memory_space<vmem>>, %arg14: memref<1x128x256xbf16, #tpu.memory_space<vmem>>, %arg15: memref<1x128x128xbf16, #tpu.memory_space<vmem>>, %arg16: memref<1x128x1024xbf16, #tpu.memory_space<vmem>>, %arg17: memref<1x512x128xbf16, #tpu.memory_space<vmem>>, %arg18: memref<1x32x128xf32, #tpu.memory_space<vmem>>) attributes {dimension_semantics = [#tpu.dimension_semantics<parallel>], iteration_bounds = array<i64: 2>, scalar_prefetch = 0 : i64, scratch_operands = 0 : i64, tpu.core_type = #tpu.core_type<tc>, window_params = [{transform_indices = @transform_0, window_bounds = array<i64: 1, 16, 64>}, {pipeline_mode = #tpu.pipeline_mode<synchronous>, transform_indices = @transform_1, window_bounds = array<i64: 32, 128>}, {pipeline_mode = #tpu.pipeline_mode<synchronous>, transform_indices = @transform_2, window_bounds = array<i64: 6, 128>}, {pipeline_mode = #tpu.pipeline_mode<synchronous>, transform_indices = @transform_3, window_bounds = array<i64: 2, 64>}, {pipeline_mode = #tpu.pipeline_mode<synchronous>, transform_indices = @transform_4, window_bounds = array<i64: 1, 1024>}, {pipeline_mode = #tpu.pipeline_mode<synchronous>, transform_indices = @transform_5, window_bounds = array<i64: 128, 64>}, {pipeline_mode = #tpu.pipeline_mode<synchronous>, transform_indices = @transform_6, window_bounds = array<i64: 64, 128>}, {pipeline_mode = #tpu.pipeline_mode<synchronous>, transform_indices = @transform_7, window_bounds = array<i64: 64, 128>}, {pipeline_mode = #tpu.pipeline_mode<synchronous>, transform_indices = @transform_8, window_bounds = array<i64: 128, 1024>}, {pipeline_mode = #tpu.pipeline_mode<synchronous>, transform_indices = @transform_9, window_bounds = array<i64: 512, 128>}, {pipeline_mode = #tpu.pipeline_mode<synchronous>, transform_indices = @transform_10, window_bounds = array<i64: 1, 6, 128>}, {pipeline_mode = #tpu.pipeline_mode<synchronous>, transform_indices = @transform_11, window_bounds = array<i64: 1, 1, 1024>}, {pipeline_mode = #tpu.pipeline_mode<synchronous>, transform_indices = @transform_12, window_bounds = array<i64: 1, 128, 128>}, {pipeline_mode = #tpu.pipeline_mode<synchronous>, transform_indices = @transform_13, window_bounds = array<i64: 1, 128, 256>}, {pipeline_mode = #tpu.pipeline_mode<synchronous>, transform_indices = @transform_14, window_bounds = array<i64: 1, 128, 128>}, {pipeline_mode = #tpu.pipeline_mode<synchronous>, transform_indices = @transform_15, window_bounds = array<i64: 1, 128, 1024>}, {pipeline_mode = #tpu.pipeline_mode<synchronous>, transform_indices = @transform_16, window_bounds = array<i64: 1, 512, 128>}, {transform_indices = @transform_17, window_bounds = array<i64: 1, 32, 128>}]} {
    %c0 = arith.constant 0 : index
    %c0_0 = arith.constant 0 : index
    %0 = vector.load %arg2[%c0, %c0_0] : memref<32x128xf32, #tpu.memory_space<vmem>>, vector<32x128xf32>
    %c0_1 = arith.constant 0 : index
    %c0_2 = arith.constant 0 : index
    %c0_3 = arith.constant 0 : index
    %1 = vector.load %arg1[%c0_1, %c0_2, %c0_3] : memref<1x16x64xf32, #tpu.memory_space<vmem>>, vector<1x16x64xf32>
    %2 = vector.shape_cast %1 : vector<1x16x64xf32> to vector<16x64xf32>
    %c0_4 = arith.constant 0 : index
    %c0_5 = arith.constant 0 : index
    %3 = vector.load %arg3[%c0_4, %c0_5] : memref<6x128xf32, #tpu.memory_space<vmem>>, vector<6x128xf32>
    %c0_6 = arith.constant 0 : index
    %c0_7 = arith.constant 0 : index
    %4 = vector.load %arg4[%c0_6, %c0_7] : memref<2x64xf32, #tpu.memory_space<vmem>>, vector<2x64xf32>
    %5 = vector.extract_strided_slice %3 {offsets = [0, 0], sizes = [1, 128], strides = [1, 1]} : vector<6x128xf32> to vector<1x128xf32>
    %6 = vector.extract_strided_slice %3 {offsets = [1, 0], sizes = [1, 128], strides = [1, 1]} : vector<6x128xf32> to vector<1x128xf32>
    %cst = arith.constant dense<0.000000e+00> : vector<32xf32>
    %7 = vector.multi_reduction <add>, %0, %cst [1] : vector<32x128xf32> to vector<32xf32>
    %8 = vector.shape_cast %7 : vector<32xf32> to vector<32x1xf32>
    %cst_8 = arith.constant 1.280000e+02 : f32
    %9 = vector.broadcast %cst_8 : f32 to vector<32x1xf32>
    %10 = arith.divf %8, %9 : vector<32x1xf32>
    %11 = vector.broadcast %10 : vector<32x1xf32> to vector<32x128xf32>
    %12 = arith.subf %0, %11 : vector<32x128xf32>
    %13 = arith.mulf %12, %12 : vector<32x128xf32>
    %cst_9 = arith.constant dense<0.000000e+00> : vector<32xf32>
    %14 = vector.multi_reduction <add>, %13, %cst_9 [1] : vector<32x128xf32> to vector<32xf32>
    %15 = vector.shape_cast %14 : vector<32xf32> to vector<32x1xf32>
    %cst_10 = arith.constant 1.280000e+02 : f32
    %16 = vector.broadcast %cst_10 : f32 to vector<32x1xf32>
    %17 = arith.divf %15, %16 : vector<32x1xf32>
    %18 = vector.broadcast %10 : vector<32x1xf32> to vector<32x128xf32>
    %19 = arith.subf %0, %18 : vector<32x128xf32>
    %cst_11 = arith.constant 9.99999974E-6 : f32
    %20 = vector.broadcast %cst_11 : f32 to vector<32x1xf32>
    %21 = arith.addf %17, %20 : vector<32x1xf32>
    %22 = math.rsqrt %21 : vector<32x1xf32>
    %23 = vector.broadcast %22 : vector<32x1xf32> to vector<32x128xf32>
    %24 = arith.mulf %19, %23 : vector<32x128xf32>
    %25 = vector.broadcast %5 : vector<1x128xf32> to vector<32x128xf32>
    %26 = arith.mulf %24, %25 : vector<32x128xf32>
    %27 = vector.broadcast %6 : vector<1x128xf32> to vector<32x128xf32>
    %28 = arith.addf %26, %27 : vector<32x128xf32>
    %29 = vector.extract_strided_slice %4 {offsets = [0, 0], sizes = [1, 64], strides = [1, 1]} : vector<2x64xf32> to vector<1x64xf32>
    %30 = vector.extract_strided_slice %4 {offsets = [1, 0], sizes = [1, 64], strides = [1, 1]} : vector<2x64xf32> to vector<1x64xf32>
    %cst_12 = arith.constant dense<0.000000e+00> : vector<16xf32>
    %31 = vector.multi_reduction <add>, %2, %cst_12 [1] : vector<16x64xf32> to vector<16xf32>
    %32 = vector.shape_cast %31 : vector<16xf32> to vector<16x1xf32>
    %cst_13 = arith.constant 6.400000e+01 : f32
    %33 = vector.broadcast %cst_13 : f32 to vector<16x1xf32>
    %34 = arith.divf %32, %33 : vector<16x1xf32>
    %35 = vector.broadcast %34 : vector<16x1xf32> to vector<16x64xf32>
    %36 = arith.subf %2, %35 : vector<16x64xf32>
    %37 = arith.mulf %36, %36 : vector<16x64xf32>
    %cst_14 = arith.constant dense<0.000000e+00> : vector<16xf32>
    %38 = vector.multi_reduction <add>, %37, %cst_14 [1] : vector<16x64xf32> to vector<16xf32>
    %39 = vector.shape_cast %38 : vector<16xf32> to vector<16x1xf32>
    %cst_15 = arith.constant 6.400000e+01 : f32
    %40 = vector.broadcast %cst_15 : f32 to vector<16x1xf32>
    %41 = arith.divf %39, %40 : vector<16x1xf32>
    %42 = vector.broadcast %34 : vector<16x1xf32> to vector<16x64xf32>
    %43 = arith.subf %2, %42 : vector<16x64xf32>
    %cst_16 = arith.constant 9.99999974E-6 : f32
    %44 = vector.broadcast %cst_16 : f32 to vector<16x1xf32>
    %45 = arith.addf %41, %44 : vector<16x1xf32>
    %46 = math.rsqrt %45 : vector<16x1xf32>
    %47 = vector.broadcast %46 : vector<16x1xf32> to vector<16x64xf32>
    %48 = arith.mulf %43, %47 : vector<16x64xf32>
    %49 = vector.broadcast %29 : vector<1x64xf32> to vector<16x64xf32>
    %50 = arith.mulf %48, %49 : vector<16x64xf32>
    %51 = vector.broadcast %30 : vector<1x64xf32> to vector<16x64xf32>
    %52 = arith.addf %50, %51 : vector<16x64xf32>
    %c0_17 = arith.constant 0 : index
    %c0_18 = arith.constant 0 : index
    %53 = vector.load %arg6[%c0_17, %c0_18] : memref<128x64xbf16, #tpu.memory_space<vmem>>, vector<128x64xbf16>
    %c0_19 = arith.constant 0 : index
    %c0_20 = arith.constant 0 : index
    %54 = vector.load %arg7[%c0_19, %c0_20] : memref<64x128xbf16, #tpu.memory_space<vmem>>, vector<64x128xbf16>
    %c0_21 = arith.constant 0 : index
    %c0_22 = arith.constant 0 : index
    %55 = vector.load %arg8[%c0_21, %c0_22] : memref<64x128xbf16, #tpu.memory_space<vmem>>, vector<64x128xbf16>
    %56 = vector.extract_strided_slice %3 {offsets = [2, 0], sizes = [1, 128], strides = [1, 1]} : vector<6x128xf32> to vector<1x128xf32>
    %57 = arith.truncf %28 : vector<32x128xf32> to vector<32x128xbf16>
    %cst_23 = arith.constant dense<0.000000e+00> : vector<32x64xf32>
    %58 = tpu.matmul %57, %53, %cst_23 {dimension_numbers = #tpu.dot_dimension_numbers<[1], [0], [0], [1], [0, 0, 1, 1], [], []>} : vector<32x128xbf16>, vector<128x64xbf16>, vector<32x64xf32> -> vector<32x64xf32>
    %59 = arith.truncf %52 : vector<16x64xf32> to vector<16x64xbf16>
    %cst_24 = arith.constant dense<0.000000e+00> : vector<16x128xf32>
    %60 = tpu.matmul %59, %54, %cst_24 {dimension_numbers = #tpu.dot_dimension_numbers<[1], [0], [0], [1], [0, 0, 1, 1], [], []>} : vector<16x64xbf16>, vector<64x128xbf16>, vector<16x128xf32> -> vector<16x128xf32>
    %61 = arith.truncf %58 : vector<32x64xf32> to vector<32x64xbf16>
    %62 = vector.extract_strided_slice %60 {offsets = [0, 0], sizes = [16, 64], strides = [1, 1]} : vector<16x128xf32> to vector<16x64xf32>
    %63 = arith.truncf %62 : vector<16x64xf32> to vector<16x64xbf16>
    %64 = vector.extract_strided_slice %60 {offsets = [0, 64], sizes = [16, 64], strides = [1, 1]} : vector<16x128xf32> to vector<16x64xf32>
    %65 = arith.truncf %64 : vector<16x64xf32> to vector<16x64xbf16>
    %cst_25 = arith.constant dense<0.000000e+00> : vector<32x16xf32>
    %66 = tpu.matmul %61, %63, %cst_25 {dimension_numbers = #tpu.dot_dimension_numbers<[1], [1], [0], [0], [0, 0, 1, 0], [], []>} : vector<32x64xbf16>, vector<16x64xbf16>, vector<32x16xf32> -> vector<32x16xf32>
    %cst_26 = arith.constant 1.250000e-01 : f32
    %67 = vector.broadcast %cst_26 : f32 to vector<32x16xf32>
    %68 = arith.mulf %66, %67 : vector<32x16xf32>
    %cst_27 = arith.constant dense<0xFF800000> : vector<32xf32>
    %69 = vector.multi_reduction <maximumf>, %68, %cst_27 [1] : vector<32x16xf32> to vector<32xf32>
    %70 = vector.shape_cast %69 : vector<32xf32> to vector<32x1xf32>
    %71 = vector.broadcast %70 : vector<32x1xf32> to vector<32x16xf32>
    %72 = arith.subf %68, %71 : vector<32x16xf32>
    %73 = math.exp %72 : vector<32x16xf32>
    %cst_28 = arith.constant dense<0.000000e+00> : vector<32xf32>
    %74 = vector.multi_reduction <add>, %73, %cst_28 [1] : vector<32x16xf32> to vector<32xf32>
    %75 = vector.shape_cast %74 : vector<32xf32> to vector<32x1xf32>
    %76 = tpu.reciprocal %75 {approx = true} : vector<32x1xf32> -> vector<32x1xf32>
    %77 = vector.broadcast %76 : vector<32x1xf32> to vector<32x16xf32>
    %78 = arith.mulf %73, %77 : vector<32x16xf32>
    %79 = arith.truncf %78 : vector<32x16xf32> to vector<32x16xbf16>
    %cst_29 = arith.constant dense<0.000000e+00> : vector<32x64xf32>
    %80 = tpu.matmul %79, %65, %cst_29 {dimension_numbers = #tpu.dot_dimension_numbers<[1], [0], [0], [1], [0, 0, 1, 1], [], []>} : vector<32x16xbf16>, vector<16x64xbf16>, vector<32x64xf32> -> vector<32x64xf32>
    %81 = arith.truncf %80 : vector<32x64xf32> to vector<32x64xbf16>
    %cst_30 = arith.constant dense<0.000000e+00> : vector<32x128xf32>
    %82 = tpu.matmul %81, %55, %cst_30 {dimension_numbers = #tpu.dot_dimension_numbers<[1], [0], [0], [1], [0, 0, 1, 1], [], []>} : vector<32x64xbf16>, vector<64x128xbf16>, vector<32x128xf32> -> vector<32x128xf32>
    %83 = vector.broadcast %56 : vector<1x128xf32> to vector<32x128xf32>
    %84 = arith.addf %82, %83 : vector<32x128xf32>
    %85 = arith.addf %0, %84 : vector<32x128xf32>
    %86 = vector.extract_strided_slice %3 {offsets = [3, 0], sizes = [1, 128], strides = [1, 1]} : vector<6x128xf32> to vector<1x128xf32>
    %87 = vector.extract_strided_slice %3 {offsets = [4, 0], sizes = [1, 128], strides = [1, 1]} : vector<6x128xf32> to vector<1x128xf32>
    %cst_31 = arith.constant dense<0.000000e+00> : vector<32xf32>
    %88 = vector.multi_reduction <add>, %85, %cst_31 [1] : vector<32x128xf32> to vector<32xf32>
    %89 = vector.shape_cast %88 : vector<32xf32> to vector<32x1xf32>
    %cst_32 = arith.constant 1.280000e+02 : f32
    %90 = vector.broadcast %cst_32 : f32 to vector<32x1xf32>
    %91 = arith.divf %89, %90 : vector<32x1xf32>
    %92 = vector.broadcast %91 : vector<32x1xf32> to vector<32x128xf32>
    %93 = arith.subf %85, %92 : vector<32x128xf32>
    %94 = arith.mulf %93, %93 : vector<32x128xf32>
    %cst_33 = arith.constant dense<0.000000e+00> : vector<32xf32>
    %95 = vector.multi_reduction <add>, %94, %cst_33 [1] : vector<32x128xf32> to vector<32xf32>
    %96 = vector.shape_cast %95 : vector<32xf32> to vector<32x1xf32>
    %cst_34 = arith.constant 1.280000e+02 : f32
    %97 = vector.broadcast %cst_34 : f32 to vector<32x1xf32>
    %98 = arith.divf %96, %97 : vector<32x1xf32>
    %99 = vector.broadcast %91 : vector<32x1xf32> to vector<32x128xf32>
    %100 = arith.subf %85, %99 : vector<32x128xf32>
    %cst_35 = arith.constant 9.99999974E-6 : f32
    %101 = vector.broadcast %cst_35 : f32 to vector<32x1xf32>
    %102 = arith.addf %98, %101 : vector<32x1xf32>
    %103 = math.rsqrt %102 : vector<32x1xf32>
    %104 = vector.broadcast %103 : vector<32x1xf32> to vector<32x128xf32>
    %105 = arith.mulf %100, %104 : vector<32x128xf32>
    %106 = vector.broadcast %86 : vector<1x128xf32> to vector<32x128xf32>
    %107 = arith.mulf %105, %106 : vector<32x128xf32>
    %108 = vector.broadcast %87 : vector<1x128xf32> to vector<32x128xf32>
    %109 = arith.addf %107, %108 : vector<32x128xf32>
    %c0_36 = arith.constant 0 : index
    %c0_37 = arith.constant 0 : index
    %110 = vector.load %arg9[%c0_36, %c0_37] : memref<128x1024xbf16, #tpu.memory_space<vmem>>, vector<128x1024xbf16>
    %c0_38 = arith.constant 0 : index
    %c0_39 = arith.constant 0 : index
    %111 = vector.load %arg5[%c0_38, %c0_39] : memref<1x1024xf32, #tpu.memory_space<vmem>>, vector<1x1024xf32>
    %c0_40 = arith.constant 0 : index
    %c0_41 = arith.constant 0 : index
    %112 = vector.load %arg10[%c0_40, %c0_41] : memref<512x128xbf16, #tpu.memory_space<vmem>>, vector<512x128xbf16>
    %113 = vector.extract_strided_slice %3 {offsets = [5, 0], sizes = [1, 128], strides = [1, 1]} : vector<6x128xf32> to vector<1x128xf32>
    %114 = arith.truncf %109 : vector<32x128xf32> to vector<32x128xbf16>
    %cst_42 = arith.constant dense<0.000000e+00> : vector<32x1024xf32>
    %115 = tpu.matmul %114, %110, %cst_42 {dimension_numbers = #tpu.dot_dimension_numbers<[1], [0], [0], [1], [0, 0, 1, 1], [], []>} : vector<32x128xbf16>, vector<128x1024xbf16>, vector<32x1024xf32> -> vector<32x1024xf32>
    %116 = vector.broadcast %111 : vector<1x1024xf32> to vector<32x1024xf32>
    %117 = arith.addf %115, %116 : vector<32x1024xf32>
    %118 = vector.extract_strided_slice %117 {offsets = [0, 0], sizes = [32, 512], strides = [1, 1]} : vector<32x1024xf32> to vector<32x512xf32>
    %119 = vector.extract_strided_slice %117 {offsets = [0, 512], sizes = [32, 512], strides = [1, 1]} : vector<32x1024xf32> to vector<32x512xf32>
    %120 = arith.mulf %119, %119 : vector<32x512xf32>
    %121 = arith.mulf %119, %120 : vector<32x512xf32>
    %cst_43 = arith.constant 4.471500e-02 : f32
    %122 = vector.broadcast %cst_43 : f32 to vector<32x512xf32>
    %123 = arith.mulf %122, %121 : vector<32x512xf32>
    %124 = arith.addf %119, %123 : vector<32x512xf32>
    %cst_44 = arith.constant 0.797884583 : f32
    %125 = vector.broadcast %cst_44 : f32 to vector<32x512xf32>
    %126 = arith.mulf %125, %124 : vector<32x512xf32>
    %127 = math.tanh %126 : vector<32x512xf32>
    %cst_45 = arith.constant 1.000000e+00 : f32
    %128 = vector.broadcast %cst_45 : f32 to vector<32x512xf32>
    %129 = arith.addf %128, %127 : vector<32x512xf32>
    %cst_46 = arith.constant 5.000000e-01 : f32
    %130 = vector.broadcast %cst_46 : f32 to vector<32x512xf32>
    %131 = arith.mulf %130, %129 : vector<32x512xf32>
    %132 = arith.mulf %119, %131 : vector<32x512xf32>
    %133 = arith.mulf %118, %132 : vector<32x512xf32>
    %134 = arith.truncf %133 : vector<32x512xf32> to vector<32x512xbf16>
    %cst_47 = arith.constant dense<0.000000e+00> : vector<32x128xf32>
    %135 = tpu.matmul %134, %112, %cst_47 {dimension_numbers = #tpu.dot_dimension_numbers<[1], [0], [0], [1], [0, 0, 1, 1], [], []>} : vector<32x512xbf16>, vector<512x128xbf16>, vector<32x128xf32> -> vector<32x128xf32>
    %136 = vector.broadcast %113 : vector<1x128xf32> to vector<32x128xf32>
    %137 = arith.addf %135, %136 : vector<32x128xf32>
    %138 = arith.addf %85, %137 : vector<32x128xf32>
    %c0_48 = arith.constant 0 : index
    %c0_49 = arith.constant 0 : index
    %c0_50 = arith.constant 0 : index
    %139 = vector.load %arg11[%c0_48, %c0_49, %c0_50] : memref<1x6x128xf32, #tpu.memory_space<vmem>>, vector<1x6x128xf32>
    %140 = vector.shape_cast %139 : vector<1x6x128xf32> to vector<6x128xf32>
    %141 = vector.extract_strided_slice %140 {offsets = [0, 0], sizes = [1, 128], strides = [1, 1]} : vector<6x128xf32> to vector<1x128xf32>
    %142 = vector.extract_strided_slice %140 {offsets = [1, 0], sizes = [1, 128], strides = [1, 1]} : vector<6x128xf32> to vector<1x128xf32>
    %cst_51 = arith.constant dense<0.000000e+00> : vector<32xf32>
    %143 = vector.multi_reduction <add>, %138, %cst_51 [1] : vector<32x128xf32> to vector<32xf32>
    %144 = vector.shape_cast %143 : vector<32xf32> to vector<32x1xf32>
    %cst_52 = arith.constant 1.280000e+02 : f32
    %145 = vector.broadcast %cst_52 : f32 to vector<32x1xf32>
    %146 = arith.divf %144, %145 : vector<32x1xf32>
    %147 = vector.broadcast %146 : vector<32x1xf32> to vector<32x128xf32>
    %148 = arith.subf %138, %147 : vector<32x128xf32>
    %149 = arith.mulf %148, %148 : vector<32x128xf32>
    %cst_53 = arith.constant dense<0.000000e+00> : vector<32xf32>
    %150 = vector.multi_reduction <add>, %149, %cst_53 [1] : vector<32x128xf32> to vector<32xf32>
    %151 = vector.shape_cast %150 : vector<32xf32> to vector<32x1xf32>
    %cst_54 = arith.constant 1.280000e+02 : f32
    %152 = vector.broadcast %cst_54 : f32 to vector<32x1xf32>
    %153 = arith.divf %151, %152 : vector<32x1xf32>
    %154 = vector.broadcast %146 : vector<32x1xf32> to vector<32x128xf32>
    %155 = arith.subf %138, %154 : vector<32x128xf32>
    %cst_55 = arith.constant 9.99999974E-6 : f32
    %156 = vector.broadcast %cst_55 : f32 to vector<32x1xf32>
    %157 = arith.addf %153, %156 : vector<32x1xf32>
    %158 = math.rsqrt %157 : vector<32x1xf32>
    %159 = vector.broadcast %158 : vector<32x1xf32> to vector<32x128xf32>
    %160 = arith.mulf %155, %159 : vector<32x128xf32>
    %161 = vector.broadcast %141 : vector<1x128xf32> to vector<32x128xf32>
    %162 = arith.mulf %160, %161 : vector<32x128xf32>
    %163 = vector.broadcast %142 : vector<1x128xf32> to vector<32x128xf32>
    %164 = arith.addf %162, %163 : vector<32x128xf32>
    %c0_56 = arith.constant 0 : index
    %c0_57 = arith.constant 0 : index
    %c0_58 = arith.constant 0 : index
    %165 = vector.load %arg13[%c0_56, %c0_57, %c0_58] : memref<1x128x128xbf16, #tpu.memory_space<vmem>>, vector<1x128x128xbf16>
    %166 = vector.shape_cast %165 : vector<1x128x128xbf16> to vector<128x128xbf16>
    %c0_59 = arith.constant 0 : index
    %c0_60 = arith.constant 0 : index
    %c0_61 = arith.constant 0 : index
    %167 = vector.load %arg14[%c0_59, %c0_60, %c0_61] : memref<1x128x256xbf16, #tpu.memory_space<vmem>>, vector<1x128x256xbf16>
    %168 = vector.shape_cast %167 : vector<1x128x256xbf16> to vector<128x256xbf16>
    %c0_62 = arith.constant 0 : index
    %c0_63 = arith.constant 0 : index
    %c0_64 = arith.constant 0 : index
    %169 = vector.load %arg15[%c0_62, %c0_63, %c0_64] : memref<1x128x128xbf16, #tpu.memory_space<vmem>>, vector<1x128x128xbf16>
    %170 = vector.shape_cast %169 : vector<1x128x128xbf16> to vector<128x128xbf16>
    %171 = vector.extract_strided_slice %140 {offsets = [2, 0], sizes = [1, 128], strides = [1, 1]} : vector<6x128xf32> to vector<1x128xf32>
    %172 = arith.truncf %164 : vector<32x128xf32> to vector<32x128xbf16>
    %cst_65 = arith.constant dense<0.000000e+00> : vector<32x128xf32>
    %173 = tpu.matmul %172, %166, %cst_65 {dimension_numbers = #tpu.dot_dimension_numbers<[1], [0], [0], [1], [0, 0, 1, 1], [], []>} : vector<32x128xbf16>, vector<128x128xbf16>, vector<32x128xf32> -> vector<32x128xf32>
    %174 = arith.truncf %164 : vector<32x128xf32> to vector<32x128xbf16>
    %cst_66 = arith.constant dense<0.000000e+00> : vector<32x256xf32>
    %175 = tpu.matmul %174, %168, %cst_66 {dimension_numbers = #tpu.dot_dimension_numbers<[1], [0], [0], [1], [0, 0, 1, 1], [], []>} : vector<32x128xbf16>, vector<128x256xbf16>, vector<32x256xf32> -> vector<32x256xf32>
    %176 = vector.extract_strided_slice %173 {offsets = [0, 0], sizes = [32, 64], strides = [1, 1]} : vector<32x128xf32> to vector<32x64xf32>
    %177 = arith.truncf %176 : vector<32x64xf32> to vector<32x64xbf16>
    %178 = vector.extract_strided_slice %175 {offsets = [0, 0], sizes = [32, 64], strides = [1, 1]} : vector<32x256xf32> to vector<32x64xf32>
    %179 = arith.truncf %178 : vector<32x64xf32> to vector<32x64xbf16>
    %180 = vector.extract_strided_slice %175 {offsets = [0, 128], sizes = [32, 64], strides = [1, 1]} : vector<32x256xf32> to vector<32x64xf32>
    %181 = arith.truncf %180 : vector<32x64xf32> to vector<32x64xbf16>
    %cst_67 = arith.constant dense<0.000000e+00> : vector<32x32xf32>
    %182 = tpu.matmul %177, %179, %cst_67 {dimension_numbers = #tpu.dot_dimension_numbers<[1], [1], [0], [0], [0, 0, 1, 0], [], []>} : vector<32x64xbf16>, vector<32x64xbf16>, vector<32x32xf32> -> vector<32x32xf32>
    %cst_68 = arith.constant 1.250000e-01 : f32
    %183 = vector.broadcast %cst_68 : f32 to vector<32x32xf32>
    %184 = arith.mulf %182, %183 : vector<32x32xf32>
    %cst_69 = arith.constant dense<0xFF800000> : vector<32xf32>
    %185 = vector.multi_reduction <maximumf>, %184, %cst_69 [1] : vector<32x32xf32> to vector<32xf32>
    %186 = vector.shape_cast %185 : vector<32xf32> to vector<32x1xf32>
    %187 = vector.broadcast %186 : vector<32x1xf32> to vector<32x32xf32>
    %188 = arith.subf %184, %187 : vector<32x32xf32>
    %189 = math.exp %188 : vector<32x32xf32>
    %cst_70 = arith.constant dense<0.000000e+00> : vector<32xf32>
    %190 = vector.multi_reduction <add>, %189, %cst_70 [1] : vector<32x32xf32> to vector<32xf32>
    %191 = vector.shape_cast %190 : vector<32xf32> to vector<32x1xf32>
    %192 = tpu.reciprocal %191 {approx = true} : vector<32x1xf32> -> vector<32x1xf32>
    %193 = vector.broadcast %192 : vector<32x1xf32> to vector<32x32xf32>
    %194 = arith.mulf %189, %193 : vector<32x32xf32>
    %195 = arith.truncf %194 : vector<32x32xf32> to vector<32x32xbf16>
    %cst_71 = arith.constant dense<0.000000e+00> : vector<32x64xf32>
    %196 = tpu.matmul %195, %181, %cst_71 {dimension_numbers = #tpu.dot_dimension_numbers<[1], [0], [0], [1], [0, 0, 1, 1], [], []>} : vector<32x32xbf16>, vector<32x64xbf16>, vector<32x64xf32> -> vector<32x64xf32>
    %197 = vector.extract_strided_slice %173 {offsets = [0, 64], sizes = [32, 64], strides = [1, 1]} : vector<32x128xf32> to vector<32x64xf32>
    %198 = arith.truncf %197 : vector<32x64xf32> to vector<32x64xbf16>
    %199 = vector.extract_strided_slice %175 {offsets = [0, 64], sizes = [32, 64], strides = [1, 1]} : vector<32x256xf32> to vector<32x64xf32>
    %200 = arith.truncf %199 : vector<32x64xf32> to vector<32x64xbf16>
    %201 = vector.extract_strided_slice %175 {offsets = [0, 192], sizes = [32, 64], strides = [1, 1]} : vector<32x256xf32> to vector<32x64xf32>
    %202 = arith.truncf %201 : vector<32x64xf32> to vector<32x64xbf16>
    %cst_72 = arith.constant dense<0.000000e+00> : vector<32x32xf32>
    %203 = tpu.matmul %198, %200, %cst_72 {dimension_numbers = #tpu.dot_dimension_numbers<[1], [1], [0], [0], [0, 0, 1, 0], [], []>} : vector<32x64xbf16>, vector<32x64xbf16>, vector<32x32xf32> -> vector<32x32xf32>
    %cst_73 = arith.constant 1.250000e-01 : f32
    %204 = vector.broadcast %cst_73 : f32 to vector<32x32xf32>
    %205 = arith.mulf %203, %204 : vector<32x32xf32>
    %cst_74 = arith.constant dense<0xFF800000> : vector<32xf32>
    %206 = vector.multi_reduction <maximumf>, %205, %cst_74 [1] : vector<32x32xf32> to vector<32xf32>
    %207 = vector.shape_cast %206 : vector<32xf32> to vector<32x1xf32>
    %208 = vector.broadcast %207 : vector<32x1xf32> to vector<32x32xf32>
    %209 = arith.subf %205, %208 : vector<32x32xf32>
    %210 = math.exp %209 : vector<32x32xf32>
    %cst_75 = arith.constant dense<0.000000e+00> : vector<32xf32>
    %211 = vector.multi_reduction <add>, %210, %cst_75 [1] : vector<32x32xf32> to vector<32xf32>
    %212 = vector.shape_cast %211 : vector<32xf32> to vector<32x1xf32>
    %213 = tpu.reciprocal %212 {approx = true} : vector<32x1xf32> -> vector<32x1xf32>
    %214 = vector.broadcast %213 : vector<32x1xf32> to vector<32x32xf32>
    %215 = arith.mulf %210, %214 : vector<32x32xf32>
    %216 = arith.truncf %215 : vector<32x32xf32> to vector<32x32xbf16>
    %cst_76 = arith.constant dense<0.000000e+00> : vector<32x64xf32>
    %217 = tpu.matmul %216, %202, %cst_76 {dimension_numbers = #tpu.dot_dimension_numbers<[1], [0], [0], [1], [0, 0, 1, 1], [], []>} : vector<32x32xbf16>, vector<32x64xbf16>, vector<32x64xf32> -> vector<32x64xf32>
    %218 = tpu.concatenate %196, %217 in 1 : vector<32x64xf32>, vector<32x64xf32> -> vector<32x128xf32>
    %219 = arith.truncf %218 : vector<32x128xf32> to vector<32x128xbf16>
    %cst_77 = arith.constant dense<0.000000e+00> : vector<32x128xf32>
    %220 = tpu.matmul %219, %170, %cst_77 {dimension_numbers = #tpu.dot_dimension_numbers<[1], [0], [0], [1], [0, 0, 1, 1], [], []>} : vector<32x128xbf16>, vector<128x128xbf16>, vector<32x128xf32> -> vector<32x128xf32>
    %221 = vector.broadcast %171 : vector<1x128xf32> to vector<32x128xf32>
    %222 = arith.addf %220, %221 : vector<32x128xf32>
    %223 = arith.addf %138, %222 : vector<32x128xf32>
    %224 = vector.extract_strided_slice %140 {offsets = [3, 0], sizes = [1, 128], strides = [1, 1]} : vector<6x128xf32> to vector<1x128xf32>
    %225 = vector.extract_strided_slice %140 {offsets = [4, 0], sizes = [1, 128], strides = [1, 1]} : vector<6x128xf32> to vector<1x128xf32>
    %cst_78 = arith.constant dense<0.000000e+00> : vector<32xf32>
    %226 = vector.multi_reduction <add>, %223, %cst_78 [1] : vector<32x128xf32> to vector<32xf32>
    %227 = vector.shape_cast %226 : vector<32xf32> to vector<32x1xf32>
    %cst_79 = arith.constant 1.280000e+02 : f32
    %228 = vector.broadcast %cst_79 : f32 to vector<32x1xf32>
    %229 = arith.divf %227, %228 : vector<32x1xf32>
    %230 = vector.broadcast %229 : vector<32x1xf32> to vector<32x128xf32>
    %231 = arith.subf %223, %230 : vector<32x128xf32>
    %232 = arith.mulf %231, %231 : vector<32x128xf32>
    %cst_80 = arith.constant dense<0.000000e+00> : vector<32xf32>
    %233 = vector.multi_reduction <add>, %232, %cst_80 [1] : vector<32x128xf32> to vector<32xf32>
    %234 = vector.shape_cast %233 : vector<32xf32> to vector<32x1xf32>
    %cst_81 = arith.constant 1.280000e+02 : f32
    %235 = vector.broadcast %cst_81 : f32 to vector<32x1xf32>
    %236 = arith.divf %234, %235 : vector<32x1xf32>
    %237 = vector.broadcast %229 : vector<32x1xf32> to vector<32x128xf32>
    %238 = arith.subf %223, %237 : vector<32x128xf32>
    %cst_82 = arith.constant 9.99999974E-6 : f32
    %239 = vector.broadcast %cst_82 : f32 to vector<32x1xf32>
    %240 = arith.addf %236, %239 : vector<32x1xf32>
    %241 = math.rsqrt %240 : vector<32x1xf32>
    %242 = vector.broadcast %241 : vector<32x1xf32> to vector<32x128xf32>
    %243 = arith.mulf %238, %242 : vector<32x128xf32>
    %244 = vector.broadcast %224 : vector<1x128xf32> to vector<32x128xf32>
    %245 = arith.mulf %243, %244 : vector<32x128xf32>
    %246 = vector.broadcast %225 : vector<1x128xf32> to vector<32x128xf32>
    %247 = arith.addf %245, %246 : vector<32x128xf32>
    %c0_83 = arith.constant 0 : index
    %c0_84 = arith.constant 0 : index
    %c0_85 = arith.constant 0 : index
    %248 = vector.load %arg16[%c0_83, %c0_84, %c0_85] : memref<1x128x1024xbf16, #tpu.memory_space<vmem>>, vector<1x128x1024xbf16>
    %249 = vector.shape_cast %248 : vector<1x128x1024xbf16> to vector<128x1024xbf16>
    %c0_86 = arith.constant 0 : index
    %c0_87 = arith.constant 0 : index
    %c0_88 = arith.constant 0 : index
    %250 = vector.load %arg12[%c0_86, %c0_87, %c0_88] : memref<1x1x1024xf32, #tpu.memory_space<vmem>>, vector<1x1x1024xf32>
    %251 = vector.shape_cast %250 : vector<1x1x1024xf32> to vector<1x1024xf32>
    %c0_89 = arith.constant 0 : index
    %c0_90 = arith.constant 0 : index
    %c0_91 = arith.constant 0 : index
    %252 = vector.load %arg17[%c0_89, %c0_90, %c0_91] : memref<1x512x128xbf16, #tpu.memory_space<vmem>>, vector<1x512x128xbf16>
    %253 = vector.shape_cast %252 : vector<1x512x128xbf16> to vector<512x128xbf16>
    %254 = vector.extract_strided_slice %140 {offsets = [5, 0], sizes = [1, 128], strides = [1, 1]} : vector<6x128xf32> to vector<1x128xf32>
    %255 = arith.truncf %247 : vector<32x128xf32> to vector<32x128xbf16>
    %cst_92 = arith.constant dense<0.000000e+00> : vector<32x1024xf32>
    %256 = tpu.matmul %255, %249, %cst_92 {dimension_numbers = #tpu.dot_dimension_numbers<[1], [0], [0], [1], [0, 0, 1, 1], [], []>} : vector<32x128xbf16>, vector<128x1024xbf16>, vector<32x1024xf32> -> vector<32x1024xf32>
    %257 = vector.broadcast %251 : vector<1x1024xf32> to vector<32x1024xf32>
    %258 = arith.addf %256, %257 : vector<32x1024xf32>
    %259 = vector.extract_strided_slice %258 {offsets = [0, 0], sizes = [32, 512], strides = [1, 1]} : vector<32x1024xf32> to vector<32x512xf32>
    %260 = vector.extract_strided_slice %258 {offsets = [0, 512], sizes = [32, 512], strides = [1, 1]} : vector<32x1024xf32> to vector<32x512xf32>
    %261 = arith.mulf %260, %260 : vector<32x512xf32>
    %262 = arith.mulf %260, %261 : vector<32x512xf32>
    %cst_93 = arith.constant 4.471500e-02 : f32
    %263 = vector.broadcast %cst_93 : f32 to vector<32x512xf32>
    %264 = arith.mulf %263, %262 : vector<32x512xf32>
    %265 = arith.addf %260, %264 : vector<32x512xf32>
    %cst_94 = arith.constant 0.797884583 : f32
    %266 = vector.broadcast %cst_94 : f32 to vector<32x512xf32>
    %267 = arith.mulf %266, %265 : vector<32x512xf32>
    %268 = math.tanh %267 : vector<32x512xf32>
    %cst_95 = arith.constant 1.000000e+00 : f32
    %269 = vector.broadcast %cst_95 : f32 to vector<32x512xf32>
    %270 = arith.addf %269, %268 : vector<32x512xf32>
    %cst_96 = arith.constant 5.000000e-01 : f32
    %271 = vector.broadcast %cst_96 : f32 to vector<32x512xf32>
    %272 = arith.mulf %271, %270 : vector<32x512xf32>
    %273 = arith.mulf %260, %272 : vector<32x512xf32>
    %274 = arith.mulf %259, %273 : vector<32x512xf32>
    %275 = arith.truncf %274 : vector<32x512xf32> to vector<32x512xbf16>
    %cst_97 = arith.constant dense<0.000000e+00> : vector<32x128xf32>
    %276 = tpu.matmul %275, %253, %cst_97 {dimension_numbers = #tpu.dot_dimension_numbers<[1], [0], [0], [1], [0, 0, 1, 1], [], []>} : vector<32x512xbf16>, vector<512x128xbf16>, vector<32x128xf32> -> vector<32x128xf32>
    %277 = vector.broadcast %254 : vector<1x128xf32> to vector<32x128xf32>
    %278 = arith.addf %276, %277 : vector<32x128xf32>
    %279 = arith.addf %223, %278 : vector<32x128xf32>
    %c0_98 = arith.constant 0 : index
    %c0_99 = arith.constant 0 : index
    %c0_100 = arith.constant 0 : index
    %280 = vector.load %arg18[%c0_98, %c0_99, %c0_100] : memref<1x32x128xf32, #tpu.memory_space<vmem>>, vector<1x32x128xf32>
    %281 = vector.shape_cast %280 : vector<1x32x128xf32> to vector<32x128xf32>
    %282 = vector.shape_cast %279 : vector<32x128xf32> to vector<1x32x128xf32>
    tpu.vector_store %arg18[%c0_98, %c0_99, %c0_100], %282 {strides = array<i32>} : memref<1x32x128xf32, #tpu.memory_space<vmem>>, vector<1x32x128xf32>,
    return
  }
  func.func @transform_0(%arg0: i32) -> (i32, i32, i32) {
    %c0_i32 = arith.constant 0 : i32
    %c0_i32_0 = arith.constant 0 : i32
    %c0_i32_1 = arith.constant 0 : i32
    return %arg0, %c0_i32, %c0_i32_0 : i32, i32, i32
  }
  func.func @transform_1(%arg0: i32) -> (i32, i32) {
    %c0_i32 = arith.constant 0 : i32
    %c0_i32_0 = arith.constant 0 : i32
    %c0_i32_1 = arith.constant 0 : i32
    return %c0_i32, %c0_i32_0 : i32, i32
  }
  func.func @transform_2(%arg0: i32) -> (i32, i32) {
    %c0_i32 = arith.constant 0 : i32
    %c0_i32_0 = arith.constant 0 : i32
    %c0_i32_1 = arith.constant 0 : i32
    return %c0_i32, %c0_i32_0 : i32, i32
  }
  func.func @transform_3(%arg0: i32) -> (i32, i32) {
    %c0_i32 = arith.constant 0 : i32
    %c0_i32_0 = arith.constant 0 : i32
    %c0_i32_1 = arith.constant 0 : i32
    return %c0_i32, %c0_i32_0 : i32, i32
  }
  func.func @transform_4(%arg0: i32) -> (i32, i32) {
    %c0_i32 = arith.constant 0 : i32
    %c0_i32_0 = arith.constant 0 : i32
    %c0_i32_1 = arith.constant 0 : i32
    return %c0_i32, %c0_i32_0 : i32, i32
  }
  func.func @transform_5(%arg0: i32) -> (i32, i32) {
    %c0_i32 = arith.constant 0 : i32
    %c0_i32_0 = arith.constant 0 : i32
    %c0_i32_1 = arith.constant 0 : i32
    return %c0_i32, %c0_i32_0 : i32, i32
  }
  func.func @transform_6(%arg0: i32) -> (i32, i32) {
    %c0_i32 = arith.constant 0 : i32
    %c0_i32_0 = arith.constant 0 : i32
    %c0_i32_1 = arith.constant 0 : i32
    return %c0_i32, %c0_i32_0 : i32, i32
  }
  func.func @transform_7(%arg0: i32) -> (i32, i32) {
    %c0_i32 = arith.constant 0 : i32
    %c0_i32_0 = arith.constant 0 : i32
    %c0_i32_1 = arith.constant 0 : i32
    return %c0_i32, %c0_i32_0 : i32, i32
  }
  func.func @transform_8(%arg0: i32) -> (i32, i32) {
    %c0_i32 = arith.constant 0 : i32
    %c0_i32_0 = arith.constant 0 : i32
    %c0_i32_1 = arith.constant 0 : i32
    return %c0_i32, %c0_i32_0 : i32, i32
  }
  func.func @transform_9(%arg0: i32) -> (i32, i32) {
    %c0_i32 = arith.constant 0 : i32
    %c0_i32_0 = arith.constant 0 : i32
    %c0_i32_1 = arith.constant 0 : i32
    return %c0_i32, %c0_i32_0 : i32, i32
  }
  func.func @transform_10(%arg0: i32) -> (i32, i32, i32) {
    %c0_i32 = arith.constant 0 : i32
    %c0_i32_0 = arith.constant 0 : i32
    %c0_i32_1 = arith.constant 0 : i32
    %c0_i32_2 = arith.constant 0 : i32
    return %c0_i32, %c0_i32_0, %c0_i32_1 : i32, i32, i32
  }
  func.func @transform_11(%arg0: i32) -> (i32, i32, i32) {
    %c0_i32 = arith.constant 0 : i32
    %c0_i32_0 = arith.constant 0 : i32
    %c0_i32_1 = arith.constant 0 : i32
    %c0_i32_2 = arith.constant 0 : i32
    return %c0_i32, %c0_i32_0, %c0_i32_1 : i32, i32, i32
  }
  func.func @transform_12(%arg0: i32) -> (i32, i32, i32) {
    %c0_i32 = arith.constant 0 : i32
    %c0_i32_0 = arith.constant 0 : i32
    %c0_i32_1 = arith.constant 0 : i32
    %c0_i32_2 = arith.constant 0 : i32
    return %c0_i32, %c0_i32_0, %c0_i32_1 : i32, i32, i32
  }
  func.func @transform_13(%arg0: i32) -> (i32, i32, i32) {
    %c0_i32 = arith.constant 0 : i32
    %c0_i32_0 = arith.constant 0 : i32
    %c0_i32_1 = arith.constant 0 : i32
    %c0_i32_2 = arith.constant 0 : i32
    return %c0_i32, %c0_i32_0, %c0_i32_1 : i32, i32, i32
  }
  func.func @transform_14(%arg0: i32) -> (i32, i32, i32) {
    %c0_i32 = arith.constant 0 : i32
    %c0_i32_0 = arith.constant 0 : i32
    %c0_i32_1 = arith.constant 0 : i32
    %c0_i32_2 = arith.constant 0 : i32
    return %c0_i32, %c0_i32_0, %c0_i32_1 : i32, i32, i32
  }
  func.func @transform_15(%arg0: i32) -> (i32, i32, i32) {
    %c0_i32 = arith.constant 0 : i32
    %c0_i32_0 = arith.constant 0 : i32
    %c0_i32_1 = arith.constant 0 : i32
    %c0_i32_2 = arith.constant 0 : i32
    return %c0_i32, %c0_i32_0, %c0_i32_1 : i32, i32, i32
  }
  func.func @transform_16(%arg0: i32) -> (i32, i32, i32) {
    %c0_i32 = arith.constant 0 : i32
    %c0_i32_0 = arith.constant 0 : i32
    %c0_i32_1 = arith.constant 0 : i32
    %c0_i32_2 = arith.constant 0 : i32
    return %c0_i32, %c0_i32_0, %c0_i32_1 : i32, i32, i32
  }
  func.func @transform_17(%arg0: i32) -> (i32, i32, i32) {
    %c0_i32 = arith.constant 0 : i32
    %c0_i32_0 = arith.constant 0 : i32
    %c0_i32_1 = arith.constant 0 : i32
    return %arg0, %c0_i32, %c0_i32_0 : i32, i32, i32
  }
}

</mosaic_0001>

<llo_original>
// kernel: fwd.1
$region0: #{fwd.1}
  #allocation0 [shape = 'u32[]', space=smem, size = 0x4, offset = 0x4, fixed_abs, tag = 'smem constant byte address 0x4 - core index']
  #allocation1 [shape = 'u32[72,128]{1,0:T(1,128)}', space=vmem, size = 0x9000, scoped, tag = 'internal scratch']
  %s0 = inlined_call_operand.vmem [shape: f32[2,16,64], index: 0, kind: input, shape index: {}]
  %s1 = inlined_call_operand.hbm [shape: f32[32,128], index: 1, kind: input, shape index: {}]
  %s2 = inlined_call_operand.vmem [shape: f32[6,128], index: 2, kind: input, shape index: {}]
  %s3 = inlined_call_operand.hbm [shape: f32[2,64], index: 3, kind: input, shape index: {}]
  %s4 = inlined_call_operand.vmem [shape: f32[1,1024], index: 4, kind: input, shape index: {}]
  %s5 = inlined_call_operand.vmem [shape: bf16[128,64], index: 5, kind: input, shape index: {}]
  %s6 = inlined_call_operand.hbm [shape: bf16[64,128], index: 6, kind: input, shape index: {}]
  %s7 = inlined_call_operand.hbm [shape: bf16[64,128], index: 7, kind: input, shape index: {}]
  %s8 = inlined_call_operand.hbm [shape: bf16[128,1024], index: 8, kind: input, shape index: {}]
  %s9 = inlined_call_operand.hbm [shape: bf16[512,128], index: 9, kind: input, shape index: {}]
  %s10 = inlined_call_operand.vmem [shape: f32[1,6,128], index: 10, kind: input, shape index: {}]
  %s11 = inlined_call_operand.hbm [shape: f32[1,1,1024], index: 11, kind: input, shape index: {}]
  %s12 = inlined_call_operand.vmem [shape: bf16[1,128,128], index: 12, kind: input, shape index: {}]
  %s13 = inlined_call_operand.hbm [shape: bf16[1,128,256], index: 13, kind: input, shape index: {}]
  %s14 = inlined_call_operand.hbm [shape: bf16[1,128,128], index: 14, kind: input, shape index: {}]
  %s15 = inlined_call_operand.hbm [shape: bf16[1,128,1024], index: 15, kind: input, shape index: {}]
  %s16 = inlined_call_operand.hbm [shape: bf16[1,512,128], index: 16, kind: input, shape index: {}]
  %s17 = inlined_call_operand.hbm [shape: f32[2,32,128], index: 17, kind: output, shape index: {}]
  %s18 = sld [smem:[#allocation0]]
  $region145: #{fwd.1} parent=0
    _
  %s20 = ssub.s32 1, %s18
  %s21 = scalar_select 0, %s20, %s18
  $region1: #{fwd.1} parent=0
    #allocation2 [shape = 'u8[16384]{0}', space=vmem, size = 0x4000, scoped, tag = 'input window, operand 1, single buffered']
    #allocation3 [shape = 's32[2]{0}', space=sflag, size = 0x8, scoped, tag = 'scoped memory for fwd.1']
    #allocation4 [shape = 's32[2]{0}', space=sflag, size = 0x8, scoped, tag = 'scoped memory for fwd.1']
    #allocation5 [shape = 'u8[1024]{0}', space=vmem, size = 0x400, scoped, tag = 'input window, operand 3, single buffered']
    #allocation6 [shape = 's32[1]{0}', space=sflag, size = 0x4, scoped, tag = 'scoped memory for fwd.1']
    #allocation7 [shape = 'u8[16384]{0}', space=vmem, size = 0x4000, scoped, tag = 'input window, operand 6, single buffered']
    #allocation8 [shape = 'u8[16384]{0}', space=vmem, size = 0x4000, scoped, tag = 'input window, operand 7, single buffered']
    #allocation9 [shape = 's32[1]{0}', space=sflag, size = 0x4, scoped, tag = 'scoped memory for fwd.1']
    #allocation10 [shape = 'u8[262144]{0}', space=vmem, size = 0x40000, scoped, tag = 'input window, operand 8, single buffered']
    #allocation11 [shape = 'u8[131072]{0}', space=vmem, size = 0x20000, scoped, tag = 'input window, operand 9, single buffered']
    #allocation12 [shape = 's32[1]{0}', space=sflag, size = 0x4, scoped, tag = 'scoped memory for fwd.1']
    #allocation13 [shape = 'u8[4096]{0}', space=vmem, size = 0x1000, scoped, tag = 'input window, operand 11, single buffered']
    #allocation14 [shape = 'u8[65536]{0}', space=vmem, size = 0x10000, scoped, tag = 'input window, operand 13, single buffered']
    #allocation15 [shape = 's32[1]{0}', space=sflag, size = 0x4, scoped, tag = 'scoped memory for fwd.1']
    #allocation16 [shape = 'u8[32768]{0}', space=vmem, size = 0x8000, scoped, tag = 'input window, operand 14, single buffered']
    #allocation17 [shape = 'u8[262144]{0}', space=vmem, size = 0x40000, scoped, tag = 'input window, operand 15, single buffered']
    #allocation18 [shape = 's32[1]{0}', space=sflag, size = 0x4, scoped, tag = 'scoped memory for fwd.1']
    #allocation19 [shape = 'u8[131072]{0}', space=vmem, size = 0x20000, scoped, tag = 'input window, operand 16, single buffered']
    #allocation20 [shape = 'u8[32768]{0}', space=vmem, size = 0x8000, scoped, tag = 'output window, operand 0']
    %22 = vsyncpa [#allocation3], 0
    %23 = vsyncpa [#allocation6], 0
    %24 = vsyncpa [#allocation9], 0
    %25 = vsyncpa [#allocation12], 0
    %26 = vsyncpa [#allocation15], 0
    %27 = vsyncpa [#allocation18], 0
    %28 = vsyncpa [#allocation4], 0
    %s29 = scalar_lea.sflag [#allocation4], 1
    %30 = vsyncpa %s29, 0
    loop: start=0, step=1, limit=4
    $region2: #{fwd.1} parent=1 // loop_pre_header
      _
    $region3: #{fwd.1} parent=1 // loop_header
      %s32 = sphi 0, %s36
      %p33 = scmp.ge.s32.totalorder %s32, 4
      %s42 = sphi 0, %s44
      %s45 = sphi 0, %s42
      %s46 = sphi 0, %s45
      %s62 = sphi 0, %s46
      %s66 = sphi 0, %s66
      %s68 = sphi 0, %s66
      %s69 = sphi 0, %s68
      %s83 = sphi 0, %s69
      %s87 = sphi 0, %s87
      %s89 = sphi 0, %s87
      %s90 = sphi 0, %s89
      %s104 = sphi 0, %s90
      %s108 = sphi 0, %s108
      %s110 = sphi 0, %s108
      %s111 = sphi 0, %s110
      %s125 = sphi 0, %s111
      %s129 = sphi 0, %s129
      %s131 = sphi 0, %s129
      %s132 = sphi 0, %s131
      %s146 = sphi 0, %s132
      %s150 = sphi 0, %s150
      %s152 = sphi 0, %s150
      %s153 = sphi 0, %s152
      %s167 = sphi 0, %s153
      %s171 = sphi 0, %s171
      %s173 = sphi 0, %s171
      %s174 = sphi 0, %s173
      %s188 = sphi 0, %s174
      %s192 = sphi 0, %s192
      %s194 = sphi 0, %s192
      %s195 = sphi 0, %s194
      %s209 = sphi 0, %s195
      %s213 = sphi 0, %s213
      %s215 = sphi 0, %s213
      %s216 = sphi 0, %s215
      %s230 = sphi 0, %s216
      %s234 = sphi 0, %s234
      %s236 = sphi 0, %s234
      %s237 = sphi 0, %s236
      %s251 = sphi 0, %s237
      %s255 = sphi 0, %s255
      %s257 = sphi 0, %s255
      %s258 = sphi 0, %s257
      %s272 = sphi 0, %s258
      %s276 = sphi 0, %s276
      %s278 = sphi 0, %s276
      %s279 = sphi 0, %s278
      %s293 = sphi 0, %s279
      %s297 = sphi 0, %s297
      %s299 = sphi 0, %s297
      %s300 = sphi 0, %s299
      %s314 = sphi 0, %s300
      %s318 = sphi 0, %s318
      %s320 = sphi 0, %s318
      %s321 = sphi 0, %s320
      %s335 = sphi 0, %s321
      %s339 = sphi 0, %s339
      %s341 = sphi 0, %s339
      %s342 = sphi 0, %s341
      %s356 = sphi 0, %s342
      %s360 = sphi 0, %s360
      %s362 = sphi 0, %s360
      %s363 = sphi 0, %s362
      %s377 = sphi 0, %s363
      %s381 = sphi 0, %s381
      %s383 = sphi 0, %s381
      %s384 = sphi 0, %s383
      %s398 = sphi 0, %s384
      %s404 = sphi 0, %s406
      %s407 = sphi 0, %s404
      %s408 = sphi 0, %s407
      %s424 = sphi 0, %s408
    $region4: #{fwd.1} parent=1 // loop_header_branch
      %35 = sbr.rel (%p33) target = $region8
    $region5: #{fwd.1} parent=1 // loop_body
      %s37 = ssub.s32 %s32, 1
      %s38 = ssub.s32 %s32, 2
      %s39 = sadd.s32 %s32, 1
      %s40 = ssub.s32 %s32, %s39
      %p41 = scmp.eq.s32.totalorder %s40, 0
      %s43 = sadd.s32 %s42, 1
      %s44 = scalar_select %p41, %s42, %s43
      %p47 = pneg %p41
      %p48 = scmp.eq.s32.totalorder %s32, 1
      %p49 = por %p47, %p48
      %p50 = scmp.ne.s32.totalorder %s42, %s45
      %p51 = scmp.eq.s32.totalorder %s32, 0
      %p52 = por %p50, %p51
      %p53 = scmp.ne.s32.totalorder %s42, %s45
      %p54 = scmp.eq.s32.totalorder %s37, 1
      %p55 = por %p53, %p54
      %p56 = scmp.ne.s32.totalorder %s45, %s46
      %p57 = scmp.eq.s32.totalorder %s37, 0
      %p58 = por %p56, %p57
      %p59 = scmp.ne.s32.totalorder %s45, %s46
      %p60 = scmp.eq.s32.totalorder %s38, 1
      %p61 = por %p59, %p60
      %p63 = scmp.ne.s32.totalorder %s46, %s62
      %p64 = scmp.eq.s32.totalorder %s38, 0
      %p65 = por %p63, %p64
      %s67 = sadd.s32 %s66, 1
      %p70 = scmp.eq.s32.totalorder %s32, 1
      %p71 = scmp.ne.s32.totalorder %s66, %s68
      %p72 = scmp.eq.s32.totalorder %s32, 0
      %p73 = por %p71, %p72
      %p74 = scmp.ne.s32.totalorder %s66, %s68
      %p75 = scmp.eq.s32.totalorder %s37, 1
      %p76 = por %p74, %p75
      %p77 = scmp.ne.s32.totalorder %s68, %s69
      %p78 = scmp.eq.s32.totalorder %s37, 0
      %p79 = por %p77, %p78
      %p80 = scmp.ne.s32.totalorder %s68, %s69
      %p81 = scmp.eq.s32.totalorder %s38, 1
      %p82 = por %p80, %p81
      %p84 = scmp.ne.s32.totalorder %s69, %s83
      %p85 = scmp.eq.s32.totalorder %s38, 0
      %p86 = por %p84, %p85
      %s88 = sadd.s32 %s87, 1
      %p91 = scmp.eq.s32.totalorder %s32, 1
      %p92 = scmp.ne.s32.totalorder %s87, %s89
      %p93 = scmp.eq.s32.totalorder %s32, 0
      %p94 = por %p92, %p93
      %p95 = scmp.ne.s32.totalorder %s87, %s89
      %p96 = scmp.eq.s32.totalorder %s37, 1
      %p97 = por %p95, %p96
      %p98 = scmp.ne.s32.totalorder %s89, %s90
      %p99 = scmp.eq.s32.totalorder %s37, 0
      %p100 = por %p98, %p99
      %p101 = scmp.ne.s32.totalorder %s89, %s90
      %p102 = scmp.eq.s32.totalorder %s38, 1
      %p103 = por %p101, %p102
      %p105 = scmp.ne.s32.totalorder %s90, %s104
      %p106 = scmp.eq.s32.totalorder %s38, 0
      %p107 = por %p105, %p106
      %s109 = sadd.s32 %s108, 1
      %p112 = scmp.eq.s32.totalorder %s32, 1
      %p113 = scmp.ne.s32.totalorder %s108, %s110
      %p114 = scmp.eq.s32.totalorder %s32, 0
      %p115 = por %p113, %p114
      %p116 = scmp.ne.s32.totalorder %s108, %s110
      %p117 = scmp.eq.s32.totalorder %s37, 1
      %p118 = por %p116, %p117
      %p119 = scmp.ne.s32.totalorder %s110, %s111
      %p120 = scmp.eq.s32.totalorder %s37, 0
      %p121 = por %p119, %p120
      %p122 = scmp.ne.s32.totalorder %s110, %s111
      %p123 = scmp.eq.s32.totalorder %s38, 1
      %p124 = por %p122, %p123
      %p126 = scmp.ne.s32.totalorder %s111, %s125
      %p127 = scmp.eq.s32.totalorder %s38, 0
      %p128 = por %p126, %p127
      %s130 = sadd.s32 %s129, 1
      %p133 = scmp.eq.s32.totalorder %s32, 1
      %p134 = scmp.ne.s32.totalorder %s129, %s131
      %p135 = scmp.eq.s32.totalorder %s32, 0
      %p136 = por %p134, %p135
      %p137 = scmp.ne.s32.totalorder %s129, %s131
      %p138 = scmp.eq.s32.totalorder %s37, 1
      %p139 = por %p137, %p138
      %p140 = scmp.ne.s32.totalorder %s131, %s132
      %p141 = scmp.eq.s32.totalorder %s37, 0
      %p142 = por %p140, %p141
      %p143 = scmp.ne.s32.totalorder %s131, %s132
      %p144 = scmp.eq.s32.totalorder %s38, 1
      %p145 = por %p143, %p144
      %p147 = scmp.ne.s32.totalorder %s132, %s146
      %p148 = scmp.eq.s32.totalorder %s38, 0
      %p149 = por %p147, %p148
      %s151 = sadd.s32 %s150, 1
      %p154 = scmp.eq.s32.totalorder %s32, 1
      %p155 = scmp.ne.s32.totalorder %s150, %s152
      %p156 = scmp.eq.s32.totalorder %s32, 0
      %p157 = por %p155, %p156
      %p158 = scmp.ne.s32.totalorder %s150, %s152
      %p159 = scmp.eq.s32.totalorder %s37, 1
      %p160 = por %p158, %p159
      %p161 = scmp.ne.s32.totalorder %s152, %s153
      %p162 = scmp.eq.s32.totalorder %s37, 0
      %p163 = por %p161, %p162
      %p164 = scmp.ne.s32.totalorder %s152, %s153
      %p165 = scmp.eq.s32.totalorder %s38, 1
      %p166 = por %p164, %p165
      %p168 = scmp.ne.s32.totalorder %s153, %s167
      %p169 = scmp.eq.s32.totalorder %s38, 0
      %p170 = por %p168, %p169
      %s172 = sadd.s32 %s171, 1
      %p175 = scmp.eq.s32.totalorder %s32, 1
      %p176 = scmp.ne.s32.totalorder %s171, %s173
      %p177 = scmp.eq.s32.totalorder %s32, 0
      %p178 = por %p176, %p177
      %p179 = scmp.ne.s32.totalorder %s171, %s173
      %p180 = scmp.eq.s32.totalorder %s37, 1
      %p181 = por %p179, %p180
      %p182 = scmp.ne.s32.totalorder %s173, %s174
      %p183 = scmp.eq.s32.totalorder %s37, 0
      %p184 = por %p182, %p183
      %p185 = scmp.ne.s32.totalorder %s173, %s174
      %p186 = scmp.eq.s32.totalorder %s38, 1
      %p187 = por %p185, %p186
      %p189 = scmp.ne.s32.totalorder %s174, %s188
      %p190 = scmp.eq.s32.totalorder %s38, 0
      %p191 = por %p189, %p190
      %s193 = sadd.s32 %s192, 1
      %p196 = scmp.eq.s32.totalorder %s32, 1
      %p197 = scmp.ne.s32.totalorder %s192, %s194
      %p198 = scmp.eq.s32.totalorder %s32, 0
      %p199 = por %p197, %p198
      %p200 = scmp.ne.s32.totalorder %s192, %s194
      %p201 = scmp.eq.s32.totalorder %s37, 1
      %p202 = por %p200, %p201
      %p203 = scmp.ne.s32.totalorder %s194, %s195
      %p204 = scmp.eq.s32.totalorder %s37, 0
      %p205 = por %p203, %p204
      %p206 = scmp.ne.s32.totalorder %s194, %s195
      %p207 = scmp.eq.s32.totalorder %s38, 1
      %p208 = por %p206, %p207
      %p210 = scmp.ne.s32.totalorder %s195, %s209
      %p211 = scmp.eq.s32.totalorder %s38, 0
      %p212 = por %p210, %p211
      %s214 = sadd.s32 %s213, 1
      %p217 = scmp.eq.s32.totalorder %s32, 1
      %p218 = scmp.ne.s32.totalorder %s213, %s215
      %p219 = scmp.eq.s32.totalorder %s32, 0
      %p220 = por %p218, %p219
      %p221 = scmp.ne.s32.totalorder %s213, %s215
      %p222 = scmp.eq.s32.totalorder %s37, 1
      %p223 = por %p221, %p222
      %p224 = scmp.ne.s32.totalorder %s215, %s216
      %p225 = scmp.eq.s32.totalorder %s37, 0
      %p226 = por %p224, %p225
      %p227 = scmp.ne.s32.totalorder %s215, %s216
      %p228 = scmp.eq.s32.totalorder %s38, 1
      %p229 = por %p227, %p228
      %p231 = scmp.ne.s32.totalorder %s216, %s230
      %p232 = scmp.eq.s32.totalorder %s38, 0
      %p233 = por %p231, %p232
      %s235 = sadd.s32 %s234, 1
      %p238 = scmp.eq.s32.totalorder %s32, 1
      %p239 = scmp.ne.s32.totalorder %s234, %s236
      %p240 = scmp.eq.s32.totalorder %s32, 0
      %p241 = por %p239, %p240
      %p242 = scmp.ne.s32.totalorder %s234, %s236
      %p243 = scmp.eq.s32.totalorder %s37, 1
      %p244 = por %p242, %p243
      %p245 = scmp.ne.s32.totalorder %s236, %s237
      %p246 = scmp.eq.s32.totalorder %s37, 0
      %p247 = por %p245, %p246
      %p248 = scmp.ne.s32.totalorder %s236, %s237
      %p249 = scmp.eq.s32.totalorder %s38, 1
      %p250 = por %p248, %p249
      %p252 = scmp.ne.s32.totalorder %s237, %s251
      %p253 = scmp.eq.s32.totalorder %s38, 0
      %p254 = por %p252, %p253
      %s256 = sadd.s32 %s255, 1
      %p259 = scmp.eq.s32.totalorder %s32, 1
      %p260 = scmp.ne.s32.totalorder %s255, %s257
      %p261 = scmp.eq.s32.totalorder %s32, 0
      %p262 = por %p260, %p261
      %p263 = scmp.ne.s32.totalorder %s255, %s257
      %p264 = scmp.eq.s32.totalorder %s37, 1
      %p265 = por %p263, %p264
      %p266 = scmp.ne.s32.totalorder %s257, %s258
      %p267 = scmp.eq.s32.totalorder %s37, 0
      %p268 = por %p266, %p267
      %p269 = scmp.ne.s32.totalorder %s257, %s258
      %p270 = scmp.eq.s32.totalorder %s38, 1
      %p271 = por %p269, %p270
      %p273 = scmp.ne.s32.totalorder %s258, %s272
      %p274 = scmp.eq.s32.totalorder %s38, 0
      %p275 = por %p273, %p274
      %s277 = sadd.s32 %s276, 1
      %p280 = scmp.eq.s32.totalorder %s32, 1
      %p281 = scmp.ne.s32.totalorder %s276, %s278
      %p282 = scmp.eq.s32.totalorder %s32, 0
      %p283 = por %p281, %p282
      %p284 = scmp.ne.s32.totalorder %s276, %s278
      %p285 = scmp.eq.s32.totalorder %s37, 1
      %p286 = por %p284, %p285
      %p287 = scmp.ne.s32.totalorder %s278, %s279
      %p288 = scmp.eq.s32.totalorder %s37, 0
      %p289 = por %p287, %p288
      %p290 = scmp.ne.s32.totalorder %s278, %s279
      %p291 = scmp.eq.s32.totalorder %s38, 1
      %p292 = por %p290, %p291
      %p294 = scmp.ne.s32.totalorder %s279, %s293
      %p295 = scmp.eq.s32.totalorder %s38, 0
      %p296 = por %p294, %p295
      %s298 = sadd.s32 %s297, 1
      %p301 = scmp.eq.s32.totalorder %s32, 1
      %p302 = scmp.ne.s32.totalorder %s297, %s299
      %p303 = scmp.eq.s32.totalorder %s32, 0
      %p304 = por %p302, %p303
      %p305 = scmp.ne.s32.totalorder %s297, %s299
      %p306 = scmp.eq.s32.totalorder %s37, 1
      %p307 = por %p305, %p306
      %p308 = scmp.ne.s32.totalorder %s299, %s300
      %p309 = scmp.eq.s32.totalorder %s37, 0
      %p310 = por %p308, %p309
      %p311 = scmp.ne.s32.totalorder %s299, %s300
      %p312 = scmp.eq.s32.totalorder %s38, 1
      %p313 = por %p311, %p312
      %p315 = scmp.ne.s32.totalorder %s300, %s314
      %p316 = scmp.eq.s32.totalorder %s38, 0
      %p317 = por %p315, %p316
      %s319 = sadd.s32 %s318, 1
      %p322 = scmp.eq.s32.totalorder %s32, 1
      %p323 = scmp.ne.s32.totalorder %s318, %s320
      %p324 = scmp.eq.s32.totalorder %s32, 0
      %p325 = por %p323, %p324
      %p326 = scmp.ne.s32.totalorder %s318, %s320
      %p327 = scmp.eq.s32.totalorder %s37, 1
      %p328 = por %p326, %p327
      %p329 = scmp.ne.s32.totalorder %s320, %s321
      %p330 = scmp.eq.s32.totalorder %s37, 0
      %p331 = por %p329, %p330
      %p332 = scmp.ne.s32.totalorder %s320, %s321
      %p333 = scmp.eq.s32.totalorder %s38, 1
      %p334 = por %p332, %p333
      %p336 = scmp.ne.s32.totalorder %s321, %s335
      %p337 = scmp.eq.s32.totalorder %s38, 0
      %p338 = por %p336, %p337
      %s340 = sadd.s32 %s339, 1
      %p343 = scmp.eq.s32.totalorder %s32, 1
      %p344 = scmp.ne.s32.totalorder %s339, %s341
      %p345 = scmp.eq.s32.totalorder %s32, 0
      %p346 = por %p344, %p345
      %p347 = scmp.ne.s32.totalorder %s339, %s341
      %p348 = scmp.eq.s32.totalorder %s37, 1
      %p349 = por %p347, %p348
      %p350 = scmp.ne.s32.totalorder %s341, %s342
      %p351 = scmp.eq.s32.totalorder %s37, 0
      %p352 = por %p350, %p351
      %p353 = scmp.ne.s32.totalorder %s341, %s342
      %p354 = scmp.eq.s32.totalorder %s38, 1
      %p355 = por %p353, %p354
      %p357 = scmp.ne.s32.totalorder %s342, %s356
      %p358 = scmp.eq.s32.totalorder %s38, 0
      %p359 = por %p357, %p358
      %s361 = sadd.s32 %s360, 1
      %p364 = scmp.eq.s32.totalorder %s32, 1
      %p365 = scmp.ne.s32.totalorder %s360, %s362
      %p366 = scmp.eq.s32.totalorder %s32, 0
      %p367 = por %p365, %p366
      %p368 = scmp.ne.s32.totalorder %s360, %s362
      %p369 = scmp.eq.s32.totalorder %s37, 1
      %p370 = por %p368, %p369
      %p371 = scmp.ne.s32.totalorder %s362, %s363
      %p372 = scmp.eq.s32.totalorder %s37, 0
      %p373 = por %p371, %p372
      %p374 = scmp.ne.s32.totalorder %s362, %s363
      %p375 = scmp.eq.s32.totalorder %s38, 1
      %p376 = por %p374, %p375
      %p378 = scmp.ne.s32.totalorder %s363, %s377
      %p379 = scmp.eq.s32.totalorder %s38, 0
      %p380 = por %p378, %p379
      %s382 = sadd.s32 %s381, 1
      %p385 = scmp.eq.s32.totalorder %s32, 1
      %p386 = scmp.ne.s32.totalorder %s381, %s383
      %p387 = scmp.eq.s32.totalorder %s32, 0
      %p388 = por %p386, %p387
      %p389 = scmp.ne.s32.totalorder %s381, %s383
      %p390 = scmp.eq.s32.totalorder %s37, 1
      %p391 = por %p389, %p390
      %p392 = scmp.ne.s32.totalorder %s383, %s384
      %p393 = scmp.eq.s32.totalorder %s37, 0
      %p394 = por %p392, %p393
      %p395 = scmp.ne.s32.totalorder %s383, %s384
      %p396 = scmp.eq.s32.totalorder %s38, 1
      %p397 = por %p395, %p396
      %p399 = scmp.ne.s32.totalorder %s384, %s398
      %p400 = scmp.eq.s32.totalorder %s38, 0
      %p401 = por %p399, %p400
      %s402 = ssub.s32 %s32, %s39
      %p403 = scmp.eq.s32.totalorder %s402, 0
      %s405 = sadd.s32 %s404, 1
      %s406 = scalar_select %p403, %s404, %s405
      %p409 = pneg %p403
      %p410 = scmp.eq.s32.totalorder %s32, 1
      %p411 = por %p409, %p410
      %p412 = scmp.ne.s32.totalorder %s404, %s407
      %p413 = scmp.eq.s32.totalorder %s32, 0
      %p414 = por %p412, %p413
      %p415 = scmp.ne.s32.totalorder %s404, %s407
      %p416 = scmp.eq.s32.totalorder %s37, 1
      %p417 = por %p415, %p416
      %p418 = scmp.ne.s32.totalorder %s407, %s408
      %p419 = scmp.eq.s32.totalorder %s37, 0
      %p420 = por %p418, %p419
      %p421 = scmp.ne.s32.totalorder %s407, %s408
      %p422 = scmp.eq.s32.totalorder %s38, 1
      %p423 = por %p421, %p422
      %p425 = scmp.ne.s32.totalorder %s408, %s424
      %p426 = scmp.eq.s32.totalorder %s38, 0
      %p427 = por %p425, %p426
      %p428 = scmp.le.s32.totalorder 1, %s32
      %p429 = scmp.lt.s32.totalorder %s32, 3
      %p430 = pnand %p428, %p429
      %p431 = pneg %p430
      // Predicated region
      $region9: #{fwd.1} parent=5 // pred_check
        _
      $region10: #{fwd.1} parent=5 // pred_check_branch
        %433 = sbr.rel (%p430) target = $region12
      $region11: #{fwd.1} parent=5 // pred_region
        %s434 = ssub.s32 %s32, 1
        // Predicated region
        $region13: #{fwd.1} parent=11 // pred_check
          %p435 = pneg %p79
        $region14: #{fwd.1} parent=11 // pred_check_branch
          %437 = sbr.rel (%p435) target = $region16
        $region15: #{fwd.1} parent=11 // pred_region
          %439 = vsyncadd [#allocation3], 0
          %s440 = sshll.u32 %s1, 4
          %s441 = int_to_ptr.hbm [resolvable:$true] %s440
          %s442 = sshll.u32 [#allocation2], 4
          %s443 = int_to_ptr.vmem [resolvable:$true] %s442
          %448 = dma.hbm_to_vmem [thread:$0]  %s441, 512, %s443, [#allocation3], 128, 128, 8
        $region16: #{fwd.1} parent=11 // pred_fallthru
          _
        // Predicated region
        $region17: #{fwd.1} parent=11 // pred_check
          %p449 = pneg %p100
        $region18: #{fwd.1} parent=11 // pred_check_branch
          %451 = sbr.rel (%p449) target = $region20
        $region19: #{fwd.1} parent=11 // pred_region
          _
        $region20: #{fwd.1} parent=11 // pred_fallthru
          _
        // Predicated region
        $region21: #{fwd.1} parent=11 // pred_check
          %p452 = pneg %p121
        $region22: #{fwd.1} parent=11 // pred_check_branch
          %454 = sbr.rel (%p452) target = $region24
        $region23: #{fwd.1} parent=11 // pred_region
          %456 = vsyncadd [#allocation6], 0
          %s458 = sshll.u32 %s3, 4
          %s459 = int_to_ptr.hbm [resolvable:$true] %s458
          %s460 = sshll.u32 [#allocation5], 4
          %s461 = int_to_ptr.vmem [resolvable:$true] %s460
          %463 = dma.hbm_to_vmem [thread:$0]  %s459, 32, %s461, [#allocation6]
        $region24: #{fwd.1} parent=11 // pred_fallthru
          _
        // Predicated region
        $region25: #{fwd.1} parent=11 // pred_check
          %p464 = pneg %p142
        $region26: #{fwd.1} parent=11 // pred_check_branch
          %466 = sbr.rel (%p464) target = $region28
        $region27: #{fwd.1} parent=11 // pred_region
          _
        $region28: #{fwd.1} parent=11 // pred_fallthru
          _
        // Predicated region
        $region29: #{fwd.1} parent=11 // pred_check
          %p467 = pneg %p163
        $region30: #{fwd.1} parent=11 // pred_check_branch
          %469 = sbr.rel (%p467) target = $region32
        $region31: #{fwd.1} parent=11 // pred_region
          _
        $region32: #{fwd.1} parent=11 // pred_fallthru
          _
        // Predicated region
        $region33: #{fwd.1} parent=11 // pred_check
          %p470 = pneg %p184
        $region34: #{fwd.1} parent=11 // pred_check_branch
          %472 = sbr.rel (%p470) target = $region36
        $region35: #{fwd.1} parent=11 // pred_region
          %474 = vsyncadd [#allocation6], 0
          %s475 = sshll.u32 %s6, 4
          %s476 = int_to_ptr.hbm [resolvable:$true] %s475
          %s477 = sshll.u32 [#allocation7], 4
          %s478 = int_to_ptr.vmem [resolvable:$true] %s477
          %483 = dma.hbm_to_vmem [thread:$0]  %s476, 512, %s478, [#allocation6], 64, 64, 4
        $region36: #{fwd.1} parent=11 // pred_fallthru
          _
        // Predicated region
        $region37: #{fwd.1} parent=11 // pred_check
          %p484 = pneg %p205
        $region38: #{fwd.1} parent=11 // pred_check_branch
          %486 = sbr.rel (%p484) target = $region40
        $region39: #{fwd.1} parent=11 // pred_region
          %488 = vsyncadd [#allocation9], 0
          %s489 = sshll.u32 %s7, 4
          %s490 = int_to_ptr.hbm [resolvable:$true] %s489
          %s491 = sshll.u32 [#allocation8], 4
          %s492 = int_to_ptr.vmem [resolvable:$true] %s491
          %497 = dma.hbm_to_vmem [thread:$0]  %s490, 512, %s492, [#allocation9], 64, 64, 4
        $region40: #{fwd.1} parent=11 // pred_fallthru
          _
        // Predicated region
        $region41: #{fwd.1} parent=11 // pred_check
          %p498 = pneg %p226
        $region42: #{fwd.1} parent=11 // pred_check_branch
          %500 = sbr.rel (%p498) target = $region44
        $region43: #{fwd.1} parent=11 // pred_region
          %502 = vsyncadd [#allocation9], 0
          %s503 = sshll.u32 %s8, 4
          %s504 = int_to_ptr.hbm [resolvable:$true] %s503
          %s505 = sshll.u32 [#allocation10], 4
          %s506 = int_to_ptr.vmem [resolvable:$true] %s505
          %511 = dma.hbm_to_vmem [thread:$0]  %s504, 8192, %s506, [#allocation9], 512, 512, 32
        $region44: #{fwd.1} parent=11 // pred_fallthru
          _
        // Predicated region
        $region45: #{fwd.1} parent=11 // pred_check
          %p512 = pneg %p247
        $region46: #{fwd.1} parent=11 // pred_check_branch
          %514 = sbr.rel (%p512) target = $region48
        $region47: #{fwd.1} parent=11 // pred_region
          %516 = vsyncadd [#allocation12], 0
          %s517 = sshll.u32 %s9, 4
          %s518 = int_to_ptr.hbm [resolvable:$true] %s517
          %s519 = sshll.u32 [#allocation11], 4
          %s520 = int_to_ptr.vmem [resolvable:$true] %s519
          %525 = dma.hbm_to_vmem [thread:$0]  %s518, 4096, %s520, [#allocation12], 64, 64, 4
        $region48: #{fwd.1} parent=11 // pred_fallthru
          _
        // Predicated region
        $region49: #{fwd.1} parent=11 // pred_check
          %p526 = pneg %p268
        $region50: #{fwd.1} parent=11 // pred_check_branch
          %528 = sbr.rel (%p526) target = $region52
        $region51: #{fwd.1} parent=11 // pred_region
          _
        $region52: #{fwd.1} parent=11 // pred_fallthru
          _
        // Predicated region
        $region53: #{fwd.1} parent=11 // pred_check
          %p529 = pneg %p289
        $region54: #{fwd.1} parent=11 // pred_check_branch
          %531 = sbr.rel (%p529) target = $region56
        $region55: #{fwd.1} parent=11 // pred_region
          %533 = vsyncadd [#allocation12], 0
          %s535 = sshll.u32 %s11, 4
          %s536 = int_to_ptr.hbm [resolvable:$true] %s535
          %s537 = sshll.u32 [#allocation13], 4
          %s538 = int_to_ptr.vmem [resolvable:$true] %s537
          %540 = dma.hbm_to_vmem [thread:$0]  %s536, 128, %s538, [#allocation12]
        $region56: #{fwd.1} parent=11 // pred_fallthru
          _
        // Predicated region
        $region57: #{fwd.1} parent=11 // pred_check
          %p541 = pneg %p310
        $region58: #{fwd.1} parent=11 // pred_check_branch
          %543 = sbr.rel (%p541) target = $region60
        $region59: #{fwd.1} parent=11 // pred_region
          _
        $region60: #{fwd.1} parent=11 // pred_fallthru
          _
        // Predicated region
        $region61: #{fwd.1} parent=11 // pred_check
          %p544 = pneg %p331
        $region62: #{fwd.1} parent=11 // pred_check_branch
          %546 = sbr.rel (%p544) target = $region64
        $region63: #{fwd.1} parent=11 // pred_region
          %548 = vsyncadd [#allocation15], 0
          %s549 = sshll.u32 %s13, 4
          %s550 = int_to_ptr.hbm [resolvable:$true] %s549
          %s551 = sshll.u32 [#allocation14], 4
          %s552 = int_to_ptr.vmem [resolvable:$true] %s551
          %557 = dma.hbm_to_vmem [thread:$0]  %s550, 2048, %s552, [#allocation15], 128, 128, 8
        $region64: #{fwd.1} parent=11 // pred_fallthru
          _
        // Predicated region
        $region65: #{fwd.1} parent=11 // pred_check
          %p558 = pneg %p352
        $region66: #{fwd.1} parent=11 // pred_check_branch
          %560 = sbr.rel (%p558) target = $region68
        $region67: #{fwd.1} parent=11 // pred_region
          %562 = vsyncadd [#allocation15], 0
          %s563 = sshll.u32 %s14, 4
          %s564 = int_to_ptr.hbm [resolvable:$true] %s563
          %s565 = sshll.u32 [#allocation16], 4
          %s566 = int_to_ptr.vmem [resolvable:$true] %s565
          %571 = dma.hbm_to_vmem [thread:$0]  %s564, 1024, %s566, [#allocation15], 64, 64, 4
        $region68: #{fwd.1} parent=11 // pred_fallthru
          _
        // Predicated region
        $region69: #{fwd.1} parent=11 // pred_check
          %p572 = pneg %p373
        $region70: #{fwd.1} parent=11 // pred_check_branch
          %574 = sbr.rel (%p572) target = $region72
        $region71: #{fwd.1} parent=11 // pred_region
          %576 = vsyncadd [#allocation18], 0
          %s577 = sshll.u32 %s15, 4
          %s578 = int_to_ptr.hbm [resolvable:$true] %s577
          %s579 = sshll.u32 [#allocation17], 4
          %s580 = int_to_ptr.vmem [resolvable:$true] %s579
          %585 = dma.hbm_to_vmem [thread:$0]  %s578, 8192, %s580, [#allocation18], 512, 512, 32
        $region72: #{fwd.1} parent=11 // pred_fallthru
          _
        // Predicated region
        $region73: #{fwd.1} parent=11 // pred_check
          %p586 = pneg %p394
        $region74: #{fwd.1} parent=11 // pred_check_branch
          %588 = sbr.rel (%p586) target = $region76
        $region75: #{fwd.1} parent=11 // pred_region
          %590 = vsyncadd [#allocation18], 0
          %s591 = sshll.u32 %s16, 4
          %s592 = int_to_ptr.hbm [resolvable:$true] %s591
          %s593 = sshll.u32 [#allocation19], 4
          %s594 = int_to_ptr.vmem [resolvable:$true] %s593
          %599 = dma.hbm_to_vmem [thread:$0]  %s592, 4096, %s594, [#allocation18], 64, 64, 4
        $region76: #{fwd.1} parent=11 // pred_fallthru
          _
      $region12: #{fwd.1} parent=5 // pred_fallthru
        _
      %p600 = scmp.lt.s32.totalorder %s32, 2
      // Predicated region
      $region77: #{fwd.1} parent=5 // pred_check
        %p601 = pneg %p600
      $region78: #{fwd.1} parent=5 // pred_check_branch
        %603 = sbr.rel (%p601) target = $region80
      $region79: #{fwd.1} parent=5 // pred_region
        // Predicated region
        $region81: #{fwd.1} parent=79 // pred_check
          %p604 = pneg %p52
        $region82: #{fwd.1} parent=79 // pred_check_branch
          %606 = sbr.rel (%p604) target = $region84
        $region83: #{fwd.1} parent=79 // pred_region
          %p607 = scmp.lt.s32.totalorder %s32, 1
          %s608 = scalar_select %p607, %s32, 1
          %s609 = smul.addr %s608, 2
          %s610 = smul.addr %s609, 8
          %s611 = scalar_lea.vmem %s0, %s610
        $region84: #{fwd.1} parent=79 // pred_fallthru
          _
      $region80: #{fwd.1} parent=5 // pred_fallthru
        _
      %p612 = scmp.le.s32.totalorder 1, %s32
      %p613 = scmp.lt.s32.totalorder %s32, 3
      %p614 = pnand %p612, %p613
      %p615 = pneg %p614
      // Predicated region
      $region85: #{fwd.1} parent=5 // pred_check
        _
      $region86: #{fwd.1} parent=5 // pred_check_branch
        %617 = sbr.rel (%p614) target = $region88
      $region87: #{fwd.1} parent=5 // pred_region
        %s618 = ssub.s32 %s32, 1
        // Predicated region
        $region89: #{fwd.1} parent=87 // pred_check
          %p619 = pneg %p79
        $region90: #{fwd.1} parent=87 // pred_check_branch
          %621 = sbr.rel (%p619) target = $region92
        $region91: #{fwd.1} parent=87 // pred_region
          %623 = dma.done [#allocation3], 512
        $region92: #{fwd.1} parent=87 // pred_fallthru
          _
        // Predicated region
        $region93: #{fwd.1} parent=87 // pred_check
          %p624 = pneg %p121
        $region94: #{fwd.1} parent=87 // pred_check_branch
          %626 = sbr.rel (%p624) target = $region96
        $region95: #{fwd.1} parent=87 // pred_region
          %628 = dma.done [#allocation6], 32
        $region96: #{fwd.1} parent=87 // pred_fallthru
          _
        // Predicated region
        $region97: #{fwd.1} parent=87 // pred_check
          %p629 = pneg %p184
        $region98: #{fwd.1} parent=87 // pred_check_branch
          %631 = sbr.rel (%p629) target = $region100
        $region99: #{fwd.1} parent=87 // pred_region
          %633 = dma.done [#allocation6], 512
        $region100: #{fwd.1} parent=87 // pred_fallthru
          _
        // Predicated region
        $region101: #{fwd.1} parent=87 // pred_check
          %p634 = pneg %p205
        $region102: #{fwd.1} parent=87 // pred_check_branch
          %636 = sbr.rel (%p634) target = $region104
        $region103: #{fwd.1} parent=87 // pred_region
          %638 = dma.done [#allocation9], 512
        $region104: #{fwd.1} parent=87 // pred_fallthru
          _
        // Predicated region
        $region105: #{fwd.1} parent=87 // pred_check
          %p639 = pneg %p226
        $region106: #{fwd.1} parent=87 // pred_check_branch
          %641 = sbr.rel (%p639) target = $region108
        $region107: #{fwd.1} parent=87 // pred_region
          %643 = dma.done [#allocation9], 8192
        $region108: #{fwd.1} parent=87 // pred_fallthru
          _
        // Predicated region
        $region109: #{fwd.1} parent=87 // pred_check
          %p644 = pneg %p247
        $region110: #{fwd.1} parent=87 // pred_check_branch
          %646 = sbr.rel (%p644) target = $region112
        $region111: #{fwd.1} parent=87 // pred_region
          %648 = dma.done [#allocation12], 4096
        $region112: #{fwd.1} parent=87 // pred_fallthru
          _
        // Predicated region
        $region113: #{fwd.1} parent=87 // pred_check
          %p649 = pneg %p289
        $region114: #{fwd.1} parent=87 // pred_check_branch
          %651 = sbr.rel (%p649) target = $region116
        $region115: #{fwd.1} parent=87 // pred_region
          %653 = dma.done [#allocation12], 128
        $region116: #{fwd.1} parent=87 // pred_fallthru
          _
        // Predicated region
        $region117: #{fwd.1} parent=87 // pred_check
          %p654 = pneg %p331
        $region118: #{fwd.1} parent=87 // pred_check_branch
          %656 = sbr.rel (%p654) target = $region120
        $region119: #{fwd.1} parent=87 // pred_region
          %658 = dma.done [#allocation15], 2048
        $region120: #{fwd.1} parent=87 // pred_fallthru
          _
        // Predicated region
        $region121: #{fwd.1} parent=87 // pred_check
          %p659 = pneg %p352
        $region122: #{fwd.1} parent=87 // pred_check_branch
          %661 = sbr.rel (%p659) target = $region124
        $region123: #{fwd.1} parent=87 // pred_region
          %663 = dma.done [#allocation15], 1024
        $region124: #{fwd.1} parent=87 // pred_fallthru
          _
        // Predicated region
        $region125: #{fwd.1} parent=87 // pred_check
          %p664 = pneg %p373
        $region126: #{fwd.1} parent=87 // pred_check_branch
          %666 = sbr.rel (%p664) target = $region128
        $region127: #{fwd.1} parent=87 // pred_region
          %668 = dma.done [#allocation18], 8192
        $region128: #{fwd.1} parent=87 // pred_fallthru
          _
        // Predicated region
        $region129: #{fwd.1} parent=87 // pred_check
          %p669 = pneg %p394
        $region130: #{fwd.1} parent=87 // pred_check_branch
          %671 = sbr.rel (%p669) target = $region132
        $region131: #{fwd.1} parent=87 // pred_region
          %673 = dma.done [#allocation18], 4096
        $region132: #{fwd.1} parent=87 // pred_fallthru
          _
        %p674 = scmp.lt.s32.totalorder %s37, 1
        %s675 = scalar_select %p674, %s37, 1
        %s676 = smul.addr %s675, 2
        %s677 = smul.addr %s676, 8
        %s678 = scalar_lea.vmem %s0, %s677
        %p679 = pneg %p58
        %p680 = pneg %p55
        %p681 = pneg %p79
        %p682 = pneg %p76
        %p683 = pneg %p100
        %p684 = pneg %p97
        %p685 = pneg %p121
        %p686 = pneg %p118
        %p687 = pneg %p142
        %p688 = pneg %p139
        %p689 = pneg %p163
        %p690 = pneg %p160
        %p691 = pneg %p184
        %p692 = pneg %p181
        %p693 = pneg %p205
        %p694 = pneg %p202
        %p695 = pneg %p226
        %p696 = pneg %p223
        %p697 = pneg %p247
        %p698 = pneg %p244
        %p699 = pneg %p268
        %p700 = pneg %p265
        %p701 = pneg %p289
        %p702 = pneg %p286
        %p703 = pneg %p310
        %p704 = pneg %p307
        %p705 = pneg %p331
        %p706 = pneg %p328
        %p707 = pneg %p352
        %p708 = pneg %p349
        %p709 = pneg %p373
        %p710 = pneg %p370
        %p711 = pneg %p394
        %p712 = pneg %p391
        %p713 = pneg %p420
        %p714 = pneg %p417
        %s715 = sand.u32 %s407, 1
        %s716 = scalar_lea.sflag [#allocation4], %s715
        %s717 = sand.u32 %s407, 1
        %s718 = smul.addr %s717, 32
        %s719 = scalar_lea.vmem [#allocation20], %s718
        %p720 = scmp.lt.s32.totalorder %s37, 1
        %s721 = scalar_select %p720, %s37, 1
        %s722 = smul.addr %s721, 2
        %s723 = smul.addr %s722, 8
        %s724 = scalar_lea.vmem %s0, %s723
        %v726 = vld [vmem:[#allocation2] sm:$0xff]
        %v727 = vld [vmem:[#allocation2 + $0x8] sm:$0xff]
        %v728 = vld [vmem:[#allocation2 + $0x10] sm:$0xff]
        %v729 = vld [vmem:[#allocation2 + $0x18] sm:$0xff]
        %v730 = vld [vmem:[%s724] sm:$0xff]
        %v731 = vld [vmem:[%s724 + $0x8] sm:$0xff]
        %v732 = vld [vmem:[%s2] sm:$0x3f]
        %v733 = vld [vmem:[#allocation5] sm:$0x3]
        %734 = vadd.xlane.f32.xlu0 %v726
        %v735 = vpop.xlane.xlu0 %734
        %736 = vadd.xlane.f32.xlu0 %v727
        %v737 = vpop.xlane.xlu0 %736
        %738 = vadd.xlane.f32.xlu0 %v728
        %v739 = vpop.xlane.xlu0 %738
        %740 = vadd.xlane.f32.xlu0 %v729
        %v741 = vpop.xlane.xlu0 %740
        %v742 = vrcp.pop 128.0
        %v743 = vmul.f32 128.0, %v742
        %v744 = vsub.f32 1.0, %v743
        %v745 = vmul.f32 %v742, %v744
        %v746 = vadd.f32 %v742, %v745
        %vm747 = vweird.f32 %v742
        %v748 = vsel %vm747, %v742, %v746
        %v749 = vmul.f32 %v735, %v748
        %v750 = vmul.f32 %v737, %v748
        %v751 = vmul.f32 %v739, %v748
        %v752 = vmul.f32 %v741, %v748
        %v753 = vsub.f32 %v726, %v749
        %v754 = vsub.f32 %v727, %v750
        %v755 = vsub.f32 %v728, %v751
        %v756 = vsub.f32 %v729, %v752
        %v757 = vmul.f32 %v753, %v753
        %v758 = vmul.f32 %v754, %v754
        %v759 = vmul.f32 %v755, %v755
        %v760 = vmul.f32 %v756, %v756
        %761 = vadd.xlane.f32.xlu0 %v757
        %v762 = vpop.xlane.xlu0 %761
        %763 = vadd.xlane.f32.xlu0 %v758
        %v764 = vpop.xlane.xlu0 %763
        %765 = vadd.xlane.f32.xlu0 %v759
        %v766 = vpop.xlane.xlu0 %765
        %767 = vadd.xlane.f32.xlu0 %v760
        %v768 = vpop.xlane.xlu0 %767
        %v769 = vmul.f32 %v762, %v748
        %v770 = vmul.f32 %v764, %v748
        %v771 = vmul.f32 %v766, %v748
        %v772 = vmul.f32 %v768, %v748
        %v773 = vadd.f32 %v769, 1e-05
        %v774 = vadd.f32 %v770, 1e-05
        %v775 = vadd.f32 %v771, 1e-05
        %v776 = vadd.f32 %v772, 1e-05
        %v777 = vrsqrt.pop %v773
        %v778 = vmul.f32 %v777, %v773
        %v779 = vmul.f32 %v778, %v777
        %v780 = vmul.f32 0.5, %v779
        %v781 = vsub.f32 1.5, %v780
        %v782 = vmul.f32 %v777, %v781
        %vm783 = vweird.f32 %v773
        %vm784 = vweird.f32 %v777
        %vm785 = vmor %vm783, %vm784
        %v786 = vsel %vm785, %v777, %v782
        %v787 = vrsqrt.pop %v774
        %v788 = vmul.f32 %v787, %v774
        %v789 = vmul.f32 %v788, %v787
        %v790 = vmul.f32 0.5, %v789
        %v791 = vsub.f32 1.5, %v790
        %v792 = vmul.f32 %v787, %v791
        %vm793 = vweird.f32 %v774
        %vm794 = vweird.f32 %v787
        %vm795 = vmor %vm793, %vm794
        %v796 = vsel %vm795, %v787, %v792
        %v797 = vrsqrt.pop %v775
        %v798 = vmul.f32 %v797, %v775
        %v799 = vmul.f32 %v798, %v797
        %v800 = vmul.f32 0.5, %v799
        %v801 = vsub.f32 1.5, %v800
        %v802 = vmul.f32 %v797, %v801
        %vm803 = vweird.f32 %v775
        %vm804 = vweird.f32 %v797
        %vm805 = vmor %vm803, %vm804
        %v806 = vsel %vm805, %v797, %v802
        %v807 = vrsqrt.pop %v776
        %v808 = vmul.f32 %v807, %v776
        %v809 = vmul.f32 %v808, %v807
        %v810 = vmul.f32 0.5, %v809
        %v811 = vsub.f32 1.5, %v810
        %v812 = vmul.f32 %v807, %v811
        %vm813 = vweird.f32 %v776
        %vm814 = vweird.f32 %v807
        %vm815 = vmor %vm813, %vm814
        %v816 = vsel %vm815, %v807, %v812
        %v817 = vmul.f32 %v753, %v786
        %v818 = vmul.f32 %v754, %v796
        %v819 = vmul.f32 %v755, %v806
        %v820 = vmul.f32 %v756, %v816
        %v821 = vperm.slane %v732, 0
        %v822 = vmul.f32 %v817, %v821
        %v823 = vmul.f32 %v818, %v821
        %v824 = vmul.f32 %v819, %v821
        %v825 = vmul.f32 %v820, %v821
        %v826 = vperm.slane %v732, 1
        %v827 = vadd.f32 %v822, %v826
        %v828 = vadd.f32 %v823, %v826
        %v829 = vadd.f32 %v824, %v826
        %v830 = vadd.f32 %v825, %v826
        %vm831 = vcmask 523264
        %v832 = vsel %vm831, %v730, 0.0
        %833 = vadd.xlane.f32.xlu0 %v832
        %v834 = vpop.xlane.xlu0 %833
        %v835 = vsel %vm831, %v731, 0.0
        %836 = vadd.xlane.f32.xlu0 %v835
        %v837 = vpop.xlane.xlu0 %836
        %v838 = vrcp.pop 64.0
        %v839 = vmul.f32 64.0, %v838
        %v840 = vsub.f32 1.0, %v839
        %v841 = vmul.f32 %v838, %v840
        %v842 = vadd.f32 %v838, %v841
        %vm843 = vweird.f32 %v838
        %v844 = vsel %vm843, %v838, %v842
        %v845 = vmul.f32 %v834, %v844
        %v846 = vmul.f32 %v837, %v844
        %v847 = vsub.f32 %v730, %v845
        %v848 = vsub.f32 %v731, %v846
        %v849 = vmul.f32 %v847, %v847
        %v850 = vmul.f32 %v848, %v848
        %v851 = vsel %vm831, %v849, 0.0
        %852 = vadd.xlane.f32.xlu0 %v851
        %v853 = vpop.xlane.xlu0 %852
        %v854 = vsel %vm831, %v850, 0.0
        %855 = vadd.xlane.f32.xlu0 %v854
        %v856 = vpop.xlane.xlu0 %855
        %v857 = vmul.f32 %v853, %v844
        %v858 = vmul.f32 %v856, %v844
        %v859 = vadd.f32 %v857, 1e-05
        %v860 = vadd.f32 %v858, 1e-05
        %v861 = vrsqrt.pop %v859
        %v862 = vmul.f32 %v861, %v859
        %v863 = vmul.f32 %v862, %v861
        %v864 = vmul.f32 0.5, %v863
        %v865 = vsub.f32 1.5, %v864
        %v866 = vmul.f32 %v861, %v865
        %vm867 = vweird.f32 %v859
        %vm868 = vweird.f32 %v861
        %vm869 = vmor %vm867, %vm868
        %v870 = vsel %vm869, %v861, %v866
        %v871 = vrsqrt.pop %v860
        %v872 = vmul.f32 %v871, %v860
        %v873 = vmul.f32 %v872, %v871
        %v874 = vmul.f32 0.5, %v873
        %v875 = vsub.f32 1.5, %v874
        %v876 = vmul.f32 %v871, %v875
        %vm877 = vweird.f32 %v860
        %vm878 = vweird.f32 %v871
        %vm879 = vmor %vm877, %vm878
        %v880 = vsel %vm879, %v871, %v876
        %v881 = vmul.f32 %v847, %v870
        %v882 = vmul.f32 %v848, %v880
        %v883 = vperm.slane %v733, 0
        %v884 = vmul.f32 %v881, %v883
        %v885 = vmul.f32 %v882, %v883
        %v886 = vperm.slane %v733, 1
        %v887 = vadd.f32 %v884, %v886
        %v888 = vadd.f32 %v885, %v886
        %v889 = vld [vmem:[%s5] sm:$0xf]
        %v890 = vld [vmem:[%s5 + $0x4] sm:$0xf]
        %v891 = vld [vmem:[%s5 + $0x8] sm:$0xf]
        %v892 = vld [vmem:[%s5 + $0xc] sm:$0xf]
        %v893 = vld [vmem:[%s5 + $0x10] sm:$0xf]
        %v894 = vld [vmem:[%s5 + $0x14] sm:$0xf]
        %v895 = vld [vmem:[%s5 + $0x18] sm:$0xf]
        %v896 = vld [vmem:[%s5 + $0x1c] sm:$0xf]
        %v897 = vld [vmem:[%s5 + $0x20] sm:$0xf]
        %v898 = vld [vmem:[%s5 + $0x24] sm:$0xf]
        %v899 = vld [vmem:[%s5 + $0x28] sm:$0xf]
        %v900 = vld [vmem:[%s5 + $0x2c] sm:$0xf]
        %v901 = vld [vmem:[%s5 + $0x30] sm:$0xf]
        %v902 = vld [vmem:[%s5 + $0x34] sm:$0xf]
        %v903 = vld [vmem:[%s5 + $0x38] sm:$0xf]
        %v904 = vld [vmem:[%s5 + $0x3c] sm:$0xf]
        %v905 = vld [vmem:[#allocation7] sm:$0xf]
        %v906 = vld [vmem:[#allocation7 + $0x4] sm:$0xf]
        %v907 = vld [vmem:[#allocation7 + $0x8] sm:$0xf]
        %v908 = vld [vmem:[#allocation7 + $0xc] sm:$0xf]
        %v909 = vld [vmem:[#allocation7 + $0x10] sm:$0xf]
        %v910 = vld [vmem:[#allocation7 + $0x14] sm:$0xf]
        %v911 = vld [vmem:[#allocation7 + $0x18] sm:$0xf]
        %v912 = vld [vmem:[#allocation7 + $0x1c] sm:$0xf]
        %v913 = vld [vmem:[#allocation8] sm:$0xf]
        %v914 = vld [vmem:[#allocation8 + $0x4] sm:$0xf]
        %v915 = vld [vmem:[#allocation8 + $0x8] sm:$0xf]
        %v916 = vld [vmem:[#allocation8 + $0xc] sm:$0xf]
        %v917 = vld [vmem:[#allocation8 + $0x10] sm:$0xf]
        %v918 = vld [vmem:[#allocation8 + $0x14] sm:$0xf]
        %v919 = vld [vmem:[#allocation8 + $0x18] sm:$0xf]
        %v920 = vld [vmem:[#allocation8 + $0x1c] sm:$0xf]
        %v921 = vpack.c.bf16 %v828, %v827
        %v922 = vpack.c.bf16 %v830, %v829
        %v939 = vunpack.c.l.b16 %v889
        %v940 = vunpack.c.l.b16 %v890
        %v941 = vunpack.c.l.b16 %v891
        %v942 = vunpack.c.l.b16 %v892
        %v943 = vunpack.c.l.b16 %v893
        %v944 = vunpack.c.l.b16 %v894
        %v945 = vunpack.c.l.b16 %v895
        %v946 = vunpack.c.l.b16 %v896
        %v947 = vunpack.c.l.b16 %v897
        %v948 = vunpack.c.l.b16 %v898
        %v949 = vunpack.c.l.b16 %v899
        %v950 = vunpack.c.l.b16 %v900
        %v951 = vunpack.c.l.b16 %v901
        %v952 = vunpack.c.l.b16 %v902
        %v953 = vunpack.c.l.b16 %v903
        %v954 = vunpack.c.l.b16 %v904
        %v955 = vpack.c.b16 %v940, %v939
        %v956 = vpack.c.b16 %v942, %v941
        %v957 = vpack.c.b16 %v944, %v943
        %v958 = vpack.c.b16 %v946, %v945
        %v959 = vpack.c.b16 %v948, %v947
        %v960 = vpack.c.b16 %v950, %v949
        %v961 = vpack.c.b16 %v952, %v951
        %v962 = vpack.c.b16 %v954, %v953
        %971 = vmatpush.bf16.msra.mxu0 %v962
        %972 = vmatpush.bf16.msra.mxu0 %v961
        %973 = vmatpush.bf16.msra.mxu0 %v960
        %974 = vmatpush.bf16.msra.mxu0 %v959
        %975 = vmatpush.bf16.msra.mxu0 %v958
        %976 = vmatpush.bf16.msra.mxu0 %v957
        %977 = vmatpush.bf16.msra.mxu0 %v956
        %978 = vmatpush.bf16.msra.mxu0 %v955
        %979 = vmatmul.bf16.gmra.mxu0 %v921
        %v980 = vpop.f32.mrf.mxu0
        %v981 = vadd.f32 0.0, %v980
        %v982 = vpop.f32.mrf.mxu0
        %v983 = vadd.f32 0.0, %v982
        %984 = vmatmul.bf16.gmra.mxu0 %v922
        %v985 = vpop.f32.mrf.mxu0
        %v986 = vadd.f32 0.0, %v985
        %v987 = vpop.f32.mrf.mxu0
        %v988 = vadd.f32 0.0, %v987
        %989 = vdwg.mxu0
        %v990 = vpack.c.bf16 %v888, %v887
        %v999 = vunpack.c.l.b16 %v905
        %v1000 = vunpack.c.l.b16 %v906
        %v1001 = vunpack.c.l.b16 %v907
        %v1002 = vunpack.c.l.b16 %v908
        %v1003 = vunpack.c.l.b16 %v909
        %v1004 = vunpack.c.l.b16 %v910
        %v1005 = vunpack.c.l.b16 %v911
        %v1006 = vunpack.c.l.b16 %v912
        %v1007 = vpack.c.b16 %v1000, %v999
        %v1008 = vpack.c.b16 %v1002, %v1001
        %v1009 = vpack.c.b16 %v1004, %v1003
        %v1010 = vpack.c.b16 %v1006, %v1005
        %v1016 = vsel %vm831, %v990, 0
        %1018 = vmatpush.bf16.msra.mxu0 0
        %1019 = vmatpush.bf16.msra.mxu0 0
        %1020 = vmatpush.bf16.msra.mxu0 0
        %1021 = vmatpush.bf16.msra.mxu0 0
        %1022 = vmatpush.bf16.msra.mxu0 %v1010
        %1023 = vmatpush.bf16.msra.mxu0 %v1009
        %1024 = vmatpush.bf16.msra.mxu0 %v1008
        %1025 = vmatpush.bf16.msra.mxu0 %v1007
        %1026 = vmatmul.bf16.gmra.mxu0 %v1016
        %v1027 = vpop.f32.mrf.mxu0
        %v1028 = vadd.f32 0.0, %v1027
        %v1029 = vpop.f32.mrf.mxu0
        %v1030 = vadd.f32 0.0, %v1029
        %1031 = vdwg.mxu0
        %v1032 = vpack.c.bf16 %v983, %v981
        %v1033 = vpack.c.bf16 %v988, %v986
        %v1034 = vpack.c.bf16 %v1030, %v1028
        %v1036 = vsel %vm831, %v1032, 0
        %v1039 = vsel %vm831, %v1033, 0
        %v1042 = vsel %vm831, %v1034, 0
        %1044 = vmatpush.bf16.xpose.msra.mxu0 0
        %1045 = vmatpush.bf16.xpose.msra.mxu0 0
        %1046 = vmatpush.bf16.xpose.msra.mxu0 0
        %1047 = vmatpush.bf16.xpose.msra.mxu0 0
        %1048 = vmatpush.bf16.xpose.msra.mxu0 0
        %1049 = vmatpush.bf16.xpose.msra.mxu0 0
        %1050 = vmatpush.bf16.xpose.msra.mxu0 0
        %1051 = vmatpush.bf16.xpose.msra.mxu0 %v1042
        %1052 = vmatmul.bf16.gmra.mxu0 %v1036
        %v1053 = vpop.f32.mrf.mxu0
        %v1054 = vadd.f32 0.0, %v1053
        %v1055 = vpop.f32.mrf.mxu0
        %v1056 = vadd.f32 0.0, %v1055
        %1057 = vmatmul.bf16.gmra.mxu0 %v1039
        %v1058 = vpop.f32.mrf.mxu0
        %v1059 = vadd.f32 0.0, %v1058
        %v1060 = vpop.f32.mrf.mxu0
        %v1061 = vadd.f32 0.0, %v1060
        %1062 = vdwg.mxu0
        %v1063 = vmul.f32 %v1054, 0.125
        %v1064 = vmul.f32 %v1056, 0.125
        %v1065 = vmul.f32 %v1059, 0.125
        %v1066 = vmul.f32 %v1061, 0.125
        %vm1067 = vcmask 130048
        %v1068 = vsel %vm1067, %v1063, -inf
        %1069 = vmax.xlane.f32.xlu0 %v1068
        %v1070 = vpop.xlane.xlu0 %1069
        %v1071 = vsel %vm1067, %v1064, -inf
        %1072 = vmax.xlane.f32.xlu0 %v1071
        %v1073 = vpop.xlane.xlu0 %1072
        %v1074 = vsel %vm1067, %v1065, -inf
        %1075 = vmax.xlane.f32.xlu0 %v1074
        %v1076 = vpop.xlane.xlu0 %1075
        %v1077 = vsel %vm1067, %v1066, -inf
        %1078 = vmax.xlane.f32.xlu0 %v1077
        %v1079 = vpop.xlane.xlu0 %1078
        %v1080 = vsub.f32 %v1063, %v1070
        %v1081 = vsub.f32 %v1064, %v1073
        %v1082 = vsub.f32 %v1065, %v1076
        %v1083 = vsub.f32 %v1066, %v1079
        %v1084 = vmul.f32 %v1080, 1.442695
        %v1085 = vpow.pop %v1084
        %v1086 = vmul.f32 %v1081, 1.442695
        %v1087 = vpow.pop %v1086
        %v1088 = vmul.f32 %v1082, 1.442695
        %v1089 = vpow.pop %v1088
        %v1090 = vmul.f32 %v1083, 1.442695
        %v1091 = vpow.pop %v1090
        %v1092 = vsel %vm1067, %v1085, 0.0
        %1093 = vadd.xlane.f32.xlu0 %v1092
        %v1094 = vpop.xlane.xlu0 %1093
        %v1095 = vsel %vm1067, %v1087, 0.0
        %1096 = vadd.xlane.f32.xlu0 %v1095
        %v1097 = vpop.xlane.xlu0 %1096
        %v1098 = vsel %vm1067, %v1089, 0.0
        %1099 = vadd.xlane.f32.xlu0 %v1098
        %v1100 = vpop.xlane.xlu0 %1099
        %v1101 = vsel %vm1067, %v1091, 0.0
        %1102 = vadd.xlane.f32.xlu0 %v1101
        %v1103 = vpop.xlane.xlu0 %1102
        %v1104 = vrcp.pop %v1094
        %v1105 = vrcp.pop %v1097
        %v1106 = vrcp.pop %v1100
        %v1107 = vrcp.pop %v1103
        %v1108 = vmul.f32 %v1085, %v1104
        %v1109 = vmul.f32 %v1087, %v1105
        %v1110 = vmul.f32 %v1089, %v1106
        %v1111 = vmul.f32 %v1091, %v1107
        %v1112 = vpack.c.bf16 %v1109, %v1108
        %v1113 = vpack.c.bf16 %v1111, %v1110
        %1115 = vrot.lane.b32.xlu0 %v1034, 64
        %v1116 = vpop.permute.xlu0 %1115
        %v1119 = vsel %vm1067, %v1112, 0
        %v1122 = vsel %vm1067, %v1113, 0
        %1124 = vmatpush.bf16.msra.mxu0 0
        %1125 = vmatpush.bf16.msra.mxu0 0
        %1126 = vmatpush.bf16.msra.mxu0 0
        %1127 = vmatpush.bf16.msra.mxu0 0
        %1128 = vmatpush.bf16.msra.mxu0 0
        %1129 = vmatpush.bf16.msra.mxu0 0
        %1130 = vmatpush.bf16.msra.mxu0 0
        %1131 = vmatpush.bf16.msra.mxu0 %v1116
        %1132 = vmatmul.bf16.gmra.mxu0 %v1119
        %v1133 = vpop.f32.mrf.mxu0
        %v1134 = vadd.f32 0.0, %v1133
        %v1135 = vpop.f32.mrf.mxu0
        %v1136 = vadd.f32 0.0, %v1135
        %1137 = vmatmul.bf16.gmra.mxu0 %v1122
        %v1138 = vpop.f32.mrf.mxu0
        %v1139 = vadd.f32 0.0, %v1138
        %v1140 = vpop.f32.mrf.mxu0
        %v1141 = vadd.f32 0.0, %v1140
        %1142 = vdwg.mxu0
        %v1143 = vpack.c.bf16 %v1136, %v1134
        %v1144 = vpack.c.bf16 %v1141, %v1139
        %v1145 = vperm.slane %v732, 2
        %v1154 = vunpack.c.l.b16 %v913
        %v1155 = vunpack.c.l.b16 %v914
        %v1156 = vunpack.c.l.b16 %v915
        %v1157 = vunpack.c.l.b16 %v916
        %v1158 = vunpack.c.l.b16 %v917
        %v1159 = vunpack.c.l.b16 %v918
        %v1160 = vunpack.c.l.b16 %v919
        %v1161 = vunpack.c.l.b16 %v920
        %v1162 = vpack.c.b16 %v1155, %v1154
        %v1163 = vpack.c.b16 %v1157, %v1156
        %v1164 = vpack.c.b16 %v1159, %v1158
        %v1165 = vpack.c.b16 %v1161, %v1160
        %v1171 = vsel %vm831, %v1143, 0
        %v1174 = vsel %vm831, %v1144, 0
        %1176 = vmatpush.bf16.msra.mxu0 0
        %1177 = vmatpush.bf16.msra.mxu0 0
        %1178 = vmatpush.bf16.msra.mxu0 0
        %1179 = vmatpush.bf16.msra.mxu0 0
        %1180 = vmatpush.bf16.msra.mxu0 %v1165
        %1181 = vmatpush.bf16.msra.mxu0 %v1164
        %1182 = vmatpush.bf16.msra.mxu0 %v1163
        %1183 = vmatpush.bf16.msra.mxu0 %v1162
        %1184 = vmatmul.bf16.gmra.mxu0 %v1171
        %v1185 = vpop.f32.mrf.mxu0
        %v1186 = vadd.f32 %v1145, %v1185
        %v1187 = vpop.f32.mrf.mxu0
        %v1188 = vadd.f32 %v1145, %v1187
        %1189 = vmatmul.bf16.gmra.mxu0 %v1174
        %v1190 = vpop.f32.mrf.mxu0
        %v1191 = vadd.f32 %v1145, %v1190
        %v1192 = vpop.f32.mrf.mxu0
        %v1193 = vadd.f32 %v1145, %v1192
        %1194 = vdwg.mxu0
        %v1195 = vadd.f32 %v726, %v1186
        %v1196 = vadd.f32 %v727, %v1188
        %v1197 = vadd.f32 %v728, %v1191
        %v1198 = vadd.f32 %v729, %v1193
        %1199 = vadd.xlane.f32.xlu0 %v1195
        %v1200 = vpop.xlane.xlu0 %1199
        %1201 = vadd.xlane.f32.xlu0 %v1196
        %v1202 = vpop.xlane.xlu0 %1201
        %1203 = vadd.xlane.f32.xlu0 %v1197
        %v1204 = vpop.xlane.xlu0 %1203
        %1205 = vadd.xlane.f32.xlu0 %v1198
        %v1206 = vpop.xlane.xlu0 %1205
        %v1207 = vmul.f32 %v1200, %v748
        %v1208 = vmul.f32 %v1202, %v748
        %v1209 = vmul.f32 %v1204, %v748
        %v1210 = vmul.f32 %v1206, %v748
        %v1211 = vsub.f32 %v1195, %v1207
        %v1212 = vsub.f32 %v1196, %v1208
        %v1213 = vsub.f32 %v1197, %v1209
        %v1214 = vsub.f32 %v1198, %v1210
        %v1215 = vmul.f32 %v1211, %v1211
        %v1216 = vmul.f32 %v1212, %v1212
        %v1217 = vmul.f32 %v1213, %v1213
        %v1218 = vmul.f32 %v1214, %v1214
        %1219 = vadd.xlane.f32.xlu0 %v1215
        %v1220 = vpop.xlane.xlu0 %1219
        %1221 = vadd.xlane.f32.xlu0 %v1216
        %v1222 = vpop.xlane.xlu0 %1221
        %1223 = vadd.xlane.f32.xlu0 %v1217
        %v1224 = vpop.xlane.xlu0 %1223
        %1225 = vadd.xlane.f32.xlu0 %v1218
        %v1226 = vpop.xlane.xlu0 %1225
        %v1227 = vmul.f32 %v1220, %v748
        %v1228 = vmul.f32 %v1222, %v748
        %v1229 = vmul.f32 %v1224, %v748
        %v1230 = vmul.f32 %v1226, %v748
        %v1231 = vadd.f32 %v1227, 1e-05
        %v1232 = vadd.f32 %v1228, 1e-05
        %v1233 = vadd.f32 %v1229, 1e-05
        %v1234 = vadd.f32 %v1230, 1e-05
        %v1235 = vrsqrt.pop %v1231
        %v1236 = vmul.f32 %v1235, %v1231
        %v1237 = vmul.f32 %v1236, %v1235
        %v1238 = vmul.f32 0.5, %v1237
        %v1239 = vsub.f32 1.5, %v1238
        %v1240 = vmul.f32 %v1235, %v1239
        %vm1241 = vweird.f32 %v1231
        %vm1242 = vweird.f32 %v1235
        %vm1243 = vmor %vm1241, %vm1242
        %v1244 = vsel %vm1243, %v1235, %v1240
        %v1245 = vrsqrt.pop %v1232
        %v1246 = vmul.f32 %v1245, %v1232
        %v1247 = vmul.f32 %v1246, %v1245
        %v1248 = vmul.f32 0.5, %v1247
        %v1249 = vsub.f32 1.5, %v1248
        %v1250 = vmul.f32 %v1245, %v1249
        %vm1251 = vweird.f32 %v1232
        %vm1252 = vweird.f32 %v1245
        %vm1253 = vmor %vm1251, %vm1252
        %v1254 = vsel %vm1253, %v1245, %v1250
        %v1255 = vrsqrt.pop %v1233
        %v1256 = vmul.f32 %v1255, %v1233
        %v1257 = vmul.f32 %v1256, %v1255
        %v1258 = vmul.f32 0.5, %v1257
        %v1259 = vsub.f32 1.5, %v1258
        %v1260 = vmul.f32 %v1255, %v1259
        %vm1261 = vweird.f32 %v1233
        %vm1262 = vweird.f32 %v1255
        %vm1263 = vmor %vm1261, %vm1262
        %v1264 = vsel %vm1263, %v1255, %v1260
        %v1265 = vrsqrt.pop %v1234
        %v1266 = vmul.f32 %v1265, %v1234
        %v1267 = vmul.f32 %v1266, %v1265
        %v1268 = vmul.f32 0.5, %v1267
        %v1269 = vsub.f32 1.5, %v1268
        %v1270 = vmul.f32 %v1265, %v1269
        %vm1271 = vweird.f32 %v1234
        %vm1272 = vweird.f32 %v1265
        %vm1273 = vmor %vm1271, %vm1272
        %v1274 = vsel %vm1273, %v1265, %v1270
        %v1275 = vmul.f32 %v1211, %v1244
        %v1276 = vmul.f32 %v1212, %v1254
        %v1277 = vmul.f32 %v1213, %v1264
        %v1278 = vmul.f32 %v1214, %v1274
        %v1279 = vperm.slane %v732, 3
        %v1280 = vmul.f32 %v1275, %v1279
        %v1281 = vmul.f32 %v1276, %v1279
        %v1282 = vmul.f32 %v1277, %v1279
        %v1283 = vmul.f32 %v1278, %v1279
        %v1284 = vperm.slane %v732, 4
        %v1285 = vadd.f32 %v1280, %v1284
        %v1286 = vadd.f32 %v1281, %v1284
        %v1287 = vadd.f32 %v1282, %v1284
        %v1288 = vadd.f32 %v1283, %v1284
        %v1289 = vld [vmem:[#allocation10] sm:$0xff]
        %v1290 = vld [vmem:[#allocation10 + $0x8] sm:$0xff]
        %v1291 = vld [vmem:[#allocation10 + $0x10] sm:$0xff]
        %v1292 = vld [vmem:[#allocation10 + $0x18] sm:$0xff]
        %v1293 = vld [vmem:[#allocation10 + $0x20] sm:$0xff]
        %v1294 = vld [vmem:[#allocation10 + $0x28] sm:$0xff]
        %v1295 = vld [vmem:[#allocation10 + $0x30] sm:$0xff]
        %v1296 = vld [vmem:[#allocation10 + $0x38] sm:$0xff]
        %v1297 = vld [vmem:[#allocation10 + $0x40] sm:$0xff]
        %v1298 = vld [vmem:[#allocation10 + $0x48] sm:$0xff]
        %v1299 = vld [vmem:[#allocation10 + $0x50] sm:$0xff]
        %v1300 = vld [vmem:[#allocation10 + $0x58] sm:$0xff]
        %v1301 = vld [vmem:[#allocation10 + $0x60] sm:$0xff]
        %v1302 = vld [vmem:[#allocation10 + $0x68] sm:$0xff]
        %v1303 = vld [vmem:[#allocation10 + $0x70] sm:$0xff]
        %v1304 = vld [vmem:[#allocation10 + $0x78] sm:$0xff]
        %v1305 = vld [vmem:[#allocation10 + $0x80] sm:$0xff]
        %v1306 = vld [vmem:[#allocation10 + $0x88] sm:$0xff]
        %v1307 = vld [vmem:[#allocation10 + $0x90] sm:$0xff]
        %v1308 = vld [vmem:[#allocation10 + $0x98] sm:$0xff]
        %v1309 = vld [vmem:[#allocation10 + $0xa0] sm:$0xff]
        %v1310 = vld [vmem:[#allocation10 + $0xa8] sm:$0xff]
        %v1311 = vld [vmem:[#allocation10 + $0xb0] sm:$0xff]
        %v1312 = vld [vmem:[#allocation10 + $0xb8] sm:$0xff]
        %v1313 = vld [vmem:[#allocation10 + $0xc0] sm:$0xff]
        %v1314 = vld [vmem:[#allocation10 + $0xc8] sm:$0xff]
        %v1315 = vld [vmem:[#allocation10 + $0xd0] sm:$0xff]
        %v1316 = vld [vmem:[#allocation10 + $0xd8] sm:$0xff]
        %v1317 = vld [vmem:[#allocation10 + $0xe0] sm:$0xff]
        %v1318 = vld [vmem:[#allocation10 + $0xe8] sm:$0xff]
        %v1319 = vld [vmem:[#allocation10 + $0xf0] sm:$0xff]
        %v1320 = vld [vmem:[#allocation10 + $0xf8] sm:$0xff]
        %v1321 = vld [vmem:[#allocation10 + $0x100] sm:$0xff]
        %v1322 = vld [vmem:[#allocation10 + $0x108] sm:$0xff]
        %v1323 = vld [vmem:[#allocation10 + $0x110] sm:$0xff]
        %v1324 = vld [vmem:[#allocation10 + $0x118] sm:$0xff]
        %v1325 = vld [vmem:[#allocation10 + $0x120] sm:$0xff]
        %v1326 = vld [vmem:[#allocation10 + $0x128] sm:$0xff]
        %v1327 = vld [vmem:[#allocation10 + $0x130] sm:$0xff]
        %v1328 = vld [vmem:[#allocation10 + $0x138] sm:$0xff]
        %v1329 = vld [vmem:[#allocation10 + $0x140] sm:$0xff]
        %v1330 = vld [vmem:[#allocation10 + $0x148] sm:$0xff]
        %v1331 = vld [vmem:[#allocation10 + $0x150] sm:$0xff]
        %v1332 = vld [vmem:[#allocation10 + $0x158] sm:$0xff]
        %v1333 = vld [vmem:[#allocation10 + $0x160] sm:$0xff]
        %v1334 = vld [vmem:[#allocation10 + $0x168] sm:$0xff]
        %v1335 = vld [vmem:[#allocation10 + $0x170] sm:$0xff]
        %v1336 = vld [vmem:[#allocation10 + $0x178] sm:$0xff]
        %v1337 = vld [vmem:[#allocation10 + $0x180] sm:$0xff]
        %v1338 = vld [vmem:[#allocation10 + $0x188] sm:$0xff]
        %v1339 = vld [vmem:[#allocation10 + $0x190] sm:$0xff]
        %v1340 = vld [vmem:[#allocation10 + $0x198] sm:$0xff]
        %v1341 = vld [vmem:[#allocation10 + $0x1a0] sm:$0xff]
        %v1342 = vld [vmem:[#allocation10 + $0x1a8] sm:$0xff]
        %v1343 = vld [vmem:[#allocation10 + $0x1b0] sm:$0xff]
        %v1344 = vld [vmem:[#allocation10 + $0x1b8] sm:$0xff]
        %v1345 = vld [vmem:[#allocation10 + $0x1c0] sm:$0xff]
        %v1346 = vld [vmem:[#allocation10 + $0x1c8] sm:$0xff]
        %v1347 = vld [vmem:[#allocation10 + $0x1d0] sm:$0xff]
        %v1348 = vld [vmem:[#allocation10 + $0x1d8] sm:$0xff]
        %v1349 = vld [vmem:[#allocation10 + $0x1e0] sm:$0xff]
        %v1350 = vld [vmem:[#allocation10 + $0x1e8] sm:$0xff]
        %v1351 = vld [vmem:[#allocation10 + $0x1f0] sm:$0xff]
        %v1352 = vld [vmem:[#allocation10 + $0x1f8] sm:$0xff]
        %v1353 = vld [vmem:[%s4] sm:$0xff]
        %v1354 = vld [vmem:[#allocation11] sm:$0xf]
        %v1355 = vld [vmem:[#allocation11 + $0x4] sm:$0xf]
        %v1356 = vld [vmem:[#allocation11 + $0x8] sm:$0xf]
        %v1357 = vld [vmem:[#allocation11 + $0xc] sm:$0xf]
        %v1358 = vld [vmem:[#allocation11 + $0x10] sm:$0xf]
        %v1359 = vld [vmem:[#allocation11 + $0x14] sm:$0xf]
        %v1360 = vld [vmem:[#allocation11 + $0x18] sm:$0xf]
        %v1361 = vld [vmem:[#allocation11 + $0x1c] sm:$0xf]
        %v1362 = vld [vmem:[#allocation11 + $0x20] sm:$0xf]
        %v1363 = vld [vmem:[#allocation11 + $0x24] sm:$0xf]
        %v1364 = vld [vmem:[#allocation11 + $0x28] sm:$0xf]
        %v1365 = vld [vmem:[#allocation11 + $0x2c] sm:$0xf]
        %v1366 = vld [vmem:[#allocation11 + $0x30] sm:$0xf]
        %v1367 = vld [vmem:[#allocation11 + $0x34] sm:$0xf]
        %v1368 = vld [vmem:[#allocation11 + $0x38] sm:$0xf]
        %v1369 = vld [vmem:[#allocation11 + $0x3c] sm:$0xf]
        %v1370 = vld [vmem:[#allocation11 + $0x40] sm:$0xf]
        %v1371 = vld [vmem:[#allocation11 + $0x44] sm:$0xf]
        %v1372 = vld [vmem:[#allocation11 + $0x48] sm:$0xf]
        %v1373 = vld [vmem:[#allocation11 + $0x4c] sm:$0xf]
        %v1374 = vld [vmem:[#allocation11 + $0x50] sm:$0xf]
        %v1375 = vld [vmem:[#allocation11 + $0x54] sm:$0xf]
        %v1376 = vld [vmem:[#allocation11 + $0x58] sm:$0xf]
        %v1377 = vld [vmem:[#allocation11 + $0x5c] sm:$0xf]
        %v1378 = vld [vmem:[#allocation11 + $0x60] sm:$0xf]
        %v1379 = vld [vmem:[#allocation11 + $0x64] sm:$0xf]
        %v1380 = vld [vmem:[#allocation11 + $0x68] sm:$0xf]
        %v1381 = vld [vmem:[#allocation11 + $0x6c] sm:$0xf]
        %v1382 = vld [vmem:[#allocation11 + $0x70] sm:$0xf]
        %v1383 = vld [vmem:[#allocation11 + $0x74] sm:$0xf]
        %v1384 = vld [vmem:[#allocation11 + $0x78] sm:$0xf]
        %v1385 = vld [vmem:[#allocation11 + $0x7c] sm:$0xf]
        %v1386 = vld [vmem:[#allocation11 + $0x80] sm:$0xf]
        %v1387 = vld [vmem:[#allocation11 + $0x84] sm:$0xf]
        %v1388 = vld [vmem:[#allocation11 + $0x88] sm:$0xf]
        %v1389 = vld [vmem:[#allocation11 + $0x8c] sm:$0xf]
        %v1390 = vld [vmem:[#allocation11 + $0x90] sm:$0xf]
        %v1391 = vld [vmem:[#allocation11 + $0x94] sm:$0xf]
        %v1392 = vld [vmem:[#allocation11 + $0x98] sm:$0xf]
        %v1393 = vld [vmem:[#allocation11 + $0x9c] sm:$0xf]
        %v1394 = vld [vmem:[#allocation11 + $0xa0] sm:$0xf]
        %v1395 = vld [vmem:[#allocation11 + $0xa4] sm:$0xf]
        %v1396 = vld [vmem:[#allocation11 + $0xa8] sm:$0xf]
        %v1397 = vld [vmem:[#allocation11 + $0xac] sm:$0xf]
        %v1398 = vld [vmem:[#allocation11 + $0xb0] sm:$0xf]
        %v1399 = vld [vmem:[#allocation11 + $0xb4] sm:$0xf]
        %v1400 = vld [vmem:[#allocation11 + $0xb8] sm:$0xf]
        %v1401 = vld [vmem:[#allocation11 + $0xbc] sm:$0xf]
        %v1402 = vld [vmem:[#allocation11 + $0xc0] sm:$0xf]
        %v1403 = vld [vmem:[#allocation11 + $0xc4] sm:$0xf]
        %v1404 = vld [vmem:[#allocation11 + $0xc8] sm:$0xf]
        %v1405 = vld [vmem:[#allocation11 + $0xcc] sm:$0xf]
        %v1406 = vld [vmem:[#allocation11 + $0xd0] sm:$0xf]
        %v1407 = vld [vmem:[#allocation11 + $0xd4] sm:$0xf]
        %v1408 = vld [vmem:[#allocation11 + $0xd8] sm:$0xf]
        %v1409 = vld [vmem:[#allocation11 + $0xdc] sm:$0xf]
        %v1410 = vld [vmem:[#allocation11 + $0xe0] sm:$0xf]
        %v1411 = vld [vmem:[#allocation11 + $0xe4] sm:$0xf]
        %v1412 = vld [vmem:[#allocation11 + $0xe8] sm:$0xf]
        %v1413 = vld [vmem:[#allocation11 + $0xec] sm:$0xf]
        %v1414 = vld [vmem:[#allocation11 + $0xf0] sm:$0xf]
        %v1415 = vld [vmem:[#allocation11 + $0xf4] sm:$0xf]
        %v1416 = vld [vmem:[#allocation11 + $0xf8] sm:$0xf]
        %v1417 = vld [vmem:[#allocation11 + $0xfc] sm:$0xf]
        %v1418 = vpack.c.bf16 %v1286, %v1285
        %v1419 = vpack.c.bf16 %v1288, %v1287
        %v1421 = vperm.slane %v1353, 0
        %v1422 = vperm.slane %v1353, 1
        %v1423 = vperm.slane %v1353, 2
        %v1424 = vperm.slane %v1353, 3
        %v1425 = vperm.slane %v1353, 4
        %v1426 = vperm.slane %v1353, 5
        %v1427 = vperm.slane %v1353, 6
        %v1428 = vperm.slane %v1353, 7
        %v1501 = vunpack.c.l.b16 %v1289
        %v1502 = vunpack.c.h.b16 %v1289
        %v1503 = vunpack.c.l.b16 %v1290
        %v1504 = vunpack.c.h.b16 %v1290
        %v1505 = vunpack.c.l.b16 %v1291
        %v1506 = vunpack.c.h.b16 %v1291
        %v1507 = vunpack.c.l.b16 %v1292
        %v1508 = vunpack.c.h.b16 %v1292
        %v1509 = vunpack.c.l.b16 %v1293
        %v1510 = vunpack.c.h.b16 %v1293
        %v1511 = vunpack.c.l.b16 %v1294
        %v1512 = vunpack.c.h.b16 %v1294
        %v1513 = vunpack.c.l.b16 %v1295
        %v1514 = vunpack.c.h.b16 %v1295
        %v1515 = vunpack.c.l.b16 %v1296
        %v1516 = vunpack.c.h.b16 %v1296
        %v1517 = vunpack.c.l.b16 %v1297
        %v1518 = vunpack.c.h.b16 %v1297
        %v1519 = vunpack.c.l.b16 %v1298
        %v1520 = vunpack.c.h.b16 %v1298
        %v1521 = vunpack.c.l.b16 %v1299
        %v1522 = vunpack.c.h.b16 %v1299
        %v1523 = vunpack.c.l.b16 %v1300
        %v1524 = vunpack.c.h.b16 %v1300
        %v1525 = vunpack.c.l.b16 %v1301
        %v1526 = vunpack.c.h.b16 %v1301
        %v1527 = vunpack.c.l.b16 %v1302
        %v1528 = vunpack.c.h.b16 %v1302
        %v1529 = vunpack.c.l.b16 %v1303
        %v1530 = vunpack.c.h.b16 %v1303
        %v1531 = vunpack.c.l.b16 %v1304
        %v1532 = vunpack.c.h.b16 %v1304
        %v1533 = vunpack.c.l.b16 %v1305
        %v1534 = vunpack.c.h.b16 %v1305
        %v1535 = vunpack.c.l.b16 %v1306
        %v1536 = vunpack.c.h.b16 %v1306
        %v1537 = vunpack.c.l.b16 %v1307
        %v1538 = vunpack.c.h.b16 %v1307
        %v1539 = vunpack.c.l.b16 %v1308
        %v1540 = vunpack.c.h.b16 %v1308
        %v1541 = vunpack.c.l.b16 %v1309
        %v1542 = vunpack.c.h.b16 %v1309
        %v1543 = vunpack.c.l.b16 %v1310
        %v1544 = vunpack.c.h.b16 %v1310
        %v1545 = vunpack.c.l.b16 %v1311
        %v1546 = vunpack.c.h.b16 %v1311
        %v1547 = vunpack.c.l.b16 %v1312
        %v1548 = vunpack.c.h.b16 %v1312
        %v1549 = vunpack.c.l.b16 %v1313
        %v1550 = vunpack.c.h.b16 %v1313
        %v1551 = vunpack.c.l.b16 %v1314
        %v1552 = vunpack.c.h.b16 %v1314
        %v1553 = vunpack.c.l.b16 %v1315
        %v1554 = vunpack.c.h.b16 %v1315
        %v1555 = vunpack.c.l.b16 %v1316
        %v1556 = vunpack.c.h.b16 %v1316
        %v1557 = vunpack.c.l.b16 %v1317
        %v1558 = vunpack.c.h.b16 %v1317
        %v1559 = vunpack.c.l.b16 %v1318
        %v1560 = vunpack.c.h.b16 %v1318
        %v1561 = vunpack.c.l.b16 %v1319
        %v1562 = vunpack.c.h.b16 %v1319
        %v1563 = vunpack.c.l.b16 %v1320
        %v1564 = vunpack.c.h.b16 %v1320
        %v1565 = vunpack.c.l.b16 %v1321
        %v1566 = vunpack.c.h.b16 %v1321
        %v1567 = vunpack.c.l.b16 %v1322
        %v1568 = vunpack.c.h.b16 %v1322
        %v1569 = vunpack.c.l.b16 %v1323
        %v1570 = vunpack.c.h.b16 %v1323
        %v1571 = vunpack.c.l.b16 %v1324
        %v1572 = vunpack.c.h.b16 %v1324
        %v1573 = vunpack.c.l.b16 %v1325
        %v1574 = vunpack.c.h.b16 %v1325
        %v1575 = vunpack.c.l.b16 %v1326
        %v1576 = vunpack.c.h.b16 %v1326
        %v1577 = vunpack.c.l.b16 %v1327
        %v1578 = vunpack.c.h.b16 %v1327
        %v1579 = vunpack.c.l.b16 %v1328
        %v1580 = vunpack.c.h.b16 %v1328
        %v1581 = vunpack.c.l.b16 %v1329
        %v1582 = vunpack.c.h.b16 %v1329
        %v1583 = vunpack.c.l.b16 %v1330
        %v1584 = vunpack.c.h.b16 %v1330
        %v1585 = vunpack.c.l.b16 %v1331
        %v1586 = vunpack.c.h.b16 %v1331
        %v1587 = vunpack.c.l.b16 %v1332
        %v1588 = vunpack.c.h.b16 %v1332
        %v1589 = vunpack.c.l.b16 %v1333
        %v1590 = vunpack.c.h.b16 %v1333
        %v1591 = vunpack.c.l.b16 %v1334
        %v1592 = vunpack.c.h.b16 %v1334
        %v1593 = vunpack.c.l.b16 %v1335
        %v1594 = vunpack.c.h.b16 %v1335
        %v1595 = vunpack.c.l.b16 %v1336
        %v1596 = vunpack.c.h.b16 %v1336
        %v1597 = vunpack.c.l.b16 %v1337
        %v1598 = vunpack.c.h.b16 %v1337
        %v1599 = vunpack.c.l.b16 %v1338
        %v1600 = vunpack.c.h.b16 %v1338
        %v1601 = vunpack.c.l.b16 %v1339
        %v1602 = vunpack.c.h.b16 %v1339
        %v1603 = vunpack.c.l.b16 %v1340
        %v1604 = vunpack.c.h.b16 %v1340
        %v1605 = vunpack.c.l.b16 %v1341
        %v1606 = vunpack.c.h.b16 %v1341
        %v1607 = vunpack.c.l.b16 %v1342
        %v1608 = vunpack.c.h.b16 %v1342
        %v1609 = vunpack.c.l.b16 %v1343
        %v1610 = vunpack.c.h.b16 %v1343
        %v1611 = vunpack.c.l.b16 %v1344
        %v1612 = vunpack.c.h.b16 %v1344
        %v1613 = vunpack.c.l.b16 %v1345
        %v1614 = vunpack.c.h.b16 %v1345
        %v1615 = vunpack.c.l.b16 %v1346
        %v1616 = vunpack.c.h.b16 %v1346
        %v1617 = vunpack.c.l.b16 %v1347
        %v1618 = vunpack.c.h.b16 %v1347
        %v1619 = vunpack.c.l.b16 %v1348
        %v1620 = vunpack.c.h.b16 %v1348
        %v1621 = vunpack.c.l.b16 %v1349
        %v1622 = vunpack.c.h.b16 %v1349
        %v1623 = vunpack.c.l.b16 %v1350
        %v1624 = vunpack.c.h.b16 %v1350
        %v1625 = vunpack.c.l.b16 %v1351
        %v1626 = vunpack.c.h.b16 %v1351
        %v1627 = vunpack.c.l.b16 %v1352
        %v1628 = vunpack.c.h.b16 %v1352
        %v1629 = vpack.c.b16 %v1509, %v1501
        %v1630 = vpack.c.b16 %v1510, %v1502
        %v1631 = vpack.c.b16 %v1511, %v1503
        %v1632 = vpack.c.b16 %v1512, %v1504
        %v1633 = vpack.c.b16 %v1513, %v1505
        %v1634 = vpack.c.b16 %v1514, %v1506
        %v1635 = vpack.c.b16 %v1515, %v1507
        %v1636 = vpack.c.b16 %v1516, %v1508
        %v1637 = vpack.c.b16 %v1525, %v1517
        %v1638 = vpack.c.b16 %v1526, %v1518
        %v1639 = vpack.c.b16 %v1527, %v1519
        %v1640 = vpack.c.b16 %v1528, %v1520
        %v1641 = vpack.c.b16 %v1529, %v1521
        %v1642 = vpack.c.b16 %v1530, %v1522
        %v1643 = vpack.c.b16 %v1531, %v1523
        %v1644 = vpack.c.b16 %v1532, %v1524
        %v1645 = vpack.c.b16 %v1541, %v1533
        %v1646 = vpack.c.b16 %v1542, %v1534
        %v1647 = vpack.c.b16 %v1543, %v1535
        %v1648 = vpack.c.b16 %v1544, %v1536
        %v1649 = vpack.c.b16 %v1545, %v1537
        %v1650 = vpack.c.b16 %v1546, %v1538
        %v1651 = vpack.c.b16 %v1547, %v1539
        %v1652 = vpack.c.b16 %v1548, %v1540
        %v1653 = vpack.c.b16 %v1557, %v1549
        %v1654 = vpack.c.b16 %v1558, %v1550
        %v1655 = vpack.c.b16 %v1559, %v1551
        %v1656 = vpack.c.b16 %v1560, %v1552
        %v1657 = vpack.c.b16 %v1561, %v1553
        %v1658 = vpack.c.b16 %v1562, %v1554
        %v1659 = vpack.c.b16 %v1563, %v1555
        %v1660 = vpack.c.b16 %v1564, %v1556
        %v1661 = vpack.c.b16 %v1573, %v1565
        %v1662 = vpack.c.b16 %v1574, %v1566
        %v1663 = vpack.c.b16 %v1575, %v1567
        %v1664 = vpack.c.b16 %v1576, %v1568
        %v1665 = vpack.c.b16 %v1577, %v1569
        %v1666 = vpack.c.b16 %v1578, %v1570
        %v1667 = vpack.c.b16 %v1579, %v1571
        %v1668 = vpack.c.b16 %v1580, %v1572
        %v1669 = vpack.c.b16 %v1589, %v1581
        %v1670 = vpack.c.b16 %v1590, %v1582
        %v1671 = vpack.c.b16 %v1591, %v1583
        %v1672 = vpack.c.b16 %v1592, %v1584
        %v1673 = vpack.c.b16 %v1593, %v1585
        %v1674 = vpack.c.b16 %v1594, %v1586
        %v1675 = vpack.c.b16 %v1595, %v1587
        %v1676 = vpack.c.b16 %v1596, %v1588
        %v1677 = vpack.c.b16 %v1605, %v1597
        %v1678 = vpack.c.b16 %v1606, %v1598
        %v1679 = vpack.c.b16 %v1607, %v1599
        %v1680 = vpack.c.b16 %v1608, %v1600
        %v1681 = vpack.c.b16 %v1609, %v1601
        %v1682 = vpack.c.b16 %v1610, %v1602
        %v1683 = vpack.c.b16 %v1611, %v1603
        %v1684 = vpack.c.b16 %v1612, %v1604
        %v1685 = vpack.c.b16 %v1621, %v1613
        %v1686 = vpack.c.b16 %v1622, %v1614
        %v1687 = vpack.c.b16 %v1623, %v1615
        %v1688 = vpack.c.b16 %v1624, %v1616
        %v1689 = vpack.c.b16 %v1625, %v1617
        %v1690 = vpack.c.b16 %v1626, %v1618
        %v1691 = vpack.c.b16 %v1627, %v1619
        %v1692 = vpack.c.b16 %v1628, %v1620
        %1757 = vmatpush.bf16.msra.mxu0 %v1685
        %1758 = vmatpush.bf16.msra.mxu0 %v1677
        %1759 = vmatpush.bf16.msra.mxu0 %v1669
        %1760 = vmatpush.bf16.msra.mxu0 %v1661
        %1761 = vmatpush.bf16.msra.mxu0 %v1653
        %1762 = vmatpush.bf16.msra.mxu0 %v1645
        %1763 = vmatpush.bf16.msra.mxu0 %v1637
        %1764 = vmatpush.bf16.msra.mxu0 %v1629
        %1765 = vmatmul.bf16.gmra.mxu0 %v1418
        %v1766 = vpop.f32.mrf.mxu0
        %v1767 = vadd.f32 %v1421, %v1766
        %v1768 = vpop.f32.mrf.mxu0
        %v1769 = vadd.f32 %v1421, %v1768
        %1770 = vmatmul.bf16.gmra.mxu0 %v1419
        %v1771 = vpop.f32.mrf.mxu0
        %v1772 = vadd.f32 %v1421, %v1771
        %v1773 = vpop.f32.mrf.mxu0
        %v1774 = vadd.f32 %v1421, %v1773
        %1775 = vdwg.mxu0
        %1776 = vmatpush.bf16.msra.mxu0 %v1686
        %1777 = vmatpush.bf16.msra.mxu0 %v1678
        %1778 = vmatpush.bf16.msra.mxu0 %v1670
        %1779 = vmatpush.bf16.msra.mxu0 %v1662
        %1780 = vmatpush.bf16.msra.mxu0 %v1654
        %1781 = vmatpush.bf16.msra.mxu0 %v1646
        %1782 = vmatpush.bf16.msra.mxu0 %v1638
        %1783 = vmatpush.bf16.msra.mxu0 %v1630
        %1784 = vmatmul.bf16.gmra.mxu0 %v1418
        %v1785 = vpop.f32.mrf.mxu0
        %v1786 = vadd.f32 %v1422, %v1785
        %v1787 = vpop.f32.mrf.mxu0
        %v1788 = vadd.f32 %v1422, %v1787
        %1789 = vmatmul.bf16.gmra.mxu0 %v1419
        %v1790 = vpop.f32.mrf.mxu0
        %v1791 = vadd.f32 %v1422, %v1790
        %v1792 = vpop.f32.mrf.mxu0
        %v1793 = vadd.f32 %v1422, %v1792
        %1794 = vdwg.mxu0
        %1795 = vmatpush.bf16.msra.mxu0 %v1687
        %1796 = vmatpush.bf16.msra.mxu0 %v1679
        %1797 = vmatpush.bf16.msra.mxu0 %v1671
        %1798 = vmatpush.bf16.msra.mxu0 %v1663
        %1799 = vmatpush.bf16.msra.mxu0 %v1655
        %1800 = vmatpush.bf16.msra.mxu0 %v1647
        %1801 = vmatpush.bf16.msra.mxu0 %v1639
        %1802 = vmatpush.bf16.msra.mxu0 %v1631
        %1803 = vmatmul.bf16.gmra.mxu0 %v1418
        %v1804 = vpop.f32.mrf.mxu0
        %v1805 = vadd.f32 %v1423, %v1804
        %v1806 = vpop.f32.mrf.mxu0
        %v1807 = vadd.f32 %v1423, %v1806
        %1808 = vmatmul.bf16.gmra.mxu0 %v1419
        %v1809 = vpop.f32.mrf.mxu0
        %v1810 = vadd.f32 %v1423, %v1809
        %v1811 = vpop.f32.mrf.mxu0
        %v1812 = vadd.f32 %v1423, %v1811
        %1813 = vdwg.mxu0
        %1814 = vmatpush.bf16.msra.mxu0 %v1688
        %1815 = vmatpush.bf16.msra.mxu0 %v1680
        %1816 = vmatpush.bf16.msra.mxu0 %v1672
        %1817 = vmatpush.bf16.msra.mxu0 %v1664
        %1818 = vmatpush.bf16.msra.mxu0 %v1656
        %1819 = vmatpush.bf16.msra.mxu0 %v1648
        %1820 = vmatpush.bf16.msra.mxu0 %v1640
        %1821 = vmatpush.bf16.msra.mxu0 %v1632
        %1822 = vmatmul.bf16.gmra.mxu0 %v1418
        %v1823 = vpop.f32.mrf.mxu0
        %v1824 = vadd.f32 %v1424, %v1823
        %v1825 = vpop.f32.mrf.mxu0
        %v1826 = vadd.f32 %v1424, %v1825
        %1827 = vmatmul.bf16.gmra.mxu0 %v1419
        %v1828 = vpop.f32.mrf.mxu0
        %v1829 = vadd.f32 %v1424, %v1828
        %v1830 = vpop.f32.mrf.mxu0
        %v1831 = vadd.f32 %v1424, %v1830
        %1832 = vdwg.mxu0
        %1833 = vmatpush.bf16.msra.mxu0 %v1689
        %1834 = vmatpush.bf16.msra.mxu0 %v1681
        %1835 = vmatpush.bf16.msra.mxu0 %v1673
        %1836 = vmatpush.bf16.msra.mxu0 %v1665
        %1837 = vmatpush.bf16.msra.mxu0 %v1657
        %1838 = vmatpush.bf16.msra.mxu0 %v1649
        %1839 = vmatpush.bf16.msra.mxu0 %v1641
        %1840 = vmatpush.bf16.msra.mxu0 %v1633
        %1841 = vmatmul.bf16.gmra.mxu0 %v1418
        %v1842 = vpop.f32.mrf.mxu0
        %v1843 = vadd.f32 %v1425, %v1842
        %v1844 = vpop.f32.mrf.mxu0
        %v1845 = vadd.f32 %v1425, %v1844
        %1846 = vmatmul.bf16.gmra.mxu0 %v1419
        %v1847 = vpop.f32.mrf.mxu0
        %v1848 = vadd.f32 %v1425, %v1847
        %v1849 = vpop.f32.mrf.mxu0
        %v1850 = vadd.f32 %v1425, %v1849
        %1851 = vdwg.mxu0
        %1852 = vmatpush.bf16.msra.mxu0 %v1690
        %1853 = vmatpush.bf16.msra.mxu0 %v1682
        %1854 = vmatpush.bf16.msra.mxu0 %v1674
        %1855 = vmatpush.bf16.msra.mxu0 %v1666
        %1856 = vmatpush.bf16.msra.mxu0 %v1658
        %1857 = vmatpush.bf16.msra.mxu0 %v1650
        %1858 = vmatpush.bf16.msra.mxu0 %v1642
        %1859 = vmatpush.bf16.msra.mxu0 %v1634
        %1860 = vmatmul.bf16.gmra.mxu0 %v1418
        %v1861 = vpop.f32.mrf.mxu0
        %v1862 = vadd.f32 %v1426, %v1861
        %v1863 = vpop.f32.mrf.mxu0
        %v1864 = vadd.f32 %v1426, %v1863
        %1865 = vmatmul.bf16.gmra.mxu0 %v1419
        %v1866 = vpop.f32.mrf.mxu0
        %v1867 = vadd.f32 %v1426, %v1866
        %v1868 = vpop.f32.mrf.mxu0
        %v1869 = vadd.f32 %v1426, %v1868
        %1870 = vdwg.mxu0
        %1871 = vmatpush.bf16.msra.mxu0 %v1691
        %1872 = vmatpush.bf16.msra.mxu0 %v1683
        %1873 = vmatpush.bf16.msra.mxu0 %v1675
        %1874 = vmatpush.bf16.msra.mxu0 %v1667
        %1875 = vmatpush.bf16.msra.mxu0 %v1659
        %1876 = vmatpush.bf16.msra.mxu0 %v1651
        %1877 = vmatpush.bf16.msra.mxu0 %v1643
        %1878 = vmatpush.bf16.msra.mxu0 %v1635
        %1879 = vmatmul.bf16.gmra.mxu0 %v1418
        %v1880 = vpop.f32.mrf.mxu0
        %v1881 = vadd.f32 %v1427, %v1880
        %v1882 = vpop.f32.mrf.mxu0
        %v1883 = vadd.f32 %v1427, %v1882
        %1884 = vmatmul.bf16.gmra.mxu0 %v1419
        %v1885 = vpop.f32.mrf.mxu0
        %v1886 = vadd.f32 %v1427, %v1885
        %v1887 = vpop.f32.mrf.mxu0
        %v1888 = vadd.f32 %v1427, %v1887
        %1889 = vdwg.mxu0
        %1890 = vmatpush.bf16.msra.mxu0 %v1692
        %1891 = vmatpush.bf16.msra.mxu0 %v1684
        %1892 = vmatpush.bf16.msra.mxu0 %v1676
        %1893 = vmatpush.bf16.msra.mxu0 %v1668
        %1894 = vmatpush.bf16.msra.mxu0 %v1660
        %1895 = vmatpush.bf16.msra.mxu0 %v1652
        %1896 = vmatpush.bf16.msra.mxu0 %v1644
        %1897 = vmatpush.bf16.msra.mxu0 %v1636
        %1898 = vmatmul.bf16.gmra.mxu0 %v1418
        %v1899 = vpop.f32.mrf.mxu0
        %v1900 = vadd.f32 %v1428, %v1899
        %v1901 = vpop.f32.mrf.mxu0
        %v1902 = vadd.f32 %v1428, %v1901
        %1903 = vmatmul.bf16.gmra.mxu0 %v1419
        %v1904 = vpop.f32.mrf.mxu0
        %v1905 = vadd.f32 %v1428, %v1904
        %v1906 = vpop.f32.mrf.mxu0
        %v1907 = vadd.f32 %v1428, %v1906
        %1908 = vdwg.mxu0
        %v1909 = vmul.f32 %v1843, %v1843
        %v1910 = vmul.f32 %v1862, %v1862
        %v1911 = vmul.f32 %v1881, %v1881
        %v1912 = vmul.f32 %v1900, %v1900
        %v1913 = vmul.f32 %v1845, %v1845
        %v1914 = vmul.f32 %v1864, %v1864
        %v1915 = vmul.f32 %v1883, %v1883
        %v1916 = vmul.f32 %v1902, %v1902
        %v1917 = vmul.f32 %v1848, %v1848
        %v1918 = vmul.f32 %v1867, %v1867
        %v1919 = vmul.f32 %v1886, %v1886
        %v1920 = vmul.f32 %v1905, %v1905
        %v1921 = vmul.f32 %v1850, %v1850
        %v1922 = vmul.f32 %v1869, %v1869
        %v1923 = vmul.f32 %v1888, %v1888
        %v1924 = vmul.f32 %v1907, %v1907
        %v1925 = vmul.f32 %v1843, %v1909
        %v1926 = vmul.f32 %v1862, %v1910
        %v1927 = vmul.f32 %v1881, %v1911
        %v1928 = vmul.f32 %v1900, %v1912
        %v1929 = vmul.f32 %v1845, %v1913
        %v1930 = vmul.f32 %v1864, %v1914
        %v1931 = vmul.f32 %v1883, %v1915
        %v1932 = vmul.f32 %v1902, %v1916
        %v1933 = vmul.f32 %v1848, %v1917
        %v1934 = vmul.f32 %v1867, %v1918
        %v1935 = vmul.f32 %v1886, %v1919
        %v1936 = vmul.f32 %v1905, %v1920
        %v1937 = vmul.f32 %v1850, %v1921
        %v1938 = vmul.f32 %v1869, %v1922
        %v1939 = vmul.f32 %v1888, %v1923
        %v1940 = vmul.f32 %v1907, %v1924
        %v1941 = vmul.f32 %v1925, 0.044715
        %v1942 = vmul.f32 %v1926, 0.044715
        %v1943 = vmul.f32 %v1927, 0.044715
        %v1944 = vmul.f32 %v1928, 0.044715
        %v1945 = vmul.f32 %v1929, 0.044715
        %v1946 = vmul.f32 %v1930, 0.044715
        %v1947 = vmul.f32 %v1931, 0.044715
        %v1948 = vmul.f32 %v1932, 0.044715
        %v1949 = vmul.f32 %v1933, 0.044715
        %v1950 = vmul.f32 %v1934, 0.044715
        %v1951 = vmul.f32 %v1935, 0.044715
        %v1952 = vmul.f32 %v1936, 0.044715
        %v1953 = vmul.f32 %v1937, 0.044715
        %v1954 = vmul.f32 %v1938, 0.044715
        %v1955 = vmul.f32 %v1939, 0.044715
        %v1956 = vmul.f32 %v1940, 0.044715
        %v1957 = vadd.f32 %v1843, %v1941
        %v1958 = vadd.f32 %v1862, %v1942
        %v1959 = vadd.f32 %v1881, %v1943
        %v1960 = vadd.f32 %v1900, %v1944
        %v1961 = vadd.f32 %v1845, %v1945
        %v1962 = vadd.f32 %v1864, %v1946
        %v1963 = vadd.f32 %v1883, %v1947
        %v1964 = vadd.f32 %v1902, %v1948
        %v1965 = vadd.f32 %v1848, %v1949
        %v1966 = vadd.f32 %v1867, %v1950
        %v1967 = vadd.f32 %v1886, %v1951
        %v1968 = vadd.f32 %v1905, %v1952
        %v1969 = vadd.f32 %v1850, %v1953
        %v1970 = vadd.f32 %v1869, %v1954
        %v1971 = vadd.f32 %v1888, %v1955
        %v1972 = vadd.f32 %v1907, %v1956
        %v1973 = vmul.f32 %v1957, 0.7978846
        %v1974 = vmul.f32 %v1958, 0.7978846
        %v1975 = vmul.f32 %v1959, 0.7978846
        %v1976 = vmul.f32 %v1960, 0.7978846
        %v1977 = vmul.f32 %v1961, 0.7978846
        %v1978 = vmul.f32 %v1962, 0.7978846
        %v1979 = vmul.f32 %v1963, 0.7978846
        %v1980 = vmul.f32 %v1964, 0.7978846
        %v1981 = vmul.f32 %v1965, 0.7978846
        %v1982 = vmul.f32 %v1966, 0.7978846
        %v1983 = vmul.f32 %v1967, 0.7978846
        %v1984 = vmul.f32 %v1968, 0.7978846
        %v1985 = vmul.f32 %v1969, 0.7978846
        %v1986 = vmul.f32 %v1970, 0.7978846
        %v1987 = vmul.f32 %v1971, 0.7978846
        %v1988 = vmul.f32 %v1972, 0.7978846
        %v1989 = vtanh.pop %v1973
        %v1990 = vtanh.pop %v1974
        %v1991 = vtanh.pop %v1975
        %v1992 = vtanh.pop %v1976
        %v1993 = vtanh.pop %v1977
        %v1994 = vtanh.pop %v1978
        %v1995 = vtanh.pop %v1979
        %v1996 = vtanh.pop %v1980
        %v1997 = vtanh.pop %v1981
        %v1998 = vtanh.pop %v1982
        %v1999 = vtanh.pop %v1983
        %v2000 = vtanh.pop %v1984
        %v2001 = vtanh.pop %v1985
        %v2002 = vtanh.pop %v1986
        %v2003 = vtanh.pop %v1987
        %v2004 = vtanh.pop %v1988
        %v2005 = vadd.f32 %v1989, 1.0
        %v2006 = vadd.f32 %v1990, 1.0
        %v2007 = vadd.f32 %v1991, 1.0
        %v2008 = vadd.f32 %v1992, 1.0
        %v2009 = vadd.f32 %v1993, 1.0
        %v2010 = vadd.f32 %v1994, 1.0
        %v2011 = vadd.f32 %v1995, 1.0
        %v2012 = vadd.f32 %v1996, 1.0
        %v2013 = vadd.f32 %v1997, 1.0
        %v2014 = vadd.f32 %v1998, 1.0
        %v2015 = vadd.f32 %v1999, 1.0
        %v2016 = vadd.f32 %v2000, 1.0
        %v2017 = vadd.f32 %v2001, 1.0
        %v2018 = vadd.f32 %v2002, 1.0
        %v2019 = vadd.f32 %v2003, 1.0
        %v2020 = vadd.f32 %v2004, 1.0
        %v2021 = vmul.f32 %v2005, 0.5
        %v2022 = vmul.f32 %v2006, 0.5
        %v2023 = vmul.f32 %v2007, 0.5
        %v2024 = vmul.f32 %v2008, 0.5
        %v2025 = vmul.f32 %v2009, 0.5
        %v2026 = vmul.f32 %v2010, 0.5
        %v2027 = vmul.f32 %v2011, 0.5
        %v2028 = vmul.f32 %v2012, 0.5
        %v2029 = vmul.f32 %v2013, 0.5
        %v2030 = vmul.f32 %v2014, 0.5
        %v2031 = vmul.f32 %v2015, 0.5
        %v2032 = vmul.f32 %v2016, 0.5
        %v2033 = vmul.f32 %v2017, 0.5
        %v2034 = vmul.f32 %v2018, 0.5
        %v2035 = vmul.f32 %v2019, 0.5
        %v2036 = vmul.f32 %v2020, 0.5
        %v2037 = vmul.f32 %v1843, %v2021
        %v2038 = vmul.f32 %v1862, %v2022
        %v2039 = vmul.f32 %v1881, %v2023
        %v2040 = vmul.f32 %v1900, %v2024
        %v2041 = vmul.f32 %v1845, %v2025
        %v2042 = vmul.f32 %v1864, %v2026
        %v2043 = vmul.f32 %v1883, %v2027
        %v2044 = vmul.f32 %v1902, %v2028
        %v2045 = vmul.f32 %v1848, %v2029
        %v2046 = vmul.f32 %v1867, %v2030
        %v2047 = vmul.f32 %v1886, %v2031
        %v2048 = vmul.f32 %v1905, %v2032
        %v2049 = vmul.f32 %v1850, %v2033
        %v2050 = vmul.f32 %v1869, %v2034
        %v2051 = vmul.f32 %v1888, %v2035
        %v2052 = vmul.f32 %v1907, %v2036
        %v2053 = vmul.f32 %v1767, %v2037
        %v2054 = vmul.f32 %v1786, %v2038
        %v2055 = vmul.f32 %v1805, %v2039
        %v2056 = vmul.f32 %v1824, %v2040
        %v2057 = vmul.f32 %v1769, %v2041
        %v2058 = vmul.f32 %v1788, %v2042
        %v2059 = vmul.f32 %v1807, %v2043
        %v2060 = vmul.f32 %v1826, %v2044
        %v2061 = vmul.f32 %v1772, %v2045
        %v2062 = vmul.f32 %v1791, %v2046
        %v2063 = vmul.f32 %v1810, %v2047
        %v2064 = vmul.f32 %v1829, %v2048
        %v2065 = vmul.f32 %v1774, %v2049
        %v2066 = vmul.f32 %v1793, %v2050
        %v2067 = vmul.f32 %v1812, %v2051
        %v2068 = vmul.f32 %v1831, %v2052
        %v2069 = vpack.c.bf16 %v2057, %v2053
        %v2070 = vpack.c.bf16 %v2058, %v2054
        %v2071 = vpack.c.bf16 %v2059, %v2055
        %v2072 = vpack.c.bf16 %v2060, %v2056
        %v2073 = vpack.c.bf16 %v2065, %v2061
        %v2074 = vpack.c.bf16 %v2066, %v2062
        %v2075 = vpack.c.bf16 %v2067, %v2063
        %v2076 = vpack.c.bf16 %v2068, %v2064
        %v2077 = vperm.slane %v732, 5
        %v2142 = vunpack.c.l.b16 %v1354
        %v2143 = vunpack.c.l.b16 %v1355
        %v2144 = vunpack.c.l.b16 %v1356
        %v2145 = vunpack.c.l.b16 %v1357
        %v2146 = vunpack.c.l.b16 %v1358
        %v2147 = vunpack.c.l.b16 %v1359
        %v2148 = vunpack.c.l.b16 %v1360
        %v2149 = vunpack.c.l.b16 %v1361
        %v2150 = vunpack.c.l.b16 %v1362
        %v2151 = vunpack.c.l.b16 %v1363
        %v2152 = vunpack.c.l.b16 %v1364
        %v2153 = vunpack.c.l.b16 %v1365
        %v2154 = vunpack.c.l.b16 %v1366
        %v2155 = vunpack.c.l.b16 %v1367
        %v2156 = vunpack.c.l.b16 %v1368
        %v2157 = vunpack.c.l.b16 %v1369
        %v2158 = vunpack.c.l.b16 %v1370
        %v2159 = vunpack.c.l.b16 %v1371
        %v2160 = vunpack.c.l.b16 %v1372
        %v2161 = vunpack.c.l.b16 %v1373
        %v2162 = vunpack.c.l.b16 %v1374
        %v2163 = vunpack.c.l.b16 %v1375
        %v2164 = vunpack.c.l.b16 %v1376
        %v2165 = vunpack.c.l.b16 %v1377
        %v2166 = vunpack.c.l.b16 %v1378
        %v2167 = vunpack.c.l.b16 %v1379
        %v2168 = vunpack.c.l.b16 %v1380
        %v2169 = vunpack.c.l.b16 %v1381
        %v2170 = vunpack.c.l.b16 %v1382
        %v2171 = vunpack.c.l.b16 %v1383
        %v2172 = vunpack.c.l.b16 %v1384
        %v2173 = vunpack.c.l.b16 %v1385
        %v2174 = vunpack.c.l.b16 %v1386
        %v2175 = vunpack.c.l.b16 %v1387
        %v2176 = vunpack.c.l.b16 %v1388
        %v2177 = vunpack.c.l.b16 %v1389
        %v2178 = vunpack.c.l.b16 %v1390
        %v2179 = vunpack.c.l.b16 %v1391
        %v2180 = vunpack.c.l.b16 %v1392
        %v2181 = vunpack.c.l.b16 %v1393
        %v2182 = vunpack.c.l.b16 %v1394
        %v2183 = vunpack.c.l.b16 %v1395
        %v2184 = vunpack.c.l.b16 %v1396
        %v2185 = vunpack.c.l.b16 %v1397
        %v2186 = vunpack.c.l.b16 %v1398
        %v2187 = vunpack.c.l.b16 %v1399
        %v2188 = vunpack.c.l.b16 %v1400
        %v2189 = vunpack.c.l.b16 %v1401
        %v2190 = vunpack.c.l.b16 %v1402
        %v2191 = vunpack.c.l.b16 %v1403
        %v2192 = vunpack.c.l.b16 %v1404
        %v2193 = vunpack.c.l.b16 %v1405
        %v2194 = vunpack.c.l.b16 %v1406
        %v2195 = vunpack.c.l.b16 %v1407
        %v2196 = vunpack.c.l.b16 %v1408
        %v2197 = vunpack.c.l.b16 %v1409
        %v2198 = vunpack.c.l.b16 %v1410
        %v2199 = vunpack.c.l.b16 %v1411
        %v2200 = vunpack.c.l.b16 %v1412
        %v2201 = vunpack.c.l.b16 %v1413
        %v2202 = vunpack.c.l.b16 %v1414
        %v2203 = vunpack.c.l.b16 %v1415
        %v2204 = vunpack.c.l.b16 %v1416
        %v2205 = vunpack.c.l.b16 %v1417
        %v2206 = vpack.c.b16 %v2143, %v2142
        %v2207 = vpack.c.b16 %v2145, %v2144
        %v2208 = vpack.c.b16 %v2147, %v2146
        %v2209 = vpack.c.b16 %v2149, %v2148
        %v2210 = vpack.c.b16 %v2151, %v2150
        %v2211 = vpack.c.b16 %v2153, %v2152
        %v2212 = vpack.c.b16 %v2155, %v2154
        %v2213 = vpack.c.b16 %v2157, %v2156
        %v2214 = vpack.c.b16 %v2159, %v2158
        %v2215 = vpack.c.b16 %v2161, %v2160
        %v2216 = vpack.c.b16 %v2163, %v2162
        %v2217 = vpack.c.b16 %v2165, %v2164
        %v2218 = vpack.c.b16 %v2167, %v2166
        %v2219 = vpack.c.b16 %v2169, %v2168
        %v2220 = vpack.c.b16 %v2171, %v2170
        %v2221 = vpack.c.b16 %v2173, %v2172
        %v2222 = vpack.c.b16 %v2175, %v2174
        %v2223 = vpack.c.b16 %v2177, %v2176
        %v2224 = vpack.c.b16 %v2179, %v2178
        %v2225 = vpack.c.b16 %v2181, %v2180
        %v2226 = vpack.c.b16 %v2183, %v2182
        %v2227 = vpack.c.b16 %v2185, %v2184
        %v2228 = vpack.c.b16 %v2187, %v2186
        %v2229 = vpack.c.b16 %v2189, %v2188
        %v2230 = vpack.c.b16 %v2191, %v2190
        %v2231 = vpack.c.b16 %v2193, %v2192
        %v2232 = vpack.c.b16 %v2195, %v2194
        %v2233 = vpack.c.b16 %v2197, %v2196
        %v2234 = vpack.c.b16 %v2199, %v2198
        %v2235 = vpack.c.b16 %v2201, %v2200
        %v2236 = vpack.c.b16 %v2203, %v2202
        %v2237 = vpack.c.b16 %v2205, %v2204
        %2270 = vmatpush.bf16.msra.mxu0 %v2213
        %2271 = vmatpush.bf16.msra.mxu0 %v2212
        %2272 = vmatpush.bf16.msra.mxu0 %v2211
        %2273 = vmatpush.bf16.msra.mxu0 %v2210
        %2274 = vmatpush.bf16.msra.mxu0 %v2209
        %2275 = vmatpush.bf16.msra.mxu0 %v2208
        %2276 = vmatpush.bf16.msra.mxu0 %v2207
        %2277 = vmatpush.bf16.msra.mxu0 %v2206
        %2278 = vmatmul.bf16.gmra.mxu0 %v2069
        %v2279 = vpop.f32.mrf.mxu0
        %v2280 = vadd.f32 %v2077, %v2279
        %v2281 = vpop.f32.mrf.mxu0
        %v2282 = vadd.f32 %v2077, %v2281
        %2283 = vmatmul.bf16.gmra.mxu0 %v2073
        %v2284 = vpop.f32.mrf.mxu0
        %v2285 = vadd.f32 %v2077, %v2284
        %v2286 = vpop.f32.mrf.mxu0
        %v2287 = vadd.f32 %v2077, %v2286
        %2288 = vdwg.mxu0
        %2289 = vmatpush.bf16.msra.mxu0 %v2221
        %2290 = vmatpush.bf16.msra.mxu0 %v2220
        %2291 = vmatpush.bf16.msra.mxu0 %v2219
        %2292 = vmatpush.bf16.msra.mxu0 %v2218
        %2293 = vmatpush.bf16.msra.mxu0 %v2217
        %2294 = vmatpush.bf16.msra.mxu0 %v2216
        %2295 = vmatpush.bf16.msra.mxu0 %v2215
        %2296 = vmatpush.bf16.msra.mxu0 %v2214
        %2297 = vmatmul.bf16.gmra.mxu0 %v2070
        %v2298 = vpop.f32.mrf.mxu0
        %v2299 = vadd.f32 %v2280, %v2298
        %v2300 = vpop.f32.mrf.mxu0
        %v2301 = vadd.f32 %v2282, %v2300
        %2302 = vmatmul.bf16.gmra.mxu0 %v2074
        %v2303 = vpop.f32.mrf.mxu0
        %v2304 = vadd.f32 %v2285, %v2303
        %v2305 = vpop.f32.mrf.mxu0
        %v2306 = vadd.f32 %v2287, %v2305
        %2307 = vdwg.mxu0
        %2308 = vmatpush.bf16.msra.mxu0 %v2229
        %2309 = vmatpush.bf16.msra.mxu0 %v2228
        %2310 = vmatpush.bf16.msra.mxu0 %v2227
        %2311 = vmatpush.bf16.msra.mxu0 %v2226
        %2312 = vmatpush.bf16.msra.mxu0 %v2225
        %2313 = vmatpush.bf16.msra.mxu0 %v2224
        %2314 = vmatpush.bf16.msra.mxu0 %v2223
        %2315 = vmatpush.bf16.msra.mxu0 %v2222
        %2316 = vmatmul.bf16.gmra.mxu0 %v2071
        %v2317 = vpop.f32.mrf.mxu0
        %v2318 = vadd.f32 %v2299, %v2317
        %v2319 = vpop.f32.mrf.mxu0
        %v2320 = vadd.f32 %v2301, %v2319
        %2321 = vmatmul.bf16.gmra.mxu0 %v2075
        %v2322 = vpop.f32.mrf.mxu0
        %v2323 = vadd.f32 %v2304, %v2322
        %v2324 = vpop.f32.mrf.mxu0
        %v2325 = vadd.f32 %v2306, %v2324
        %2326 = vdwg.mxu0
        %2327 = vmatpush.bf16.msra.mxu0 %v2237
        %2328 = vmatpush.bf16.msra.mxu0 %v2236
        %2329 = vmatpush.bf16.msra.mxu0 %v2235
        %2330 = vmatpush.bf16.msra.mxu0 %v2234
        %2331 = vmatpush.bf16.msra.mxu0 %v2233
        %2332 = vmatpush.bf16.msra.mxu0 %v2232
        %2333 = vmatpush.bf16.msra.mxu0 %v2231
        %2334 = vmatpush.bf16.msra.mxu0 %v2230
        %2335 = vmatmul.bf16.gmra.mxu0 %v2072
        %v2336 = vpop.f32.mrf.mxu0
        %v2337 = vadd.f32 %v2318, %v2336
        %v2338 = vpop.f32.mrf.mxu0
        %v2339 = vadd.f32 %v2320, %v2338
        %2340 = vmatmul.bf16.gmra.mxu0 %v2076
        %v2341 = vpop.f32.mrf.mxu0
        %v2342 = vadd.f32 %v2323, %v2341
        %v2343 = vpop.f32.mrf.mxu0
        %v2344 = vadd.f32 %v2325, %v2343
        %2345 = vdwg.mxu0
        %v2346 = vadd.f32 %v1195, %v2337
        %v2347 = vadd.f32 %v1196, %v2339
        %v2348 = vadd.f32 %v1197, %v2342
        %v2349 = vadd.f32 %v1198, %v2344
        %v2350 = vld [vmem:[%s10] sm:$0x3f]
        %2351 = vadd.xlane.f32.xlu0 %v2346
        %v2352 = vpop.xlane.xlu0 %2351
        %2353 = vadd.xlane.f32.xlu0 %v2347
        %v2354 = vpop.xlane.xlu0 %2353
        %2355 = vadd.xlane.f32.xlu0 %v2348
        %v2356 = vpop.xlane.xlu0 %2355
        %2357 = vadd.xlane.f32.xlu0 %v2349
        %v2358 = vpop.xlane.xlu0 %2357
        %v2359 = vmul.f32 %v2352, %v748
        %v2360 = vmul.f32 %v2354, %v748
        %v2361 = vmul.f32 %v2356, %v748
        %v2362 = vmul.f32 %v2358, %v748
        %v2363 = vsub.f32 %v2346, %v2359
        %v2364 = vsub.f32 %v2347, %v2360
        %v2365 = vsub.f32 %v2348, %v2361
        %v2366 = vsub.f32 %v2349, %v2362
        %v2367 = vmul.f32 %v2363, %v2363
        %v2368 = vmul.f32 %v2364, %v2364
        %v2369 = vmul.f32 %v2365, %v2365
        %v2370 = vmul.f32 %v2366, %v2366
        %2371 = vadd.xlane.f32.xlu0 %v2367
        %v2372 = vpop.xlane.xlu0 %2371
        %2373 = vadd.xlane.f32.xlu0 %v2368
        %v2374 = vpop.xlane.xlu0 %2373
        %2375 = vadd.xlane.f32.xlu0 %v2369
        %v2376 = vpop.xlane.xlu0 %2375
        %2377 = vadd.xlane.f32.xlu0 %v2370
        %v2378 = vpop.xlane.xlu0 %2377
        %v2379 = vmul.f32 %v2372, %v748
        %v2380 = vmul.f32 %v2374, %v748
        %v2381 = vmul.f32 %v2376, %v748
        %v2382 = vmul.f32 %v2378, %v748
        %v2383 = vadd.f32 %v2379, 1e-05
        %v2384 = vadd.f32 %v2380, 1e-05
        %v2385 = vadd.f32 %v2381, 1e-05
        %v2386 = vadd.f32 %v2382, 1e-05
        %v2387 = vrsqrt.pop %v2383
        %v2388 = vmul.f32 %v2387, %v2383
        %v2389 = vmul.f32 %v2388, %v2387
        %v2390 = vmul.f32 0.5, %v2389
        %v2391 = vsub.f32 1.5, %v2390
        %v2392 = vmul.f32 %v2387, %v2391
        %vm2393 = vweird.f32 %v2383
        %vm2394 = vweird.f32 %v2387
        %vm2395 = vmor %vm2393, %vm2394
        %v2396 = vsel %vm2395, %v2387, %v2392
        %v2397 = vrsqrt.pop %v2384
        %v2398 = vmul.f32 %v2397, %v2384
        %v2399 = vmul.f32 %v2398, %v2397
        %v2400 = vmul.f32 0.5, %v2399
        %v2401 = vsub.f32 1.5, %v2400
        %v2402 = vmul.f32 %v2397, %v2401
        %vm2403 = vweird.f32 %v2384
        %vm2404 = vweird.f32 %v2397
        %vm2405 = vmor %vm2403, %vm2404
        %v2406 = vsel %vm2405, %v2397, %v2402
        %v2407 = vrsqrt.pop %v2385
        %v2408 = vmul.f32 %v2407, %v2385
        %v2409 = vmul.f32 %v2408, %v2407
        %v2410 = vmul.f32 0.5, %v2409
        %v2411 = vsub.f32 1.5, %v2410
        %v2412 = vmul.f32 %v2407, %v2411
        %vm2413 = vweird.f32 %v2385
        %vm2414 = vweird.f32 %v2407
        %vm2415 = vmor %vm2413, %vm2414
        %v2416 = vsel %vm2415, %v2407, %v2412
        %v2417 = vrsqrt.pop %v2386
        %v2418 = vmul.f32 %v2417, %v2386
        %v2419 = vmul.f32 %v2418, %v2417
        %v2420 = vmul.f32 0.5, %v2419
        %v2421 = vsub.f32 1.5, %v2420
        %v2422 = vmul.f32 %v2417, %v2421
        %vm2423 = vweird.f32 %v2386
        %vm2424 = vweird.f32 %v2417
        %vm2425 = vmor %vm2423, %vm2424
        %v2426 = vsel %vm2425, %v2417, %v2422
        %v2427 = vmul.f32 %v2363, %v2396
        %v2428 = vmul.f32 %v2364, %v2406
        %v2429 = vmul.f32 %v2365, %v2416
        %v2430 = vmul.f32 %v2366, %v2426
        %v2431 = vperm.slane %v2350, 0
        %v2432 = vmul.f32 %v2427, %v2431
        %v2433 = vmul.f32 %v2428, %v2431
        %v2434 = vmul.f32 %v2429, %v2431
        %v2435 = vmul.f32 %v2430, %v2431
        %v2436 = vperm.slane %v2350, 1
        %v2437 = vadd.f32 %v2432, %v2436
        %v2438 = vadd.f32 %v2433, %v2436
        %v2439 = vadd.f32 %v2434, %v2436
        %v2440 = vadd.f32 %v2435, %v2436
        %v2441 = vld [vmem:[%s12] sm:$0xf]
        %v2442 = vld [vmem:[%s12 + $0x4] sm:$0xf]
        %v2443 = vld [vmem:[%s12 + $0x8] sm:$0xf]
        %v2444 = vld [vmem:[%s12 + $0xc] sm:$0xf]
        %v2445 = vld [vmem:[%s12 + $0x10] sm:$0xf]
        %v2446 = vld [vmem:[%s12 + $0x14] sm:$0xf]
        %v2447 = vld [vmem:[%s12 + $0x18] sm:$0xf]
        %v2448 = vld [vmem:[%s12 + $0x1c] sm:$0xf]
        %v2449 = vld [vmem:[%s12 + $0x20] sm:$0xf]
        %v2450 = vld [vmem:[%s12 + $0x24] sm:$0xf]
        %v2451 = vld [vmem:[%s12 + $0x28] sm:$0xf]
        %v2452 = vld [vmem:[%s12 + $0x2c] sm:$0xf]
        %v2453 = vld [vmem:[%s12 + $0x30] sm:$0xf]
        %v2454 = vld [vmem:[%s12 + $0x34] sm:$0xf]
        %v2455 = vld [vmem:[%s12 + $0x38] sm:$0xf]
        %v2456 = vld [vmem:[%s12 + $0x3c] sm:$0xf]
        %v2457 = vld [vmem:[#allocation14] sm:$0xff]
        %v2458 = vld [vmem:[#allocation14 + $0x8] sm:$0xff]
        %v2459 = vld [vmem:[#allocation14 + $0x10] sm:$0xff]
        %v2460 = vld [vmem:[#allocation14 + $0x18] sm:$0xff]
        %v2461 = vld [vmem:[#allocation14 + $0x20] sm:$0xff]
        %v2462 = vld [vmem:[#allocation14 + $0x28] sm:$0xff]
        %v2463 = vld [vmem:[#allocation14 + $0x30] sm:$0xff]
        %v2464 = vld [vmem:[#allocation14 + $0x38] sm:$0xff]
        %v2465 = vld [vmem:[#allocation14 + $0x40] sm:$0xff]
        %v2466 = vld [vmem:[#allocation14 + $0x48] sm:$0xff]
        %v2467 = vld [vmem:[#allocation14 + $0x50] sm:$0xff]
        %v2468 = vld [vmem:[#allocation14 + $0x58] sm:$0xff]
        %v2469 = vld [vmem:[#allocation14 + $0x60] sm:$0xff]
        %v2470 = vld [vmem:[#allocation14 + $0x68] sm:$0xff]
        %v2471 = vld [vmem:[#allocation14 + $0x70] sm:$0xff]
        %v2472 = vld [vmem:[#allocation14 + $0x78] sm:$0xff]
        %v2473 = vld [vmem:[#allocation16] sm:$0xf]
        %v2474 = vld [vmem:[#allocation16 + $0x4] sm:$0xf]
        %v2475 = vld [vmem:[#allocation16 + $0x8] sm:$0xf]
        %v2476 = vld [vmem:[#allocation16 + $0xc] sm:$0xf]
        %v2477 = vld [vmem:[#allocation16 + $0x10] sm:$0xf]
        %v2478 = vld [vmem:[#allocation16 + $0x14] sm:$0xf]
        %v2479 = vld [vmem:[#allocation16 + $0x18] sm:$0xf]
        %v2480 = vld [vmem:[#allocation16 + $0x1c] sm:$0xf]
        %v2481 = vld [vmem:[#allocation16 + $0x20] sm:$0xf]
        %v2482 = vld [vmem:[#allocation16 + $0x24] sm:$0xf]
        %v2483 = vld [vmem:[#allocation16 + $0x28] sm:$0xf]
        %v2484 = vld [vmem:[#allocation16 + $0x2c] sm:$0xf]
        %v2485 = vld [vmem:[#allocation16 + $0x30] sm:$0xf]
        %v2486 = vld [vmem:[#allocation16 + $0x34] sm:$0xf]
        %v2487 = vld [vmem:[#allocation16 + $0x38] sm:$0xf]
        %v2488 = vld [vmem:[#allocation16 + $0x3c] sm:$0xf]
        %v2489 = vpack.c.bf16 %v2438, %v2437
        %v2490 = vpack.c.bf16 %v2440, %v2439
        %v2507 = vunpack.c.l.b16 %v2441
        %v2508 = vunpack.c.l.b16 %v2442
        %v2509 = vunpack.c.l.b16 %v2443
        %v2510 = vunpack.c.l.b16 %v2444
        %v2511 = vunpack.c.l.b16 %v2445
        %v2512 = vunpack.c.l.b16 %v2446
        %v2513 = vunpack.c.l.b16 %v2447
        %v2514 = vunpack.c.l.b16 %v2448
        %v2515 = vunpack.c.l.b16 %v2449
        %v2516 = vunpack.c.l.b16 %v2450
        %v2517 = vunpack.c.l.b16 %v2451
        %v2518 = vunpack.c.l.b16 %v2452
        %v2519 = vunpack.c.l.b16 %v2453
        %v2520 = vunpack.c.l.b16 %v2454
        %v2521 = vunpack.c.l.b16 %v2455
        %v2522 = vunpack.c.l.b16 %v2456
        %v2523 = vpack.c.b16 %v2508, %v2507
        %v2524 = vpack.c.b16 %v2510, %v2509
        %v2525 = vpack.c.b16 %v2512, %v2511
        %v2526 = vpack.c.b16 %v2514, %v2513
        %v2527 = vpack.c.b16 %v2516, %v2515
        %v2528 = vpack.c.b16 %v2518, %v2517
        %v2529 = vpack.c.b16 %v2520, %v2519
        %v2530 = vpack.c.b16 %v2522, %v2521
        %2539 = vmatpush.bf16.msra.mxu0 %v2530
        %2540 = vmatpush.bf16.msra.mxu0 %v2529
        %2541 = vmatpush.bf16.msra.mxu0 %v2528
        %2542 = vmatpush.bf16.msra.mxu0 %v2527
        %2543 = vmatpush.bf16.msra.mxu0 %v2526
        %2544 = vmatpush.bf16.msra.mxu0 %v2525
        %2545 = vmatpush.bf16.msra.mxu0 %v2524
        %2546 = vmatpush.bf16.msra.mxu0 %v2523
        %2547 = vmatmul.bf16.gmra.mxu0 %v2489
        %v2548 = vpop.f32.mrf.mxu0
        %v2549 = vadd.f32 0.0, %v2548
        %v2550 = vpop.f32.mrf.mxu0
        %v2551 = vadd.f32 0.0, %v2550
        %2552 = vmatmul.bf16.gmra.mxu0 %v2490
        %v2553 = vpop.f32.mrf.mxu0
        %v2554 = vadd.f32 0.0, %v2553
        %v2555 = vpop.f32.mrf.mxu0
        %v2556 = vadd.f32 0.0, %v2555
        %2557 = vdwg.mxu0
        %v2574 = vunpack.c.l.b16 %v2457
        %v2575 = vunpack.c.h.b16 %v2457
        %v2576 = vunpack.c.l.b16 %v2458
        %v2577 = vunpack.c.h.b16 %v2458
        %v2578 = vunpack.c.l.b16 %v2459
        %v2579 = vunpack.c.h.b16 %v2459
        %v2580 = vunpack.c.l.b16 %v2460
        %v2581 = vunpack.c.h.b16 %v2460
        %v2582 = vunpack.c.l.b16 %v2461
        %v2583 = vunpack.c.h.b16 %v2461
        %v2584 = vunpack.c.l.b16 %v2462
        %v2585 = vunpack.c.h.b16 %v2462
        %v2586 = vunpack.c.l.b16 %v2463
        %v2587 = vunpack.c.h.b16 %v2463
        %v2588 = vunpack.c.l.b16 %v2464
        %v2589 = vunpack.c.h.b16 %v2464
        %v2590 = vunpack.c.l.b16 %v2465
        %v2591 = vunpack.c.h.b16 %v2465
        %v2592 = vunpack.c.l.b16 %v2466
        %v2593 = vunpack.c.h.b16 %v2466
        %v2594 = vunpack.c.l.b16 %v2467
        %v2595 = vunpack.c.h.b16 %v2467
        %v2596 = vunpack.c.l.b16 %v2468
        %v2597 = vunpack.c.h.b16 %v2468
        %v2598 = vunpack.c.l.b16 %v2469
        %v2599 = vunpack.c.h.b16 %v2469
        %v2600 = vunpack.c.l.b16 %v2470
        %v2601 = vunpack.c.h.b16 %v2470
        %v2602 = vunpack.c.l.b16 %v2471
        %v2603 = vunpack.c.h.b16 %v2471
        %v2604 = vunpack.c.l.b16 %v2472
        %v2605 = vunpack.c.h.b16 %v2472
        %v2606 = vpack.c.b16 %v2576, %v2574
        %v2607 = vpack.c.b16 %v2577, %v2575
        %v2608 = vpack.c.b16 %v2580, %v2578
        %v2609 = vpack.c.b16 %v2581, %v2579
        %v2610 = vpack.c.b16 %v2584, %v2582
        %v2611 = vpack.c.b16 %v2585, %v2583
        %v2612 = vpack.c.b16 %v2588, %v2586
        %v2613 = vpack.c.b16 %v2589, %v2587
        %v2614 = vpack.c.b16 %v2592, %v2590
        %v2615 = vpack.c.b16 %v2593, %v2591
        %v2616 = vpack.c.b16 %v2596, %v2594
        %v2617 = vpack.c.b16 %v2597, %v2595
        %v2618 = vpack.c.b16 %v2600, %v2598
        %v2619 = vpack.c.b16 %v2601, %v2599
        %v2620 = vpack.c.b16 %v2604, %v2602
        %v2621 = vpack.c.b16 %v2605, %v2603
        %2638 = vmatpush.bf16.msra.mxu0 %v2620
        %2639 = vmatpush.bf16.msra.mxu0 %v2618
        %2640 = vmatpush.bf16.msra.mxu0 %v2616
        %2641 = vmatpush.bf16.msra.mxu0 %v2614
        %2642 = vmatpush.bf16.msra.mxu0 %v2612
        %2643 = vmatpush.bf16.msra.mxu0 %v2610
        %2644 = vmatpush.bf16.msra.mxu0 %v2608
        %2645 = vmatpush.bf16.msra.mxu0 %v2606
        %2646 = vmatmul.bf16.gmra.mxu0 %v2489
        %v2647 = vpop.f32.mrf.mxu0
        %v2648 = vadd.f32 0.0, %v2647
        %v2649 = vpop.f32.mrf.mxu0
        %v2650 = vadd.f32 0.0, %v2649
        %2651 = vmatmul.bf16.gmra.mxu0 %v2490
        %v2652 = vpop.f32.mrf.mxu0
        %v2653 = vadd.f32 0.0, %v2652
        %v2654 = vpop.f32.mrf.mxu0
        %v2655 = vadd.f32 0.0, %v2654
        %2656 = vdwg.mxu0
        %2657 = vmatpush.bf16.msra.mxu0 %v2621
        %2658 = vmatpush.bf16.msra.mxu0 %v2619
        %2659 = vmatpush.bf16.msra.mxu0 %v2617
        %2660 = vmatpush.bf16.msra.mxu0 %v2615
        %2661 = vmatpush.bf16.msra.mxu0 %v2613
        %2662 = vmatpush.bf16.msra.mxu0 %v2611
        %2663 = vmatpush.bf16.msra.mxu0 %v2609
        %2664 = vmatpush.bf16.msra.mxu0 %v2607
        %2665 = vmatmul.bf16.gmra.mxu0 %v2489
        %v2666 = vpop.f32.mrf.mxu0
        %v2667 = vadd.f32 0.0, %v2666
        %v2668 = vpop.f32.mrf.mxu0
        %v2669 = vadd.f32 0.0, %v2668
        %2670 = vmatmul.bf16.gmra.mxu0 %v2490
        %v2671 = vpop.f32.mrf.mxu0
        %v2672 = vadd.f32 0.0, %v2671
        %v2673 = vpop.f32.mrf.mxu0
        %v2674 = vadd.f32 0.0, %v2673
        %2675 = vdwg.mxu0
        %v2676 = vpack.c.bf16 %v2551, %v2549
        %v2677 = vpack.c.bf16 %v2556, %v2554
        %v2678 = vpack.c.bf16 %v2650, %v2648
        %v2679 = vpack.c.bf16 %v2655, %v2653
        %v2680 = vpack.c.bf16 %v2669, %v2667
        %v2681 = vpack.c.bf16 %v2674, %v2672
        %v2683 = vsel %vm831, %v2676, 0
        %v2686 = vsel %vm831, %v2677, 0
        %v2689 = vsel %vm831, %v2678, 0
        %v2692 = vsel %vm831, %v2679, 0
        %2694 = vmatpush.bf16.xpose.msra.mxu0 0
        %2695 = vmatpush.bf16.xpose.msra.mxu0 0
        %2696 = vmatpush.bf16.xpose.msra.mxu0 0
        %2697 = vmatpush.bf16.xpose.msra.mxu0 0
        %2698 = vmatpush.bf16.xpose.msra.mxu0 0
        %2699 = vmatpush.bf16.xpose.msra.mxu0 0
        %2700 = vmatpush.bf16.xpose.msra.mxu0 %v2692
        %2701 = vmatpush.bf16.xpose.msra.mxu0 %v2689
        %2702 = vmatmul.bf16.gmra.mxu0 %v2683
        %v2703 = vpop.f32.mrf.mxu0
        %v2704 = vadd.f32 0.0, %v2703
        %v2705 = vpop.f32.mrf.mxu0
        %v2706 = vadd.f32 0.0, %v2705
        %2707 = vmatmul.bf16.gmra.mxu0 %v2686
        %v2708 = vpop.f32.mrf.mxu0
        %v2709 = vadd.f32 0.0, %v2708
        %v2710 = vpop.f32.mrf.mxu0
        %v2711 = vadd.f32 0.0, %v2710
        %2712 = vdwg.mxu0
        %v2713 = vmul.f32 %v2704, 0.125
        %v2714 = vmul.f32 %v2706, 0.125
        %v2715 = vmul.f32 %v2709, 0.125
        %v2716 = vmul.f32 %v2711, 0.125
        %vm2717 = vcmask 261120
        %v2718 = vsel %vm2717, %v2713, -inf
        %2719 = vmax.xlane.f32.xlu0 %v2718
        %v2720 = vpop.xlane.xlu0 %2719
        %v2721 = vsel %vm2717, %v2714, -inf
        %2722 = vmax.xlane.f32.xlu0 %v2721
        %v2723 = vpop.xlane.xlu0 %2722
        %v2724 = vsel %vm2717, %v2715, -inf
        %2725 = vmax.xlane.f32.xlu0 %v2724
        %v2726 = vpop.xlane.xlu0 %2725
        %v2727 = vsel %vm2717, %v2716, -inf
        %2728 = vmax.xlane.f32.xlu0 %v2727
        %v2729 = vpop.xlane.xlu0 %2728
        %v2730 = vsub.f32 %v2713, %v2720
        %v2731 = vsub.f32 %v2714, %v2723
        %v2732 = vsub.f32 %v2715, %v2726
        %v2733 = vsub.f32 %v2716, %v2729
        %v2734 = vmul.f32 %v2730, 1.442695
        %v2735 = vpow.pop %v2734
        %v2736 = vmul.f32 %v2731, 1.442695
        %v2737 = vpow.pop %v2736
        %v2738 = vmul.f32 %v2732, 1.442695
        %v2739 = vpow.pop %v2738
        %v2740 = vmul.f32 %v2733, 1.442695
        %v2741 = vpow.pop %v2740
        %v2742 = vsel %vm2717, %v2735, 0.0
        %2743 = vadd.xlane.f32.xlu0 %v2742
        %v2744 = vpop.xlane.xlu0 %2743
        %v2745 = vsel %vm2717, %v2737, 0.0
        %2746 = vadd.xlane.f32.xlu0 %v2745
        %v2747 = vpop.xlane.xlu0 %2746
        %v2748 = vsel %vm2717, %v2739, 0.0
        %2749 = vadd.xlane.f32.xlu0 %v2748
        %v2750 = vpop.xlane.xlu0 %2749
        %v2751 = vsel %vm2717, %v2741, 0.0
        %2752 = vadd.xlane.f32.xlu0 %v2751
        %v2753 = vpop.xlane.xlu0 %2752
        %v2754 = vrcp.pop %v2744
        %v2755 = vrcp.pop %v2747
        %v2756 = vrcp.pop %v2750
        %v2757 = vrcp.pop %v2753
        %v2758 = vmul.f32 %v2735, %v2754
        %v2759 = vmul.f32 %v2737, %v2755
        %v2760 = vmul.f32 %v2739, %v2756
        %v2761 = vmul.f32 %v2741, %v2757
        %v2762 = vpack.c.bf16 %v2759, %v2758
        %v2763 = vpack.c.bf16 %v2761, %v2760
        %v2765 = vsel %vm2717, %v2762, 0
        %v2768 = vsel %vm2717, %v2763, 0
        %2770 = vmatpush.bf16.msra.mxu0 0
        %2771 = vmatpush.bf16.msra.mxu0 0
        %2772 = vmatpush.bf16.msra.mxu0 0
        %2773 = vmatpush.bf16.msra.mxu0 0
        %2774 = vmatpush.bf16.msra.mxu0 0
        %2775 = vmatpush.bf16.msra.mxu0 0
        %2776 = vmatpush.bf16.msra.mxu0 %v2681
        %2777 = vmatpush.bf16.msra.mxu0 %v2680
        %2778 = vmatmul.bf16.gmra.mxu0 %v2765
        %v2779 = vpop.f32.mrf.mxu0
        %v2780 = vadd.f32 0.0, %v2779
        %v2781 = vpop.f32.mrf.mxu0
        %v2782 = vadd.f32 0.0, %v2781
        %2783 = vmatmul.bf16.gmra.mxu0 %v2768
        %v2784 = vpop.f32.mrf.mxu0
        %v2785 = vadd.f32 0.0, %v2784
        %v2786 = vpop.f32.mrf.mxu0
        %v2787 = vadd.f32 0.0, %v2786
        %2788 = vdwg.mxu0
        %2791 = vrot.lane.b32.xlu0 %v2676, 64
        %v2792 = vpop.permute.xlu0 %2791
        %2793 = vrot.lane.b32.xlu0 %v2677, 64
        %v2794 = vpop.permute.xlu0 %2793
        %2797 = vrot.lane.b32.xlu0 %v2678, 64
        %v2798 = vpop.permute.xlu0 %2797
        %2799 = vrot.lane.b32.xlu0 %v2679, 64
        %v2800 = vpop.permute.xlu0 %2799
        %v2802 = vsel %vm831, %v2792, 0
        %v2805 = vsel %vm831, %v2794, 0
        %v2808 = vsel %vm831, %v2798, 0
        %v2811 = vsel %vm831, %v2800, 0
        %2813 = vmatpush.bf16.xpose.msra.mxu0 0
        %2814 = vmatpush.bf16.xpose.msra.mxu0 0
        %2815 = vmatpush.bf16.xpose.msra.mxu0 0
        %2816 = vmatpush.bf16.xpose.msra.mxu0 0
        %2817 = vmatpush.bf16.xpose.msra.mxu0 0
        %2818 = vmatpush.bf16.xpose.msra.mxu0 0
        %2819 = vmatpush.bf16.xpose.msra.mxu0 %v2811
        %2820 = vmatpush.bf16.xpose.msra.mxu0 %v2808
        %2821 = vmatmul.bf16.gmra.mxu0 %v2802
        %v2822 = vpop.f32.mrf.mxu0
        %v2823 = vadd.f32 0.0, %v2822
        %v2824 = vpop.f32.mrf.mxu0
        %v2825 = vadd.f32 0.0, %v2824
        %2826 = vmatmul.bf16.gmra.mxu0 %v2805
        %v2827 = vpop.f32.mrf.mxu0
        %v2828 = vadd.f32 0.0, %v2827
        %v2829 = vpop.f32.mrf.mxu0
        %v2830 = vadd.f32 0.0, %v2829
        %2831 = vdwg.mxu0
        %v2832 = vmul.f32 %v2823, 0.125
        %v2833 = vmul.f32 %v2825, 0.125
        %v2834 = vmul.f32 %v2828, 0.125
        %v2835 = vmul.f32 %v2830, 0.125
        %v2836 = vsel %vm2717, %v2832, -inf
        %2837 = vmax.xlane.f32.xlu0 %v2836
        %v2838 = vpop.xlane.xlu0 %2837
        %v2839 = vsel %vm2717, %v2833, -inf
        %2840 = vmax.xlane.f32.xlu0 %v2839
        %v2841 = vpop.xlane.xlu0 %2840
        %v2842 = vsel %vm2717, %v2834, -inf
        %2843 = vmax.xlane.f32.xlu0 %v2842
        %v2844 = vpop.xlane.xlu0 %2843
        %v2845 = vsel %vm2717, %v2835, -inf
        %2846 = vmax.xlane.f32.xlu0 %v2845
        %v2847 = vpop.xlane.xlu0 %2846
        %v2848 = vsub.f32 %v2832, %v2838
        %v2849 = vsub.f32 %v2833, %v2841
        %v2850 = vsub.f32 %v2834, %v2844
        %v2851 = vsub.f32 %v2835, %v2847
        %v2852 = vmul.f32 %v2848, 1.442695
        %v2853 = vpow.pop %v2852
        %v2854 = vmul.f32 %v2849, 1.442695
        %v2855 = vpow.pop %v2854
        %v2856 = vmul.f32 %v2850, 1.442695
        %v2857 = vpow.pop %v2856
        %v2858 = vmul.f32 %v2851, 1.442695
        %v2859 = vpow.pop %v2858
        %v2860 = vsel %vm2717, %v2853, 0.0
        %2861 = vadd.xlane.f32.xlu0 %v2860
        %v2862 = vpop.xlane.xlu0 %2861
        %v2863 = vsel %vm2717, %v2855, 0.0
        %2864 = vadd.xlane.f32.xlu0 %v2863
        %v2865 = vpop.xlane.xlu0 %2864
        %v2866 = vsel %vm2717, %v2857, 0.0
        %2867 = vadd.xlane.f32.xlu0 %v2866
        %v2868 = vpop.xlane.xlu0 %2867
        %v2869 = vsel %vm2717, %v2859, 0.0
        %2870 = vadd.xlane.f32.xlu0 %v2869
        %v2871 = vpop.xlane.xlu0 %2870
        %v2872 = vrcp.pop %v2862
        %v2873 = vrcp.pop %v2865
        %v2874 = vrcp.pop %v2868
        %v2875 = vrcp.pop %v2871
        %v2876 = vmul.f32 %v2853, %v2872
        %v2877 = vmul.f32 %v2855, %v2873
        %v2878 = vmul.f32 %v2857, %v2874
        %v2879 = vmul.f32 %v2859, %v2875
        %v2880 = vpack.c.bf16 %v2877, %v2876
        %v2881 = vpack.c.bf16 %v2879, %v2878
        %2884 = vrot.lane.b32.xlu0 %v2680, 64
        %v2885 = vpop.permute.xlu0 %2884
        %2886 = vrot.lane.b32.xlu0 %v2681, 64
        %v2887 = vpop.permute.xlu0 %2886
        %v2891 = vsel %vm2717, %v2880, 0
        %v2894 = vsel %vm2717, %v2881, 0
        %2896 = vmatpush.bf16.msra.mxu0 0
        %2897 = vmatpush.bf16.msra.mxu0 0
        %2898 = vmatpush.bf16.msra.mxu0 0
        %2899 = vmatpush.bf16.msra.mxu0 0
        %2900 = vmatpush.bf16.msra.mxu0 0
        %2901 = vmatpush.bf16.msra.mxu0 0
        %2902 = vmatpush.bf16.msra.mxu0 %v2887
        %2903 = vmatpush.bf16.msra.mxu0 %v2885
        %2904 = vmatmul.bf16.gmra.mxu0 %v2891
        %v2905 = vpop.f32.mrf.mxu0
        %v2906 = vadd.f32 0.0, %v2905
        %v2907 = vpop.f32.mrf.mxu0
        %v2908 = vadd.f32 0.0, %v2907
        %2909 = vmatmul.bf16.gmra.mxu0 %v2894
        %v2910 = vpop.f32.mrf.mxu0
        %v2911 = vadd.f32 0.0, %v2910
        %v2912 = vpop.f32.mrf.mxu0
        %v2913 = vadd.f32 0.0, %v2912
        %2914 = vdwg.mxu0
        %2919 = vrot.lane.b32.xlu0 %v2906, 64
        %v2920 = vpop.permute.xlu0 %2919
        %2921 = vrot.lane.b32.xlu0 %v2908, 64
        %v2922 = vpop.permute.xlu0 %2921
        %2923 = vrot.lane.b32.xlu0 %v2911, 64
        %v2924 = vpop.permute.xlu0 %2923
        %2925 = vrot.lane.b32.xlu0 %v2913, 64
        %v2926 = vpop.permute.xlu0 %2925
        %v2931 = vsel %vm831, %v2780, %v2920
        %v2932 = vsel %vm831, %v2782, %v2922
        %v2933 = vsel %vm831, %v2785, %v2924
        %v2934 = vsel %vm831, %v2787, %v2926
        %v2935 = vpack.c.bf16 %v2932, %v2931
        %v2936 = vpack.c.bf16 %v2934, %v2933
        %v2937 = vperm.slane %v2350, 2
        %v2954 = vunpack.c.l.b16 %v2473
        %v2955 = vunpack.c.l.b16 %v2474
        %v2956 = vunpack.c.l.b16 %v2475
        %v2957 = vunpack.c.l.b16 %v2476
        %v2958 = vunpack.c.l.b16 %v2477
        %v2959 = vunpack.c.l.b16 %v2478
        %v2960 = vunpack.c.l.b16 %v2479
        %v2961 = vunpack.c.l.b16 %v2480
        %v2962 = vunpack.c.l.b16 %v2481
        %v2963 = vunpack.c.l.b16 %v2482
        %v2964 = vunpack.c.l.b16 %v2483
        %v2965 = vunpack.c.l.b16 %v2484
        %v2966 = vunpack.c.l.b16 %v2485
        %v2967 = vunpack.c.l.b16 %v2486
        %v2968 = vunpack.c.l.b16 %v2487
        %v2969 = vunpack.c.l.b16 %v2488
        %v2970 = vpack.c.b16 %v2955, %v2954
        %v2971 = vpack.c.b16 %v2957, %v2956
        %v2972 = vpack.c.b16 %v2959, %v2958
        %v2973 = vpack.c.b16 %v2961, %v2960
        %v2974 = vpack.c.b16 %v2963, %v2962
        %v2975 = vpack.c.b16 %v2965, %v2964
        %v2976 = vpack.c.b16 %v2967, %v2966
        %v2977 = vpack.c.b16 %v2969, %v2968
        %2986 = vmatpush.bf16.msra.mxu0 %v2977
        %2987 = vmatpush.bf16.msra.mxu0 %v2976
        %2988 = vmatpush.bf16.msra.mxu0 %v2975
        %2989 = vmatpush.bf16.msra.mxu0 %v2974
        %2990 = vmatpush.bf16.msra.mxu0 %v2973
        %2991 = vmatpush.bf16.msra.mxu0 %v2972
        %2992 = vmatpush.bf16.msra.mxu0 %v2971
        %2993 = vmatpush.bf16.msra.mxu0 %v2970
        %2994 = vmatmul.bf16.gmra.mxu0 %v2935
        %v2995 = vpop.f32.mrf.mxu0
        %v2996 = vadd.f32 %v2937, %v2995
        %v2997 = vpop.f32.mrf.mxu0
        %v2998 = vadd.f32 %v2937, %v2997
        %2999 = vmatmul.bf16.gmra.mxu0 %v2936
        %v3000 = vpop.f32.mrf.mxu0
        %v3001 = vadd.f32 %v2937, %v3000
        %v3002 = vpop.f32.mrf.mxu0
        %v3003 = vadd.f32 %v2937, %v3002
        %3004 = vdwg.mxu0
        %v3005 = vadd.f32 %v2346, %v2996
        %v3006 = vadd.f32 %v2347, %v2998
        %v3007 = vadd.f32 %v2348, %v3001
        %v3008 = vadd.f32 %v2349, %v3003
        %3009 = vadd.xlane.f32.xlu0 %v3005
        %v3010 = vpop.xlane.xlu0 %3009
        %3011 = vadd.xlane.f32.xlu0 %v3006
        %v3012 = vpop.xlane.xlu0 %3011
        %3013 = vadd.xlane.f32.xlu0 %v3007
        %v3014 = vpop.xlane.xlu0 %3013
        %3015 = vadd.xlane.f32.xlu0 %v3008
        %v3016 = vpop.xlane.xlu0 %3015
        %v3017 = vmul.f32 %v3010, %v748
        %v3018 = vmul.f32 %v3012, %v748
        %v3019 = vmul.f32 %v3014, %v748
        %v3020 = vmul.f32 %v3016, %v748
        %v3021 = vsub.f32 %v3005, %v3017
        %v3022 = vsub.f32 %v3006, %v3018
        %v3023 = vsub.f32 %v3007, %v3019
        %v3024 = vsub.f32 %v3008, %v3020
        %v3025 = vmul.f32 %v3021, %v3021
        %v3026 = vmul.f32 %v3022, %v3022
        %v3027 = vmul.f32 %v3023, %v3023
        %v3028 = vmul.f32 %v3024, %v3024
        %3029 = vadd.xlane.f32.xlu0 %v3025
        %v3030 = vpop.xlane.xlu0 %3029
        %3031 = vadd.xlane.f32.xlu0 %v3026
        %v3032 = vpop.xlane.xlu0 %3031
        %3033 = vadd.xlane.f32.xlu0 %v3027
        %v3034 = vpop.xlane.xlu0 %3033
        %3035 = vadd.xlane.f32.xlu0 %v3028
        %v3036 = vpop.xlane.xlu0 %3035
        %v3037 = vmul.f32 %v3030, %v748
        %v3038 = vmul.f32 %v3032, %v748
        %v3039 = vmul.f32 %v3034, %v748
        %v3040 = vmul.f32 %v3036, %v748
        %v3041 = vadd.f32 %v3037, 1e-05
        %v3042 = vadd.f32 %v3038, 1e-05
        %v3043 = vadd.f32 %v3039, 1e-05
        %v3044 = vadd.f32 %v3040, 1e-05
        %v3045 = vrsqrt.pop %v3041
        %v3046 = vmul.f32 %v3045, %v3041
        %v3047 = vmul.f32 %v3046, %v3045
        %v3048 = vmul.f32 0.5, %v3047
        %v3049 = vsub.f32 1.5, %v3048
        %v3050 = vmul.f32 %v3045, %v3049
        %vm3051 = vweird.f32 %v3041
        %vm3052 = vweird.f32 %v3045
        %vm3053 = vmor %vm3051, %vm3052
        %v3054 = vsel %vm3053, %v3045, %v3050
        %v3055 = vrsqrt.pop %v3042
        %v3056 = vmul.f32 %v3055, %v3042
        %v3057 = vmul.f32 %v3056, %v3055
        %v3058 = vmul.f32 0.5, %v3057
        %v3059 = vsub.f32 1.5, %v3058
        %v3060 = vmul.f32 %v3055, %v3059
        %vm3061 = vweird.f32 %v3042
        %vm3062 = vweird.f32 %v3055
        %vm3063 = vmor %vm3061, %vm3062
        %v3064 = vsel %vm3063, %v3055, %v3060
        %v3065 = vrsqrt.pop %v3043
        %v3066 = vmul.f32 %v3065, %v3043
        %v3067 = vmul.f32 %v3066, %v3065
        %v3068 = vmul.f32 0.5, %v3067
        %v3069 = vsub.f32 1.5, %v3068
        %v3070 = vmul.f32 %v3065, %v3069
        %vm3071 = vweird.f32 %v3043
        %vm3072 = vweird.f32 %v3065
        %vm3073 = vmor %vm3071, %vm3072
        %v3074 = vsel %vm3073, %v3065, %v3070
        %v3075 = vrsqrt.pop %v3044
        %v3076 = vmul.f32 %v3075, %v3044
        %v3077 = vmul.f32 %v3076, %v3075
        %v3078 = vmul.f32 0.5, %v3077
        %v3079 = vsub.f32 1.5, %v3078
        %v3080 = vmul.f32 %v3075, %v3079
        %vm3081 = vweird.f32 %v3044
        %vm3082 = vweird.f32 %v3075
        %vm3083 = vmor %vm3081, %vm3082
        %v3084 = vsel %vm3083, %v3075, %v3080
        %v3085 = vmul.f32 %v3021, %v3054
        %v3086 = vmul.f32 %v3022, %v3064
        %v3087 = vmul.f32 %v3023, %v3074
        %v3088 = vmul.f32 %v3024, %v3084
        %v3089 = vperm.slane %v2350, 3
        %v3090 = vmul.f32 %v3085, %v3089
        %v3091 = vmul.f32 %v3086, %v3089
        %v3092 = vmul.f32 %v3087, %v3089
        %v3093 = vmul.f32 %v3088, %v3089
        %v3094 = vperm.slane %v2350, 4
        %v3095 = vadd.f32 %v3090, %v3094
        %v3096 = vadd.f32 %v3091, %v3094
        %v3097 = vadd.f32 %v3092, %v3094
        %v3098 = vadd.f32 %v3093, %v3094
        %v3099 = vld [vmem:[#allocation17] sm:$0xff]
        %v3100 = vld [vmem:[#allocation17 + $0x8] sm:$0xff]
        %v3101 = vld [vmem:[#allocation17 + $0x10] sm:$0xff]
        %v3102 = vld [vmem:[#allocation17 + $0x18] sm:$0xff]
        %v3103 = vld [vmem:[#allocation17 + $0x20] sm:$0xff]
        %v3104 = vld [vmem:[#allocation17 + $0x28] sm:$0xff]
        %v3105 = vld [vmem:[#allocation17 + $0x30] sm:$0xff]
        %v3106 = vld [vmem:[#allocation17 + $0x38] sm:$0xff]
        %v3107 = vld [vmem:[#allocation17 + $0x40] sm:$0xff]
        %v3108 = vld [vmem:[#allocation17 + $0x48] sm:$0xff]
        %v3109 = vld [vmem:[#allocation17 + $0x50] sm:$0xff]
        %v3110 = vld [vmem:[#allocation17 + $0x58] sm:$0xff]
        %v3111 = vld [vmem:[#allocation17 + $0x60] sm:$0xff]
        %v3112 = vld [vmem:[#allocation17 + $0x68] sm:$0xff]
        %v3113 = vld [vmem:[#allocation17 + $0x70] sm:$0xff]
        %v3114 = vld [vmem:[#allocation17 + $0x78] sm:$0xff]
        %v3115 = vld [vmem:[#allocation17 + $0x80] sm:$0xff]
        %v3116 = vld [vmem:[#allocation17 + $0x88] sm:$0xff]
        %v3117 = vld [vmem:[#allocation17 + $0x90] sm:$0xff]
        %v3118 = vld [vmem:[#allocation17 + $0x98] sm:$0xff]
        %v3119 = vld [vmem:[#allocation17 + $0xa0] sm:$0xff]
        %v3120 = vld [vmem:[#allocation17 + $0xa8] sm:$0xff]
        %v3121 = vld [vmem:[#allocation17 + $0xb0] sm:$0xff]
        %v3122 = vld [vmem:[#allocation17 + $0xb8] sm:$0xff]
        %v3123 = vld [vmem:[#allocation17 + $0xc0] sm:$0xff]
        %v3124 = vld [vmem:[#allocation17 + $0xc8] sm:$0xff]
        %v3125 = vld [vmem:[#allocation17 + $0xd0] sm:$0xff]
        %v3126 = vld [vmem:[#allocation17 + $0xd8] sm:$0xff]
        %v3127 = vld [vmem:[#allocation17 + $0xe0] sm:$0xff]
        %v3128 = vld [vmem:[#allocation17 + $0xe8] sm:$0xff]
        %v3129 = vld [vmem:[#allocation17 + $0xf0] sm:$0xff]
        %v3130 = vld [vmem:[#allocation17 + $0xf8] sm:$0xff]
        %v3131 = vld [vmem:[#allocation17 + $0x100] sm:$0xff]
        %v3132 = vld [vmem:[#allocation17 + $0x108] sm:$0xff]
        %v3133 = vld [vmem:[#allocation17 + $0x110] sm:$0xff]
        %v3134 = vld [vmem:[#allocation17 + $0x118] sm:$0xff]
        %v3135 = vld [vmem:[#allocation17 + $0x120] sm:$0xff]
        %v3136 = vld [vmem:[#allocation17 + $0x128] sm:$0xff]
        %v3137 = vld [vmem:[#allocation17 + $0x130] sm:$0xff]
        %v3138 = vld [vmem:[#allocation17 + $0x138] sm:$0xff]
        %v3139 = vld [vmem:[#allocation17 + $0x140] sm:$0xff]
        %v3140 = vld [vmem:[#allocation17 + $0x148] sm:$0xff]
        %v3141 = vld [vmem:[#allocation17 + $0x150] sm:$0xff]
        %v3142 = vld [vmem:[#allocation17 + $0x158] sm:$0xff]
        %v3143 = vld [vmem:[#allocation17 + $0x160] sm:$0xff]
        %v3144 = vld [vmem:[#allocation17 + $0x168] sm:$0xff]
        %v3145 = vld [vmem:[#allocation17 + $0x170] sm:$0xff]
        %v3146 = vld [vmem:[#allocation17 + $0x178] sm:$0xff]
        %v3147 = vld [vmem:[#allocation17 + $0x180] sm:$0xff]
        %v3148 = vld [vmem:[#allocation17 + $0x188] sm:$0xff]
        %v3149 = vld [vmem:[#allocation17 + $0x190] sm:$0xff]
        %v3150 = vld [vmem:[#allocation17 + $0x198] sm:$0xff]
        %v3151 = vld [vmem:[#allocation17 + $0x1a0] sm:$0xff]
        %v3152 = vld [vmem:[#allocation17 + $0x1a8] sm:$0xff]
        %v3153 = vld [vmem:[#allocation17 + $0x1b0] sm:$0xff]
        %v3154 = vld [vmem:[#allocation17 + $0x1b8] sm:$0xff]
        %v3155 = vld [vmem:[#allocation17 + $0x1c0] sm:$0xff]
        %v3156 = vld [vmem:[#allocation17 + $0x1c8] sm:$0xff]
        %v3157 = vld [vmem:[#allocation17 + $0x1d0] sm:$0xff]
        %v3158 = vld [vmem:[#allocation17 + $0x1d8] sm:$0xff]
        %v3159 = vld [vmem:[#allocation17 + $0x1e0] sm:$0xff]
        %v3160 = vld [vmem:[#allocation17 + $0x1e8] sm:$0xff]
        %v3161 = vld [vmem:[#allocation17 + $0x1f0] sm:$0xff]
        %v3162 = vld [vmem:[#allocation17 + $0x1f8] sm:$0xff]
        %v3163 = vld [vmem:[#allocation13] sm:$0xff]
        %v3164 = vld [vmem:[#allocation19] sm:$0xf]
        %v3165 = vld [vmem:[#allocation19 + $0x4] sm:$0xf]
        %v3166 = vld [vmem:[#allocation19 + $0x8] sm:$0xf]
        %v3167 = vld [vmem:[#allocation19 + $0xc] sm:$0xf]
        %v3168 = vld [vmem:[#allocation19 + $0x10] sm:$0xf]
        %v3169 = vld [vmem:[#allocation19 + $0x14] sm:$0xf]
        %v3170 = vld [vmem:[#allocation19 + $0x18] sm:$0xf]
        %v3171 = vld [vmem:[#allocation19 + $0x1c] sm:$0xf]
        %v3172 = vld [vmem:[#allocation19 + $0x20] sm:$0xf]
        %v3173 = vld [vmem:[#allocation19 + $0x24] sm:$0xf]
        %v3174 = vld [vmem:[#allocation19 + $0x28] sm:$0xf]
        %v3175 = vld [vmem:[#allocation19 + $0x2c] sm:$0xf]
        %v3176 = vld [vmem:[#allocation19 + $0x30] sm:$0xf]
        %v3177 = vld [vmem:[#allocation19 + $0x34] sm:$0xf]
        %v3178 = vld [vmem:[#allocation19 + $0x38] sm:$0xf]
        %v3179 = vld [vmem:[#allocation19 + $0x3c] sm:$0xf]
        %v3180 = vld [vmem:[#allocation19 + $0x40] sm:$0xf]
        %v3181 = vld [vmem:[#allocation19 + $0x44] sm:$0xf]
        %v3182 = vld [vmem:[#allocation19 + $0x48] sm:$0xf]
        %v3183 = vld [vmem:[#allocation19 + $0x4c] sm:$0xf]
        %v3184 = vld [vmem:[#allocation19 + $0x50] sm:$0xf]
        %v3185 = vld [vmem:[#allocation19 + $0x54] sm:$0xf]
        %v3186 = vld [vmem:[#allocation19 + $0x58] sm:$0xf]
        %v3187 = vld [vmem:[#allocation19 + $0x5c] sm:$0xf]
        %v3188 = vld [vmem:[#allocation19 + $0x60] sm:$0xf]
        %v3189 = vld [vmem:[#allocation19 + $0x64] sm:$0xf]
        %v3190 = vld [vmem:[#allocation19 + $0x68] sm:$0xf]
        %v3191 = vld [vmem:[#allocation19 + $0x6c] sm:$0xf]
        %v3192 = vld [vmem:[#allocation19 + $0x70] sm:$0xf]
        %v3193 = vld [vmem:[#allocation19 + $0x74] sm:$0xf]
        %v3194 = vld [vmem:[#allocation19 + $0x78] sm:$0xf]
        %v3195 = vld [vmem:[#allocation19 + $0x7c] sm:$0xf]
        %v3196 = vld [vmem:[#allocation19 + $0x80] sm:$0xf]
        %v3197 = vld [vmem:[#allocation19 + $0x84] sm:$0xf]
        %v3198 = vld [vmem:[#allocation19 + $0x88] sm:$0xf]
        %v3199 = vld [vmem:[#allocation19 + $0x8c] sm:$0xf]
        %v3200 = vld [vmem:[#allocation19 + $0x90] sm:$0xf]
        %v3201 = vld [vmem:[#allocation19 + $0x94] sm:$0xf]
        %v3202 = vld [vmem:[#allocation19 + $0x98] sm:$0xf]
        %v3203 = vld [vmem:[#allocation19 + $0x9c] sm:$0xf]
        %v3204 = vld [vmem:[#allocation19 + $0xa0] sm:$0xf]
        %v3205 = vld [vmem:[#allocation19 + $0xa4] sm:$0xf]
        %v3206 = vld [vmem:[#allocation19 + $0xa8] sm:$0xf]
        %v3207 = vld [vmem:[#allocation19 + $0xac] sm:$0xf]
        %v3208 = vld [vmem:[#allocation19 + $0xb0] sm:$0xf]
        %v3209 = vld [vmem:[#allocation19 + $0xb4] sm:$0xf]
        %v3210 = vld [vmem:[#allocation19 + $0xb8] sm:$0xf]
        %v3211 = vld [vmem:[#allocation19 + $0xbc] sm:$0xf]
        %v3212 = vld [vmem:[#allocation19 + $0xc0] sm:$0xf]
        %v3213 = vld [vmem:[#allocation19 + $0xc4] sm:$0xf]
        %v3214 = vld [vmem:[#allocation19 + $0xc8] sm:$0xf]
        %v3215 = vld [vmem:[#allocation19 + $0xcc] sm:$0xf]
        %v3216 = vld [vmem:[#allocation19 + $0xd0] sm:$0xf]
        %v3217 = vld [vmem:[#allocation19 + $0xd4] sm:$0xf]
        %v3218 = vld [vmem:[#allocation19 + $0xd8] sm:$0xf]
        %v3219 = vld [vmem:[#allocation19 + $0xdc] sm:$0xf]
        %v3220 = vld [vmem:[#allocation19 + $0xe0] sm:$0xf]
        %v3221 = vld [vmem:[#allocation19 + $0xe4] sm:$0xf]
        %v3222 = vld [vmem:[#allocation19 + $0xe8] sm:$0xf]
        %v3223 = vld [vmem:[#allocation19 + $0xec] sm:$0xf]
        %v3224 = vld [vmem:[#allocation19 + $0xf0] sm:$0xf]
        %v3225 = vld [vmem:[#allocation19 + $0xf4] sm:$0xf]
        %v3226 = vld [vmem:[#allocation19 + $0xf8] sm:$0xf]
        %v3227 = vld [vmem:[#allocation19 + $0xfc] sm:$0xf]
        %v3228 = vpack.c.bf16 %v3096, %v3095
        %v3229 = vpack.c.bf16 %v3098, %v3097
        %v3231 = vperm.slane %v3163, 0
        %v3232 = vperm.slane %v3163, 1
        %v3233 = vperm.slane %v3163, 2
        %v3234 = vperm.slane %v3163, 3
        %v3235 = vperm.slane %v3163, 4
        %v3236 = vperm.slane %v3163, 5
        %v3237 = vperm.slane %v3163, 6
        %v3238 = vperm.slane %v3163, 7
        %v3311 = vunpack.c.l.b16 %v3099
        %v3312 = vunpack.c.h.b16 %v3099
        %v3313 = vunpack.c.l.b16 %v3100
        %v3314 = vunpack.c.h.b16 %v3100
        %v3315 = vunpack.c.l.b16 %v3101
        %v3316 = vunpack.c.h.b16 %v3101
        %v3317 = vunpack.c.l.b16 %v3102
        %v3318 = vunpack.c.h.b16 %v3102
        %v3319 = vunpack.c.l.b16 %v3103
        %v3320 = vunpack.c.h.b16 %v3103
        %v3321 = vunpack.c.l.b16 %v3104
        %v3322 = vunpack.c.h.b16 %v3104
        %v3323 = vunpack.c.l.b16 %v3105
        %v3324 = vunpack.c.h.b16 %v3105
        %v3325 = vunpack.c.l.b16 %v3106
        %v3326 = vunpack.c.h.b16 %v3106
        %v3327 = vunpack.c.l.b16 %v3107
        %v3328 = vunpack.c.h.b16 %v3107
        %v3329 = vunpack.c.l.b16 %v3108
        %v3330 = vunpack.c.h.b16 %v3108
        %v3331 = vunpack.c.l.b16 %v3109
        %v3332 = vunpack.c.h.b16 %v3109
        %v3333 = vunpack.c.l.b16 %v3110
        %v3334 = vunpack.c.h.b16 %v3110
        %v3335 = vunpack.c.l.b16 %v3111
        %v3336 = vunpack.c.h.b16 %v3111
        %v3337 = vunpack.c.l.b16 %v3112
        %v3338 = vunpack.c.h.b16 %v3112
        %v3339 = vunpack.c.l.b16 %v3113
        %v3340 = vunpack.c.h.b16 %v3113
        %v3341 = vunpack.c.l.b16 %v3114
        %v3342 = vunpack.c.h.b16 %v3114
        %v3343 = vunpack.c.l.b16 %v3115
        %v3344 = vunpack.c.h.b16 %v3115
        %v3345 = vunpack.c.l.b16 %v3116
        %v3346 = vunpack.c.h.b16 %v3116
        %v3347 = vunpack.c.l.b16 %v3117
        %v3348 = vunpack.c.h.b16 %v3117
        %v3349 = vunpack.c.l.b16 %v3118
        %v3350 = vunpack.c.h.b16 %v3118
        %v3351 = vunpack.c.l.b16 %v3119
        %v3352 = vunpack.c.h.b16 %v3119
        %v3353 = vunpack.c.l.b16 %v3120
        %v3354 = vunpack.c.h.b16 %v3120
        %v3355 = vunpack.c.l.b16 %v3121
        %v3356 = vunpack.c.h.b16 %v3121
        %v3357 = vunpack.c.l.b16 %v3122
        %v3358 = vunpack.c.h.b16 %v3122
        %v3359 = vunpack.c.l.b16 %v3123
        %v3360 = vunpack.c.h.b16 %v3123
        %v3361 = vunpack.c.l.b16 %v3124
        %v3362 = vunpack.c.h.b16 %v3124
        %v3363 = vunpack.c.l.b16 %v3125
        %v3364 = vunpack.c.h.b16 %v3125
        %v3365 = vunpack.c.l.b16 %v3126
        %v3366 = vunpack.c.h.b16 %v3126
        %v3367 = vunpack.c.l.b16 %v3127
        %v3368 = vunpack.c.h.b16 %v3127
        %v3369 = vunpack.c.l.b16 %v3128
        %v3370 = vunpack.c.h.b16 %v3128
        %v3371 = vunpack.c.l.b16 %v3129
        %v3372 = vunpack.c.h.b16 %v3129
        %v3373 = vunpack.c.l.b16 %v3130
        %v3374 = vunpack.c.h.b16 %v3130
        %v3375 = vunpack.c.l.b16 %v3131
        %v3376 = vunpack.c.h.b16 %v3131
        %v3377 = vunpack.c.l.b16 %v3132
        %v3378 = vunpack.c.h.b16 %v3132
        %v3379 = vunpack.c.l.b16 %v3133
        %v3380 = vunpack.c.h.b16 %v3133
        %v3381 = vunpack.c.l.b16 %v3134
        %v3382 = vunpack.c.h.b16 %v3134
        %v3383 = vunpack.c.l.b16 %v3135
        %v3384 = vunpack.c.h.b16 %v3135
        %v3385 = vunpack.c.l.b16 %v3136
        %v3386 = vunpack.c.h.b16 %v3136
        %v3387 = vunpack.c.l.b16 %v3137
        %v3388 = vunpack.c.h.b16 %v3137
        %v3389 = vunpack.c.l.b16 %v3138
        %v3390 = vunpack.c.h.b16 %v3138
        %v3391 = vunpack.c.l.b16 %v3139
        %v3392 = vunpack.c.h.b16 %v3139
        %v3393 = vunpack.c.l.b16 %v3140
        %v3394 = vunpack.c.h.b16 %v3140
        %v3395 = vunpack.c.l.b16 %v3141
        %v3396 = vunpack.c.h.b16 %v3141
        %v3397 = vunpack.c.l.b16 %v3142
        %v3398 = vunpack.c.h.b16 %v3142
        %v3399 = vunpack.c.l.b16 %v3143
        %v3400 = vunpack.c.h.b16 %v3143
        %v3401 = vunpack.c.l.b16 %v3144
        %v3402 = vunpack.c.h.b16 %v3144
        %v3403 = vunpack.c.l.b16 %v3145
        %v3404 = vunpack.c.h.b16 %v3145
        %v3405 = vunpack.c.l.b16 %v3146
        %v3406 = vunpack.c.h.b16 %v3146
        %v3407 = vunpack.c.l.b16 %v3147
        %v3408 = vunpack.c.h.b16 %v3147
        %v3409 = vunpack.c.l.b16 %v3148
        %v3410 = vunpack.c.h.b16 %v3148
        %v3411 = vunpack.c.l.b16 %v3149
        %v3412 = vunpack.c.h.b16 %v3149
        %v3413 = vunpack.c.l.b16 %v3150
        %v3414 = vunpack.c.h.b16 %v3150
        %v3415 = vunpack.c.l.b16 %v3151
        %v3416 = vunpack.c.h.b16 %v3151
        %v3417 = vunpack.c.l.b16 %v3152
        %v3418 = vunpack.c.h.b16 %v3152
        %v3419 = vunpack.c.l.b16 %v3153
        %v3420 = vunpack.c.h.b16 %v3153
        %v3421 = vunpack.c.l.b16 %v3154
        %v3422 = vunpack.c.h.b16 %v3154
        %v3423 = vunpack.c.l.b16 %v3155
        %v3424 = vunpack.c.h.b16 %v3155
        %v3425 = vunpack.c.l.b16 %v3156
        %v3426 = vunpack.c.h.b16 %v3156
        %v3427 = vunpack.c.l.b16 %v3157
        %v3428 = vunpack.c.h.b16 %v3157
        %v3429 = vunpack.c.l.b16 %v3158
        %v3430 = vunpack.c.h.b16 %v3158
        %v3431 = vunpack.c.l.b16 %v3159
        %v3432 = vunpack.c.h.b16 %v3159
        %v3433 = vunpack.c.l.b16 %v3160
        %v3434 = vunpack.c.h.b16 %v3160
        %v3435 = vunpack.c.l.b16 %v3161
        %v3436 = vunpack.c.h.b16 %v3161
        %v3437 = vunpack.c.l.b16 %v3162
        %v3438 = vunpack.c.h.b16 %v3162
        %v3439 = vpack.c.b16 %v3319, %v3311
        %v3440 = vpack.c.b16 %v3320, %v3312
        %v3441 = vpack.c.b16 %v3321, %v3313
        %v3442 = vpack.c.b16 %v3322, %v3314
        %v3443 = vpack.c.b16 %v3323, %v3315
        %v3444 = vpack.c.b16 %v3324, %v3316
        %v3445 = vpack.c.b16 %v3325, %v3317
        %v3446 = vpack.c.b16 %v3326, %v3318
        %v3447 = vpack.c.b16 %v3335, %v3327
        %v3448 = vpack.c.b16 %v3336, %v3328
        %v3449 = vpack.c.b16 %v3337, %v3329
        %v3450 = vpack.c.b16 %v3338, %v3330
        %v3451 = vpack.c.b16 %v3339, %v3331
        %v3452 = vpack.c.b16 %v3340, %v3332
        %v3453 = vpack.c.b16 %v3341, %v3333
        %v3454 = vpack.c.b16 %v3342, %v3334
        %v3455 = vpack.c.b16 %v3351, %v3343
        %v3456 = vpack.c.b16 %v3352, %v3344
        %v3457 = vpack.c.b16 %v3353, %v3345
        %v3458 = vpack.c.b16 %v3354, %v3346
        %v3459 = vpack.c.b16 %v3355, %v3347
        %v3460 = vpack.c.b16 %v3356, %v3348
        %v3461 = vpack.c.b16 %v3357, %v3349
        %v3462 = vpack.c.b16 %v3358, %v3350
        %v3463 = vpack.c.b16 %v3367, %v3359
        %v3464 = vpack.c.b16 %v3368, %v3360
        %v3465 = vpack.c.b16 %v3369, %v3361
        %v3466 = vpack.c.b16 %v3370, %v3362
        %v3467 = vpack.c.b16 %v3371, %v3363
        %v3468 = vpack.c.b16 %v3372, %v3364
        %v3469 = vpack.c.b16 %v3373, %v3365
        %v3470 = vpack.c.b16 %v3374, %v3366
        %v3471 = vpack.c.b16 %v3383, %v3375
        %v3472 = vpack.c.b16 %v3384, %v3376
        %v3473 = vpack.c.b16 %v3385, %v3377
        %v3474 = vpack.c.b16 %v3386, %v3378
        %v3475 = vpack.c.b16 %v3387, %v3379
        %v3476 = vpack.c.b16 %v3388, %v3380
        %v3477 = vpack.c.b16 %v3389, %v3381
        %v3478 = vpack.c.b16 %v3390, %v3382
        %v3479 = vpack.c.b16 %v3399, %v3391
        %v3480 = vpack.c.b16 %v3400, %v3392
        %v3481 = vpack.c.b16 %v3401, %v3393
        %v3482 = vpack.c.b16 %v3402, %v3394
        %v3483 = vpack.c.b16 %v3403, %v3395
        %v3484 = vpack.c.b16 %v3404, %v3396
        %v3485 = vpack.c.b16 %v3405, %v3397
        %v3486 = vpack.c.b16 %v3406, %v3398
        %v3487 = vpack.c.b16 %v3415, %v3407
        %v3488 = vpack.c.b16 %v3416, %v3408
        %v3489 = vpack.c.b16 %v3417, %v3409
        %v3490 = vpack.c.b16 %v3418, %v3410
        %v3491 = vpack.c.b16 %v3419, %v3411
        %v3492 = vpack.c.b16 %v3420, %v3412
        %v3493 = vpack.c.b16 %v3421, %v3413
        %v3494 = vpack.c.b16 %v3422, %v3414
        %v3495 = vpack.c.b16 %v3431, %v3423
        %v3496 = vpack.c.b16 %v3432, %v3424
        %v3497 = vpack.c.b16 %v3433, %v3425
        %v3498 = vpack.c.b16 %v3434, %v3426
        %v3499 = vpack.c.b16 %v3435, %v3427
        %v3500 = vpack.c.b16 %v3436, %v3428
        %v3501 = vpack.c.b16 %v3437, %v3429
        %v3502 = vpack.c.b16 %v3438, %v3430
        %3567 = vmatpush.bf16.msra.mxu0 %v3495
        %3568 = vmatpush.bf16.msra.mxu0 %v3487
        %3569 = vmatpush.bf16.msra.mxu0 %v3479
        %3570 = vmatpush.bf16.msra.mxu0 %v3471
        %3571 = vmatpush.bf16.msra.mxu0 %v3463
        %3572 = vmatpush.bf16.msra.mxu0 %v3455
        %3573 = vmatpush.bf16.msra.mxu0 %v3447
        %3574 = vmatpush.bf16.msra.mxu0 %v3439
        %3575 = vmatmul.bf16.gmra.mxu0 %v3228
        %v3576 = vpop.f32.mrf.mxu0
        %v3577 = vadd.f32 %v3231, %v3576
        %v3578 = vpop.f32.mrf.mxu0
        %v3579 = vadd.f32 %v3231, %v3578
        %3580 = vmatmul.bf16.gmra.mxu0 %v3229
        %v3581 = vpop.f32.mrf.mxu0
        %v3582 = vadd.f32 %v3231, %v3581
        %v3583 = vpop.f32.mrf.mxu0
        %v3584 = vadd.f32 %v3231, %v3583
        %3585 = vdwg.mxu0
        %3586 = vmatpush.bf16.msra.mxu0 %v3496
        %3587 = vmatpush.bf16.msra.mxu0 %v3488
        %3588 = vmatpush.bf16.msra.mxu0 %v3480
        %3589 = vmatpush.bf16.msra.mxu0 %v3472
        %3590 = vmatpush.bf16.msra.mxu0 %v3464
        %3591 = vmatpush.bf16.msra.mxu0 %v3456
        %3592 = vmatpush.bf16.msra.mxu0 %v3448
        %3593 = vmatpush.bf16.msra.mxu0 %v3440
        %3594 = vmatmul.bf16.gmra.mxu0 %v3228
        %v3595 = vpop.f32.mrf.mxu0
        %v3596 = vadd.f32 %v3232, %v3595
        %v3597 = vpop.f32.mrf.mxu0
        %v3598 = vadd.f32 %v3232, %v3597
        %3599 = vmatmul.bf16.gmra.mxu0 %v3229
        %v3600 = vpop.f32.mrf.mxu0
        %v3601 = vadd.f32 %v3232, %v3600
        %v3602 = vpop.f32.mrf.mxu0
        %v3603 = vadd.f32 %v3232, %v3602
        %3604 = vdwg.mxu0
        %3605 = vmatpush.bf16.msra.mxu0 %v3497
        %3606 = vmatpush.bf16.msra.mxu0 %v3489
        %3607 = vmatpush.bf16.msra.mxu0 %v3481
        %3608 = vmatpush.bf16.msra.mxu0 %v3473
        %3609 = vmatpush.bf16.msra.mxu0 %v3465
        %3610 = vmatpush.bf16.msra.mxu0 %v3457
        %3611 = vmatpush.bf16.msra.mxu0 %v3449
        %3612 = vmatpush.bf16.msra.mxu0 %v3441
        %3613 = vmatmul.bf16.gmra.mxu0 %v3228
        %v3614 = vpop.f32.mrf.mxu0
        %v3615 = vadd.f32 %v3233, %v3614
        %v3616 = vpop.f32.mrf.mxu0
        %v3617 = vadd.f32 %v3233, %v3616
        %3618 = vmatmul.bf16.gmra.mxu0 %v3229
        %v3619 = vpop.f32.mrf.mxu0
        %v3620 = vadd.f32 %v3233, %v3619
        %v3621 = vpop.f32.mrf.mxu0
        %v3622 = vadd.f32 %v3233, %v3621
        %3623 = vdwg.mxu0
        %3624 = vmatpush.bf16.msra.mxu0 %v3498
        %3625 = vmatpush.bf16.msra.mxu0 %v3490
        %3626 = vmatpush.bf16.msra.mxu0 %v3482
        %3627 = vmatpush.bf16.msra.mxu0 %v3474
        %3628 = vmatpush.bf16.msra.mxu0 %v3466
        %3629 = vmatpush.bf16.msra.mxu0 %v3458
        %3630 = vmatpush.bf16.msra.mxu0 %v3450
        %3631 = vmatpush.bf16.msra.mxu0 %v3442
        %3632 = vmatmul.bf16.gmra.mxu0 %v3228
        %v3633 = vpop.f32.mrf.mxu0
        %v3634 = vadd.f32 %v3234, %v3633
        %v3635 = vpop.f32.mrf.mxu0
        %v3636 = vadd.f32 %v3234, %v3635
        %3637 = vmatmul.bf16.gmra.mxu0 %v3229
        %v3638 = vpop.f32.mrf.mxu0
        %v3639 = vadd.f32 %v3234, %v3638
        %v3640 = vpop.f32.mrf.mxu0
        %v3641 = vadd.f32 %v3234, %v3640
        %3642 = vdwg.mxu0
        %3643 = vmatpush.bf16.msra.mxu0 %v3499
        %3644 = vmatpush.bf16.msra.mxu0 %v3491
        %3645 = vmatpush.bf16.msra.mxu0 %v3483
        %3646 = vmatpush.bf16.msra.mxu0 %v3475
        %3647 = vmatpush.bf16.msra.mxu0 %v3467
        %3648 = vmatpush.bf16.msra.mxu0 %v3459
        %3649 = vmatpush.bf16.msra.mxu0 %v3451
        %3650 = vmatpush.bf16.msra.mxu0 %v3443
        %3651 = vmatmul.bf16.gmra.mxu0 %v3228
        %v3652 = vpop.f32.mrf.mxu0
        %v3653 = vadd.f32 %v3235, %v3652
        %v3654 = vpop.f32.mrf.mxu0
        %v3655 = vadd.f32 %v3235, %v3654
        %3656 = vmatmul.bf16.gmra.mxu0 %v3229
        %v3657 = vpop.f32.mrf.mxu0
        %v3658 = vadd.f32 %v3235, %v3657
        %v3659 = vpop.f32.mrf.mxu0
        %v3660 = vadd.f32 %v3235, %v3659
        %3661 = vdwg.mxu0
        %3662 = vmatpush.bf16.msra.mxu0 %v3500
        %3663 = vmatpush.bf16.msra.mxu0 %v3492
        %3664 = vmatpush.bf16.msra.mxu0 %v3484
        %3665 = vmatpush.bf16.msra.mxu0 %v3476
        %3666 = vmatpush.bf16.msra.mxu0 %v3468
        %3667 = vmatpush.bf16.msra.mxu0 %v3460
        %3668 = vmatpush.bf16.msra.mxu0 %v3452
        %3669 = vmatpush.bf16.msra.mxu0 %v3444
        %3670 = vmatmul.bf16.gmra.mxu0 %v3228
        %v3671 = vpop.f32.mrf.mxu0
        %v3672 = vadd.f32 %v3236, %v3671
        %v3673 = vpop.f32.mrf.mxu0
        %v3674 = vadd.f32 %v3236, %v3673
        %3675 = vmatmul.bf16.gmra.mxu0 %v3229
        %v3676 = vpop.f32.mrf.mxu0
        %v3677 = vadd.f32 %v3236, %v3676
        %v3678 = vpop.f32.mrf.mxu0
        %v3679 = vadd.f32 %v3236, %v3678
        %3680 = vdwg.mxu0
        %3681 = vmatpush.bf16.msra.mxu0 %v3501
        %3682 = vmatpush.bf16.msra.mxu0 %v3493
        %3683 = vmatpush.bf16.msra.mxu0 %v3485
        %3684 = vmatpush.bf16.msra.mxu0 %v3477
        %3685 = vmatpush.bf16.msra.mxu0 %v3469
        %3686 = vmatpush.bf16.msra.mxu0 %v3461
        %3687 = vmatpush.bf16.msra.mxu0 %v3453
        %3688 = vmatpush.bf16.msra.mxu0 %v3445
        %3689 = vmatmul.bf16.gmra.mxu0 %v3228
        %v3690 = vpop.f32.mrf.mxu0
        %v3691 = vadd.f32 %v3237, %v3690
        %v3692 = vpop.f32.mrf.mxu0
        %v3693 = vadd.f32 %v3237, %v3692
        %3694 = vmatmul.bf16.gmra.mxu0 %v3229
        %v3695 = vpop.f32.mrf.mxu0
        %v3696 = vadd.f32 %v3237, %v3695
        %v3697 = vpop.f32.mrf.mxu0
        %v3698 = vadd.f32 %v3237, %v3697
        %3699 = vdwg.mxu0
        %3700 = vmatpush.bf16.msra.mxu0 %v3502
        %3701 = vmatpush.bf16.msra.mxu0 %v3494
        %3702 = vmatpush.bf16.msra.mxu0 %v3486
        %3703 = vmatpush.bf16.msra.mxu0 %v3478
        %3704 = vmatpush.bf16.msra.mxu0 %v3470
        %3705 = vmatpush.bf16.msra.mxu0 %v3462
        %3706 = vmatpush.bf16.msra.mxu0 %v3454
        %3707 = vmatpush.bf16.msra.mxu0 %v3446
        %3708 = vmatmul.bf16.gmra.mxu0 %v3228
        %v3709 = vpop.f32.mrf.mxu0
        %v3710 = vadd.f32 %v3238, %v3709
        %v3711 = vpop.f32.mrf.mxu0
        %v3712 = vadd.f32 %v3238, %v3711
        %3713 = vmatmul.bf16.gmra.mxu0 %v3229
        %v3714 = vpop.f32.mrf.mxu0
        %v3715 = vadd.f32 %v3238, %v3714
        %v3716 = vpop.f32.mrf.mxu0
        %v3717 = vadd.f32 %v3238, %v3716
        %3718 = vdwg.mxu0
        %v3719 = vmul.f32 %v3653, %v3653
        %v3720 = vmul.f32 %v3672, %v3672
        %v3721 = vmul.f32 %v3691, %v3691
        %v3722 = vmul.f32 %v3710, %v3710
        %v3723 = vmul.f32 %v3655, %v3655
        %v3724 = vmul.f32 %v3674, %v3674
        %v3725 = vmul.f32 %v3693, %v3693
        %v3726 = vmul.f32 %v3712, %v3712
        %v3727 = vmul.f32 %v3658, %v3658
        %v3728 = vmul.f32 %v3677, %v3677
        %v3729 = vmul.f32 %v3696, %v3696
        %v3730 = vmul.f32 %v3715, %v3715
        %v3731 = vmul.f32 %v3660, %v3660
        %v3732 = vmul.f32 %v3679, %v3679
        %v3733 = vmul.f32 %v3698, %v3698
        %v3734 = vmul.f32 %v3717, %v3717
        %v3735 = vmul.f32 %v3653, %v3719
        %v3736 = vmul.f32 %v3672, %v3720
        %v3737 = vmul.f32 %v3691, %v3721
        %v3738 = vmul.f32 %v3710, %v3722
        %v3739 = vmul.f32 %v3655, %v3723
        %v3740 = vmul.f32 %v3674, %v3724
        %v3741 = vmul.f32 %v3693, %v3725
        %v3742 = vmul.f32 %v3712, %v3726
        %v3743 = vmul.f32 %v3658, %v3727
        %v3744 = vmul.f32 %v3677, %v3728
        %v3745 = vmul.f32 %v3696, %v3729
        %v3746 = vmul.f32 %v3715, %v3730
        %v3747 = vmul.f32 %v3660, %v3731
        %v3748 = vmul.f32 %v3679, %v3732
        %v3749 = vmul.f32 %v3698, %v3733
        %v3750 = vmul.f32 %v3717, %v3734
        %v3751 = vmul.f32 %v3735, 0.044715
        %v3752 = vmul.f32 %v3736, 0.044715
        %v3753 = vmul.f32 %v3737, 0.044715
        %v3754 = vmul.f32 %v3738, 0.044715
        %v3755 = vmul.f32 %v3739, 0.044715
        %v3756 = vmul.f32 %v3740, 0.044715
        %v3757 = vmul.f32 %v3741, 0.044715
        %v3758 = vmul.f32 %v3742, 0.044715
        %v3759 = vmul.f32 %v3743, 0.044715
        %v3760 = vmul.f32 %v3744, 0.044715
        %v3761 = vmul.f32 %v3745, 0.044715
        %v3762 = vmul.f32 %v3746, 0.044715
        %v3763 = vmul.f32 %v3747, 0.044715
        %v3764 = vmul.f32 %v3748, 0.044715
        %v3765 = vmul.f32 %v3749, 0.044715
        %v3766 = vmul.f32 %v3750, 0.044715
        %v3767 = vadd.f32 %v3653, %v3751
        %v3768 = vadd.f32 %v3672, %v3752
        %v3769 = vadd.f32 %v3691, %v3753
        %v3770 = vadd.f32 %v3710, %v3754
        %v3771 = vadd.f32 %v3655, %v3755
        %v3772 = vadd.f32 %v3674, %v3756
        %v3773 = vadd.f32 %v3693, %v3757
        %v3774 = vadd.f32 %v3712, %v3758
        %v3775 = vadd.f32 %v3658, %v3759
        %v3776 = vadd.f32 %v3677, %v3760
        %v3777 = vadd.f32 %v3696, %v3761
        %v3778 = vadd.f32 %v3715, %v3762
        %v3779 = vadd.f32 %v3660, %v3763
        %v3780 = vadd.f32 %v3679, %v3764
        %v3781 = vadd.f32 %v3698, %v3765
        %v3782 = vadd.f32 %v3717, %v3766
        %v3783 = vmul.f32 %v3767, 0.7978846
        %v3784 = vmul.f32 %v3768, 0.7978846
        %v3785 = vmul.f32 %v3769, 0.7978846
        %v3786 = vmul.f32 %v3770, 0.7978846
        %v3787 = vmul.f32 %v3771, 0.7978846
        %v3788 = vmul.f32 %v3772, 0.7978846
        %v3789 = vmul.f32 %v3773, 0.7978846
        %v3790 = vmul.f32 %v3774, 0.7978846
        %v3791 = vmul.f32 %v3775, 0.7978846
        %v3792 = vmul.f32 %v3776, 0.7978846
        %v3793 = vmul.f32 %v3777, 0.7978846
        %v3794 = vmul.f32 %v3778, 0.7978846
        %v3795 = vmul.f32 %v3779, 0.7978846
        %v3796 = vmul.f32 %v3780, 0.7978846
        %v3797 = vmul.f32 %v3781, 0.7978846
        %v3798 = vmul.f32 %v3782, 0.7978846
        %v3799 = vtanh.pop %v3783
        %v3800 = vtanh.pop %v3784
        %v3801 = vtanh.pop %v3785
        %v3802 = vtanh.pop %v3786
        %v3803 = vtanh.pop %v3787
        %v3804 = vtanh.pop %v3788
        %v3805 = vtanh.pop %v3789
        %v3806 = vtanh.pop %v3790
        %v3807 = vtanh.pop %v3791
        %v3808 = vtanh.pop %v3792
        %v3809 = vtanh.pop %v3793
        %v3810 = vtanh.pop %v3794
        %v3811 = vtanh.pop %v3795
        %v3812 = vtanh.pop %v3796
        %v3813 = vtanh.pop %v3797
        %v3814 = vtanh.pop %v3798
        %v3815 = vadd.f32 %v3799, 1.0
        %v3816 = vadd.f32 %v3800, 1.0
        %v3817 = vadd.f32 %v3801, 1.0
        %v3818 = vadd.f32 %v3802, 1.0
        %v3819 = vadd.f32 %v3803, 1.0
        %v3820 = vadd.f32 %v3804, 1.0
        %v3821 = vadd.f32 %v3805, 1.0
        %v3822 = vadd.f32 %v3806, 1.0
        %v3823 = vadd.f32 %v3807, 1.0
        %v3824 = vadd.f32 %v3808, 1.0
        %v3825 = vadd.f32 %v3809, 1.0
        %v3826 = vadd.f32 %v3810, 1.0
        %v3827 = vadd.f32 %v3811, 1.0
        %v3828 = vadd.f32 %v3812, 1.0
        %v3829 = vadd.f32 %v3813, 1.0
        %v3830 = vadd.f32 %v3814, 1.0
        %v3831 = vmul.f32 %v3815, 0.5
        %v3832 = vmul.f32 %v3816, 0.5
        %v3833 = vmul.f32 %v3817, 0.5
        %v3834 = vmul.f32 %v3818, 0.5
        %v3835 = vmul.f32 %v3819, 0.5
        %v3836 = vmul.f32 %v3820, 0.5
        %v3837 = vmul.f32 %v3821, 0.5
        %v3838 = vmul.f32 %v3822, 0.5
        %v3839 = vmul.f32 %v3823, 0.5
        %v3840 = vmul.f32 %v3824, 0.5
        %v3841 = vmul.f32 %v3825, 0.5
        %v3842 = vmul.f32 %v3826, 0.5
        %v3843 = vmul.f32 %v3827, 0.5
        %v3844 = vmul.f32 %v3828, 0.5
        %v3845 = vmul.f32 %v3829, 0.5
        %v3846 = vmul.f32 %v3830, 0.5
        %v3847 = vmul.f32 %v3653, %v3831
        %v3848 = vmul.f32 %v3672, %v3832
        %v3849 = vmul.f32 %v3691, %v3833
        %v3850 = vmul.f32 %v3710, %v3834
        %v3851 = vmul.f32 %v3655, %v3835
        %v3852 = vmul.f32 %v3674, %v3836
        %v3853 = vmul.f32 %v3693, %v3837
        %v3854 = vmul.f32 %v3712, %v3838
        %v3855 = vmul.f32 %v3658, %v3839
        %v3856 = vmul.f32 %v3677, %v3840
        %v3857 = vmul.f32 %v3696, %v3841
        %v3858 = vmul.f32 %v3715, %v3842
        %v3859 = vmul.f32 %v3660, %v3843
        %v3860 = vmul.f32 %v3679, %v3844
        %v3861 = vmul.f32 %v3698, %v3845
        %v3862 = vmul.f32 %v3717, %v3846
        %v3863 = vmul.f32 %v3577, %v3847
        %v3864 = vmul.f32 %v3596, %v3848
        %v3865 = vmul.f32 %v3615, %v3849
        %v3866 = vmul.f32 %v3634, %v3850
        %v3867 = vmul.f32 %v3579, %v3851
        %v3868 = vmul.f32 %v3598, %v3852
        %v3869 = vmul.f32 %v3617, %v3853
        %v3870 = vmul.f32 %v3636, %v3854
        %v3871 = vmul.f32 %v3582, %v3855
        %v3872 = vmul.f32 %v3601, %v3856
        %v3873 = vmul.f32 %v3620, %v3857
        %v3874 = vmul.f32 %v3639, %v3858
        %v3875 = vmul.f32 %v3584, %v3859
        %v3876 = vmul.f32 %v3603, %v3860
        %v3877 = vmul.f32 %v3622, %v3861
        %v3878 = vmul.f32 %v3641, %v3862
        %v3879 = vpack.c.bf16 %v3867, %v3863
        %v3880 = vpack.c.bf16 %v3868, %v3864
        %v3881 = vpack.c.bf16 %v3869, %v3865
        %v3882 = vpack.c.bf16 %v3870, %v3866
        %v3883 = vpack.c.bf16 %v3875, %v3871
        %v3884 = vpack.c.bf16 %v3876, %v3872
        %v3885 = vpack.c.bf16 %v3877, %v3873
        %v3886 = vpack.c.bf16 %v3878, %v3874
        %v3887 = vperm.slane %v2350, 5
        %v3952 = vunpack.c.l.b16 %v3164
        %v3953 = vunpack.c.l.b16 %v3165
        %v3954 = vunpack.c.l.b16 %v3166
        %v3955 = vunpack.c.l.b16 %v3167
        %v3956 = vunpack.c.l.b16 %v3168
        %v3957 = vunpack.c.l.b16 %v3169
        %v3958 = vunpack.c.l.b16 %v3170
        %v3959 = vunpack.c.l.b16 %v3171
        %v3960 = vunpack.c.l.b16 %v3172
        %v3961 = vunpack.c.l.b16 %v3173
        %v3962 = vunpack.c.l.b16 %v3174
        %v3963 = vunpack.c.l.b16 %v3175
        %v3964 = vunpack.c.l.b16 %v3176
        %v3965 = vunpack.c.l.b16 %v3177
        %v3966 = vunpack.c.l.b16 %v3178
        %v3967 = vunpack.c.l.b16 %v3179
        %v3968 = vunpack.c.l.b16 %v3180
        %v3969 = vunpack.c.l.b16 %v3181
        %v3970 = vunpack.c.l.b16 %v3182
        %v3971 = vunpack.c.l.b16 %v3183
        %v3972 = vunpack.c.l.b16 %v3184
        %v3973 = vunpack.c.l.b16 %v3185
        %v3974 = vunpack.c.l.b16 %v3186
        %v3975 = vunpack.c.l.b16 %v3187
        %v3976 = vunpack.c.l.b16 %v3188
        %v3977 = vunpack.c.l.b16 %v3189
        %v3978 = vunpack.c.l.b16 %v3190
        %v3979 = vunpack.c.l.b16 %v3191
        %v3980 = vunpack.c.l.b16 %v3192
        %v3981 = vunpack.c.l.b16 %v3193
        %v3982 = vunpack.c.l.b16 %v3194
        %v3983 = vunpack.c.l.b16 %v3195
        %v3984 = vunpack.c.l.b16 %v3196
        %v3985 = vunpack.c.l.b16 %v3197
        %v3986 = vunpack.c.l.b16 %v3198
        %v3987 = vunpack.c.l.b16 %v3199
        %v3988 = vunpack.c.l.b16 %v3200
        %v3989 = vunpack.c.l.b16 %v3201
        %v3990 = vunpack.c.l.b16 %v3202
        %v3991 = vunpack.c.l.b16 %v3203
        %v3992 = vunpack.c.l.b16 %v3204
        %v3993 = vunpack.c.l.b16 %v3205
        %v3994 = vunpack.c.l.b16 %v3206
        %v3995 = vunpack.c.l.b16 %v3207
        %v3996 = vunpack.c.l.b16 %v3208
        %v3997 = vunpack.c.l.b16 %v3209
        %v3998 = vunpack.c.l.b16 %v3210
        %v3999 = vunpack.c.l.b16 %v3211
        %v4000 = vunpack.c.l.b16 %v3212
        %v4001 = vunpack.c.l.b16 %v3213
        %v4002 = vunpack.c.l.b16 %v3214
        %v4003 = vunpack.c.l.b16 %v3215
        %v4004 = vunpack.c.l.b16 %v3216
        %v4005 = vunpack.c.l.b16 %v3217
        %v4006 = vunpack.c.l.b16 %v3218
        %v4007 = vunpack.c.l.b16 %v3219
        %v4008 = vunpack.c.l.b16 %v3220
        %v4009 = vunpack.c.l.b16 %v3221
        %v4010 = vunpack.c.l.b16 %v3222
        %v4011 = vunpack.c.l.b16 %v3223
        %v4012 = vunpack.c.l.b16 %v3224
        %v4013 = vunpack.c.l.b16 %v3225
        %v4014 = vunpack.c.l.b16 %v3226
        %v4015 = vunpack.c.l.b16 %v3227
        %v4016 = vpack.c.b16 %v3953, %v3952
        %v4017 = vpack.c.b16 %v3955, %v3954
        %v4018 = vpack.c.b16 %v3957, %v3956
        %v4019 = vpack.c.b16 %v3959, %v3958
        %v4020 = vpack.c.b16 %v3961, %v3960
        %v4021 = vpack.c.b16 %v3963, %v3962
        %v4022 = vpack.c.b16 %v3965, %v3964
        %v4023 = vpack.c.b16 %v3967, %v3966
        %v4024 = vpack.c.b16 %v3969, %v3968
        %v4025 = vpack.c.b16 %v3971, %v3970
        %v4026 = vpack.c.b16 %v3973, %v3972
        %v4027 = vpack.c.b16 %v3975, %v3974
        %v4028 = vpack.c.b16 %v3977, %v3976
        %v4029 = vpack.c.b16 %v3979, %v3978
        %v4030 = vpack.c.b16 %v3981, %v3980
        %v4031 = vpack.c.b16 %v3983, %v3982
        %v4032 = vpack.c.b16 %v3985, %v3984
        %v4033 = vpack.c.b16 %v3987, %v3986
        %v4034 = vpack.c.b16 %v3989, %v3988
        %v4035 = vpack.c.b16 %v3991, %v3990
        %v4036 = vpack.c.b16 %v3993, %v3992
        %v4037 = vpack.c.b16 %v3995, %v3994
        %v4038 = vpack.c.b16 %v3997, %v3996
        %v4039 = vpack.c.b16 %v3999, %v3998
        %v4040 = vpack.c.b16 %v4001, %v4000
        %v4041 = vpack.c.b16 %v4003, %v4002
        %v4042 = vpack.c.b16 %v4005, %v4004
        %v4043 = vpack.c.b16 %v4007, %v4006
        %v4044 = vpack.c.b16 %v4009, %v4008
        %v4045 = vpack.c.b16 %v4011, %v4010
        %v4046 = vpack.c.b16 %v4013, %v4012
        %v4047 = vpack.c.b16 %v4015, %v4014
        %4080 = vmatpush.bf16.msra.mxu0 %v4023
        %4081 = vmatpush.bf16.msra.mxu0 %v4022
        %4082 = vmatpush.bf16.msra.mxu0 %v4021
        %4083 = vmatpush.bf16.msra.mxu0 %v4020
        %4084 = vmatpush.bf16.msra.mxu0 %v4019
        %4085 = vmatpush.bf16.msra.mxu0 %v4018
        %4086 = vmatpush.bf16.msra.mxu0 %v4017
        %4087 = vmatpush.bf16.msra.mxu0 %v4016
        %4088 = vmatmul.bf16.gmra.mxu0 %v3879
        %v4089 = vpop.f32.mrf.mxu0
        %v4090 = vadd.f32 %v3887, %v4089
        %v4091 = vpop.f32.mrf.mxu0
        %v4092 = vadd.f32 %v3887, %v4091
        %4093 = vmatmul.bf16.gmra.mxu0 %v3883
        %v4094 = vpop.f32.mrf.mxu0
        %v4095 = vadd.f32 %v3887, %v4094
        %v4096 = vpop.f32.mrf.mxu0
        %v4097 = vadd.f32 %v3887, %v4096
        %4098 = vdwg.mxu0
        %4099 = vmatpush.bf16.msra.mxu0 %v4031
        %4100 = vmatpush.bf16.msra.mxu0 %v4030
        %4101 = vmatpush.bf16.msra.mxu0 %v4029
        %4102 = vmatpush.bf16.msra.mxu0 %v4028
        %4103 = vmatpush.bf16.msra.mxu0 %v4027
        %4104 = vmatpush.bf16.msra.mxu0 %v4026
        %4105 = vmatpush.bf16.msra.mxu0 %v4025
        %4106 = vmatpush.bf16.msra.mxu0 %v4024
        %4107 = vmatmul.bf16.gmra.mxu0 %v3880
        %v4108 = vpop.f32.mrf.mxu0
        %v4109 = vadd.f32 %v4090, %v4108
        %v4110 = vpop.f32.mrf.mxu0
        %v4111 = vadd.f32 %v4092, %v4110
        %4112 = vmatmul.bf16.gmra.mxu0 %v3884
        %v4113 = vpop.f32.mrf.mxu0
        %v4114 = vadd.f32 %v4095, %v4113
        %v4115 = vpop.f32.mrf.mxu0
        %v4116 = vadd.f32 %v4097, %v4115
        %4117 = vdwg.mxu0
        %4118 = vmatpush.bf16.msra.mxu0 %v4039
        %4119 = vmatpush.bf16.msra.mxu0 %v4038
        %4120 = vmatpush.bf16.msra.mxu0 %v4037
        %4121 = vmatpush.bf16.msra.mxu0 %v4036
        %4122 = vmatpush.bf16.msra.mxu0 %v4035
        %4123 = vmatpush.bf16.msra.mxu0 %v4034
        %4124 = vmatpush.bf16.msra.mxu0 %v4033
        %4125 = vmatpush.bf16.msra.mxu0 %v4032
        %4126 = vmatmul.bf16.gmra.mxu0 %v3881
        %v4127 = vpop.f32.mrf.mxu0
        %v4128 = vadd.f32 %v4109, %v4127
        %v4129 = vpop.f32.mrf.mxu0
        %v4130 = vadd.f32 %v4111, %v4129
        %4131 = vmatmul.bf16.gmra.mxu0 %v3885
        %v4132 = vpop.f32.mrf.mxu0
        %v4133 = vadd.f32 %v4114, %v4132
        %v4134 = vpop.f32.mrf.mxu0
        %v4135 = vadd.f32 %v4116, %v4134
        %4136 = vdwg.mxu0
        %4137 = vmatpush.bf16.msra.mxu0 %v4047
        %4138 = vmatpush.bf16.msra.mxu0 %v4046
        %4139 = vmatpush.bf16.msra.mxu0 %v4045
        %4140 = vmatpush.bf16.msra.mxu0 %v4044
        %4141 = vmatpush.bf16.msra.mxu0 %v4043
        %4142 = vmatpush.bf16.msra.mxu0 %v4042
        %4143 = vmatpush.bf16.msra.mxu0 %v4041
        %4144 = vmatpush.bf16.msra.mxu0 %v4040
        %4145 = vmatmul.bf16.gmra.mxu0 %v3882
        %v4146 = vpop.f32.mrf.mxu0
        %v4147 = vadd.f32 %v4128, %v4146
        %v4148 = vpop.f32.mrf.mxu0
        %v4149 = vadd.f32 %v4130, %v4148
        %4150 = vmatmul.bf16.gmra.mxu0 %v3886
        %v4151 = vpop.f32.mrf.mxu0
        %v4152 = vadd.f32 %v4133, %v4151
        %v4153 = vpop.f32.mrf.mxu0
        %v4154 = vadd.f32 %v4135, %v4153
        %4155 = vdwg.mxu0
        %v4156 = vadd.f32 %v3005, %v4147
        %v4157 = vadd.f32 %v3006, %v4149
        %v4158 = vadd.f32 %v3007, %v4152
        %v4159 = vadd.f32 %v3008, %v4154
        %4160 = vst [vmem:[%s719] sm:$0xff] %v4156
        %4161 = vst [vmem:[%s719 + $0x8] sm:$0xff] %v4157
        %4162 = vst [vmem:[%s719 + $0x10] sm:$0xff] %v4158
        %4163 = vst [vmem:[%s719 + $0x18] sm:$0xff] %v4159
        %s4164 = sand.u32 %s407, 1
        %s4165 = scalar_lea.sflag [#allocation4], %s4164
        %s4166 = sand.u32 %s407, 1
        %s4167 = smul.addr %s4166, 32
        %s4168 = scalar_lea.vmem [#allocation20], %s4167
        // Predicated region
        $region133: #{fwd.1} parent=87 // pred_check
          %p4169 = pneg %p417
        $region134: #{fwd.1} parent=87 // pred_check_branch
          %4171 = sbr.rel (%p4169) target = $region136
        $region135: #{fwd.1} parent=87 // pred_region
          %4173 = vsyncadd %s4165, 0
          %s4174 = smul.addr %s37, 4
          %s4175 = smul.addr %s4174, 8
          %s4176 = scalar_lea.hbm %s17, %s4175
          %s4177 = sshll.u32 %s4168, 4
          %s4178 = int_to_ptr.vmem [resolvable:$true] %s4177
          %s4179 = sshll.u32 %s4176, 4
          %s4180 = int_to_ptr.hbm [resolvable:$true] %s4179
          %4185 = dma.vmem_to_hbm [thread:$0]  %s4178, 512, %s4180, %s4165, 128, 128, 8
        $region136: #{fwd.1} parent=87 // pred_fallthru
          _
      $region88: #{fwd.1} parent=5 // pred_fallthru
        _
      %p4186 = scmp.le.s32.totalorder 2, %s32
      // Predicated region
      $region137: #{fwd.1} parent=5 // pred_check
        %p4187 = pneg %p4186
      $region138: #{fwd.1} parent=5 // pred_check_branch
        %4189 = sbr.rel (%p4187) target = $region140
      $region139: #{fwd.1} parent=5 // pred_region
        %s4190 = ssub.s32 %s32, 2
        // Predicated region
        $region141: #{fwd.1} parent=139 // pred_check
          %p4191 = pneg %p423
        $region142: #{fwd.1} parent=139 // pred_check_branch
          %4193 = sbr.rel (%p4191) target = $region144
        $region143: #{fwd.1} parent=139 // pred_region
          %s4194 = sand.u32 %s408, 1
          %s4195 = scalar_lea.sflag [#allocation4], %s4194
          %s4196 = sand.u32 %s408, 1
          %s4197 = smul.addr %s4196, 32
          %s4198 = scalar_lea.vmem [#allocation20], %s4197
          %4200 = dma.done %s4195, 512
        $region144: #{fwd.1} parent=139 // pred_fallthru
          _
      $region140: #{fwd.1} parent=5 // pred_fallthru
        _
    $region6: #{fwd.1} parent=1 // loop_footer
      %s36 = sadd.s32 1, %s32
    $region7: #{fwd.1} parent=1 // loop_footer_branch
      %31 = sbr.rel target = $region3
    $region8: #{fwd.1} parent=1 // loop_exit
      _
    %4201 = vsyncpa [#allocation3], 1
    %s4202 = scalar_lea.sflag [#allocation3], 1
    %4203 = vsyncpa %s4202, 1
    %4204 = vsyncpa [#allocation6], 1
    %4205 = vsyncpa [#allocation9], 1
    %4206 = vsyncpa [#allocation12], 1
    %4207 = vsyncpa [#allocation15], 1
    %4208 = vsyncpa [#allocation18], 1
    %4209 = vsyncpa [#allocation4], 1
    %s4210 = scalar_lea.sflag [#allocation4], 1
    %4211 = vsyncpa %s4210, 1

</llo_original>
